<compile_context>
chip_gen: v5e
topology: v5e:2x2
jax: 0.10.0
libtpu: 0.0.40
codegen_flags: <defaults>
</compile_context>

<pallas_src>
import jax
import jax.numpy as jnp
from jax.experimental import pallas as pl
from jax.experimental.pallas import tpu as pltpu

F_IN = 165                 # node_features (Net.__init__ default)
HID = 32                   # GCLSTM hidden size
NUM_CLASSES = 2
GATES_W = 4 * HID          # 128 packed gate lanes (i | f | o | g)
HEAD_W = 128               # head weight lane-padded to a full vreg width
TILE_N_MAX = 1024          # ~1024-row tiles amortize the ~0.35 us/step overhead


def _choose_tile_n(n):
    """Pick the node tile: big (<=1024) but keep >=2 grid steps when possible
    so v7x's two TensorCores both get sharded work; multiple of 128 rows."""
    half = -(-n // 2)                      # ceil(n / 2)
    tile = -(-half // 128) * 128           # round up to a multiple of 128
    return int(min(TILE_N_MAX, max(128, tile)))


def gclstm_net_kernel(x_ref, h_ref, c_ref, wx_ref, wh_ref, b_ref, wl_ref, bl_ref,
                      h_out_ref, c_out_ref, logits_ref):
    # Activations stream in at their natural widths; cast to bf16 in-kernel
    # (VPU work, hidden under the input DMA).
    x = x_ref[...].astype(jnp.bfloat16)        # [tn, 165]
    h = h_ref[...].astype(jnp.bfloat16)        # [tn, 32]
    c = c_ref[...].astype(jnp.float32)         # [tn, 32] cell state kept f32

    # Two small MXU matmuls (K=165 and K=32), f32 accumulate.  MXU time is <10%
    # of the DMA time on every generation, so no need to fuse/pad K.
    gates = (jnp.dot(x, wx_ref[...], preferred_element_type=jnp.float32)
             + jnp.dot(h, wh_ref[...], preferred_element_type=jnp.float32)
             + b_ref[...])                     # [tn, 128]

    # Gate packing (i | f | o | g): one contiguous 96-lane sigmoid slice + a
    # 32-lane tanh.  Precise reciprocal (approx=False): free under DMA and
    # avoids drift when h/c are fed back recurrently over many timesteps.
    sig = pl.reciprocal(1.0 + jnp.exp(-gates[:, :3 * HID]))
    i_g = sig[:, 0 * HID:1 * HID]
    f_g = sig[:, 1 * HID:2 * HID]
    o_g = sig[:, 2 * HID:3 * HID]
    g_g = jnp.tanh(gates[:, 3 * HID:])

    c_new = f_g * c + i_g * g_g                # [tn, 32]
    h_new = o_g * jnp.tanh(c_new)              # [tn, 32]

    # Net head: Linear(32, 2)(relu(h_new)); weight lane-padded to 128 so the
    # matmul is vreg-aligned, only the first 2 lanes are stored.
    head = (jnp.dot(jnp.maximum(h_new, 0.0).astype(jnp.bfloat16), wl_ref[...],
                    preferred_element_type=jnp.float32)
            + bl_ref[...])                     # [tn, 128]

    # Direct sub-slice stores, no concat/relayout.
    h_out_ref[...] = h_new
    c_out_ref[...] = c_new
    logits_ref[...] = head[:, :NUM_CLASSES]


def prepare_params(params):
    """One-time weight padding / bf16 casts (hoisted out of the per-call path)."""
    wl_pad = jnp.zeros((HID, HEAD_W), jnp.float32).at[:, :NUM_CLASSES].set(params["wl"])
    bl_pad = jnp.zeros((1, HEAD_W), jnp.float32).at[:, :NUM_CLASSES].set(params["bl"])
    return {
        "wx": params["wx"].astype(jnp.bfloat16),                     # [165, 128]
        "wh": params["wh"].astype(jnp.bfloat16),                     # [32, 128]
        "b": params["b"].astype(jnp.float32).reshape(1, GATES_W),    # [1, 128]
        "wl": wl_pad.astype(jnp.bfloat16),                           # [32, 128]
        "bl": bl_pad,                                                # [1, 128]
    }


def net_forward(x, h, c, prep):
    """Pallas forward. Returns (logits [N,2], h0 [N,32], c0 [N,32]).

    NOTE: edge_index / edge_weight are intentionally absent — ChebConv with K=1
    performs no graph propagation, so they never affect the result.
    """
    N = x.shape[0]
    if h is None:                              # PyTorch allows None states
        h = jnp.zeros((N, HID), jnp.float32)
    if c is None:
        c = jnp.zeros((N, HID), jnp.float32)

    tile_n = _choose_tile_n(N)
    grid = (pl.cdiv(N, tile_n),)               # partial last block is fine:
                                               # padded input rows only produce
                                               # garbage in rows that are never
                                               # written back (row-wise math).

    node_spec = lambda width: pl.BlockSpec((tile_n, width), lambda i: (i, 0))
    # Weights/biases are tiny (<100 KB) and grid-invariant: keep them resident
    # in VMEM untiled (no per-step double-buffering / index-map churn).
    vmem_spec = pl.BlockSpec(memory_space=pltpu.MemorySpace.VMEM)

    cost = pl.CostEstimate(
        flops=2 * N * ((F_IN + HID) * GATES_W + HID * HEAD_W),
        transcendentals=N * 8 * HID,           # exp(96) + rcp(96) + tanh(64)
        bytes_accessed=(N * F_IN * 4 + 2 * N * HID * 4              # x, h, c in
                        + N * (2 * HID + NUM_CLASSES) * 4           # h0, c0, logits
                        + (F_IN + HID) * GATES_W * 2 + GATES_W * 4  # gate weights
                        + HID * HEAD_W * 2 + HEAD_W * 4),           # head weights
    )

    h0, c0, logits = pl.pallas_call(
        gclstm_net_kernel,
        out_shape=(
            jax.ShapeDtypeStruct((N, HID), jnp.float32),           # h0
            jax.ShapeDtypeStruct((N, HID), jnp.float32),           # c0
            jax.ShapeDtypeStruct((N, NUM_CLASSES), jnp.float32),   # logits
        ),
        grid_spec=pltpu.PrefetchScalarGridSpec(
            num_scalar_prefetch=0,
            grid=grid,
            in_specs=[
                node_spec(F_IN),       # x   (node-tiled, pipelined, f32)
                node_spec(HID),        # h   (node-tiled, pipelined, f32)
                node_spec(HID),        # c   (node-tiled, pipelined, f32)
                vmem_spec,             # Wx  [165, 128] bf16
                vmem_spec,             # Wh  [32, 128]  bf16
                vmem_spec,             # b   [1, 128]   f32
                vmem_spec,             # Wl  [32, 128]  bf16
                vmem_spec,             # bl  [1, 128]   f32
            ],
            out_specs=[
                node_spec(HID),            # h0
                node_spec(HID),            # c0
                node_spec(NUM_CLASSES),    # logits
            ],
        ),
        compiler_params=pltpu.CompilerParams(
            dimension_semantics=("parallel",)),   # node tiles shard across TCs
        cost_estimate=cost,
    )(x, h, c, prep["wx"], prep["wh"], prep["b"], prep["wl"], prep["bl"])

    return logits, h0, c0


def make_params(key):
    ks = jax.random.split(key, 5)
    scale_x = 1.0 / jnp.sqrt(F_IN)
    scale_h = 1.0 / jnp.sqrt(HID)
    return {
        # Gate columns packed as (i | f | o | g): the three sigmoid gates are
        # lane-contiguous, the tanh candidate gate is last.
        "wx": jax.random.normal(ks[0], (F_IN, GATES_W), jnp.float32) * scale_x,
        # ChebConv(K=1) Theta weights for the hidden state, same packing.
        "wh": jax.random.normal(ks[1], (HID, GATES_W), jnp.float32) * scale_h,
        # packed gate biases (ChebConv bias + gate bias combined)
        "b": jax.random.normal(ks[2], (1, GATES_W), jnp.float32) * 0.1,
        "wl": jax.random.normal(ks[3], (HID, NUM_CLASSES), jnp.float32) * scale_h,
        "bl": jax.random.normal(ks[4], (1, NUM_CLASSES), jnp.float32) * 0.1,
    }


def net_forward_ref(x, h, c, p):
    gates = x @ p["wx"] + h @ p["wh"] + p["b"]
    i_g = jax.nn.sigmoid(gates[:, 0 * HID:1 * HID])
    f_g = jax.nn.sigmoid(gates[:, 1 * HID:2 * HID])
    o_g = jax.nn.sigmoid(gates[:, 2 * HID:3 * HID])
    g_g = jnp.tanh(gates[:, 3 * HID:4 * HID])
    c_new = f_g * c + i_g * g_g
    h_new = o_g * jnp.tanh(c_new)
    logits = jnp.maximum(h_new, 0.0) @ p["wl"] + p["bl"]
    return logits, h_new, c_new


if __name__ == "__main__":
    key = jax.random.PRNGKey(0)
    k_p, k_x, k_h, k_c = jax.random.split(key, 4)

    # One elliptic-style snapshot; N deliberately NOT a multiple of the tile to
    # exercise the partial-block path (tile=512 -> 2 grid steps of 512 rows).
    N = 1000
    params = make_params(k_p)
    prep = prepare_params(params)            # one-time weight prep (hoisted)
    x = jax.random.normal(k_x, (N, F_IN), jnp.float32)
    # h/c = None in the first snapshot corresponds to zero states; use small
    # random states here to exercise the recurrent path.
    h = jax.random.normal(k_h, (N, HID), jnp.float32) * 0.1
    c = jax.random.normal(k_c, (N, HID), jnp.float32) * 0.1

    # NOTE: edge_index/edge_weight are unused because ChebConv with K=1 does
    # no graph propagation (and the module calls forward with edge_weight=None).
    logits, h0, c0 = net_forward(x, h, c, prep)
    jax.block_until_ready((logits, h0, c0))

    ref_logits, ref_h0, ref_c0 = net_forward_ref(x, h, c, params)
    # bf16 matmul operands -> compare at bf16-level tolerance.
    assert jnp.allclose(logits, ref_logits, atol=2e-2, rtol=2e-2)
    assert jnp.allclose(h0, ref_h0, atol=2e-2, rtol=2e-2)
    assert jnp.allclose(c0, ref_c0, atol=2e-2, rtol=2e-2)

    print("KERNEL_OK")
</pallas_src>

<mosaic_0001>
module attributes {stable_mosaic.version = 11 : i64} {
  func.func @gclstm_net_kernel(%arg0: i32, %arg1: memref<512x165xf32, #tpu.memory_space<vmem>>, %arg2: memref<512x32xf32, #tpu.memory_space<vmem>>, %arg3: memref<512x32xf32, #tpu.memory_space<vmem>>, %arg4: memref<165x128xbf16, #tpu.memory_space<vmem>>, %arg5: memref<32x128xbf16, #tpu.memory_space<vmem>>, %arg6: memref<1x128xf32, #tpu.memory_space<vmem>>, %arg7: memref<32x128xbf16, #tpu.memory_space<vmem>>, %arg8: memref<1x128xf32, #tpu.memory_space<vmem>>, %arg9: memref<512x32xf32, #tpu.memory_space<vmem>>, %arg10: memref<512x32xf32, #tpu.memory_space<vmem>>, %arg11: memref<512x2xf32, #tpu.memory_space<vmem>>) attributes {dimension_semantics = [#tpu.dimension_semantics<parallel>], iteration_bounds = array<i64: 2>, scalar_prefetch = 0 : i64, scratch_operands = 0 : i64, tpu.core_type = #tpu.core_type<tc>, window_params = [{transform_indices = @transform_0, window_bounds = array<i64: 512, 165>}, {transform_indices = @transform_1, window_bounds = array<i64: 512, 32>}, {transform_indices = @transform_2, window_bounds = array<i64: 512, 32>}, {pipeline_mode = #tpu.pipeline_mode<synchronous>, transform_indices = @transform_3, window_bounds = array<i64: 165, 128>}, {pipeline_mode = #tpu.pipeline_mode<synchronous>, transform_indices = @transform_4, window_bounds = array<i64: 32, 128>}, {pipeline_mode = #tpu.pipeline_mode<synchronous>, transform_indices = @transform_5, window_bounds = array<i64: 1, 128>}, {pipeline_mode = #tpu.pipeline_mode<synchronous>, transform_indices = @transform_6, window_bounds = array<i64: 32, 128>}, {pipeline_mode = #tpu.pipeline_mode<synchronous>, transform_indices = @transform_7, window_bounds = array<i64: 1, 128>}, {transform_indices = @transform_8, window_bounds = array<i64: 512, 32>}, {transform_indices = @transform_9, window_bounds = array<i64: 512, 32>}, {transform_indices = @transform_10, window_bounds = array<i64: 512, 2>}]} {
    %c0 = arith.constant 0 : index
    %c0_0 = arith.constant 0 : index
    %0 = vector.load %arg1[%c0, %c0_0] : memref<512x165xf32, #tpu.memory_space<vmem>>, vector<512x165xf32>
    %1 = arith.truncf %0 : vector<512x165xf32> to vector<512x165xbf16>
    %c0_1 = arith.constant 0 : index
    %c0_2 = arith.constant 0 : index
    %2 = vector.load %arg2[%c0_1, %c0_2] : memref<512x32xf32, #tpu.memory_space<vmem>>, vector<512x32xf32>
    %3 = arith.truncf %2 : vector<512x32xf32> to vector<512x32xbf16>
    %c0_3 = arith.constant 0 : index
    %c0_4 = arith.constant 0 : index
    %4 = vector.load %arg3[%c0_3, %c0_4] : memref<512x32xf32, #tpu.memory_space<vmem>>, vector<512x32xf32>
    %c0_5 = arith.constant 0 : index
    %c0_6 = arith.constant 0 : index
    %5 = vector.load %arg4[%c0_5, %c0_6] : memref<165x128xbf16, #tpu.memory_space<vmem>>, vector<165x128xbf16>
    %cst = arith.constant dense<0.000000e+00> : vector<512x128xf32>
    %6 = tpu.matmul %1, %5, %cst {dimension_numbers = #tpu.dot_dimension_numbers<[1], [0], [0], [1], [0, 0, 1, 1], [], []>} : vector<512x165xbf16>, vector<165x128xbf16>, vector<512x128xf32> -> vector<512x128xf32>
    %c0_7 = arith.constant 0 : index
    %c0_8 = arith.constant 0 : index
    %7 = vector.load %arg5[%c0_7, %c0_8] : memref<32x128xbf16, #tpu.memory_space<vmem>>, vector<32x128xbf16>
    %cst_9 = arith.constant dense<0.000000e+00> : vector<512x128xf32>
    %8 = tpu.matmul %3, %7, %cst_9 {dimension_numbers = #tpu.dot_dimension_numbers<[1], [0], [0], [1], [0, 0, 1, 1], [], []>} : vector<512x32xbf16>, vector<32x128xbf16>, vector<512x128xf32> -> vector<512x128xf32>
    %9 = arith.addf %6, %8 : vector<512x128xf32>
    %c0_10 = arith.constant 0 : index
    %c0_11 = arith.constant 0 : index
    %10 = vector.load %arg6[%c0_10, %c0_11] : memref<1x128xf32, #tpu.memory_space<vmem>>, vector<1x128xf32>
    %11 = vector.broadcast %10 : vector<1x128xf32> to vector<512x128xf32>
    %12 = arith.addf %9, %11 : vector<512x128xf32>
    %13 = vector.extract_strided_slice %12 {offsets = [0, 0], sizes = [512, 96], strides = [1, 1]} : vector<512x128xf32> to vector<512x96xf32>
    %cst_12 = arith.constant 0.000000e+00 : f32
    %14 = vector.broadcast %cst_12 : f32 to vector<512x96xf32>
    %15 = arith.subf %14, %13 : vector<512x96xf32>
    %16 = math.exp %15 : vector<512x96xf32>
    %cst_13 = arith.constant 1.000000e+00 : f32
    %17 = vector.broadcast %cst_13 : f32 to vector<512x96xf32>
    %18 = arith.addf %17, %16 : vector<512x96xf32>
    %19 = tpu.reciprocal %18 : vector<512x96xf32> -> vector<512x96xf32>
    %20 = vector.extract_strided_slice %19 {offsets = [0, 0], sizes = [512, 32], strides = [1, 1]} : vector<512x96xf32> to vector<512x32xf32>
    %21 = vector.extract_strided_slice %19 {offsets = [0, 32], sizes = [512, 32], strides = [1, 1]} : vector<512x96xf32> to vector<512x32xf32>
    %22 = vector.extract_strided_slice %19 {offsets = [0, 64], sizes = [512, 32], strides = [1, 1]} : vector<512x96xf32> to vector<512x32xf32>
    %23 = vector.extract_strided_slice %12 {offsets = [0, 96], sizes = [512, 32], strides = [1, 1]} : vector<512x128xf32> to vector<512x32xf32>
    %24 = math.tanh %23 : vector<512x32xf32>
    %25 = arith.mulf %21, %4 : vector<512x32xf32>
    %26 = arith.mulf %20, %24 : vector<512x32xf32>
    %27 = arith.addf %25, %26 : vector<512x32xf32>
    %28 = math.tanh %27 : vector<512x32xf32>
    %29 = arith.mulf %22, %28 : vector<512x32xf32>
    %cst_14 = arith.constant 0.000000e+00 : f32
    %30 = vector.broadcast %cst_14 : f32 to vector<512x32xf32>
    %31 = arith.maximumf %29, %30 : vector<512x32xf32>
    %32 = arith.truncf %31 : vector<512x32xf32> to vector<512x32xbf16>
    %c0_15 = arith.constant 0 : index
    %c0_16 = arith.constant 0 : index
    %33 = vector.load %arg7[%c0_15, %c0_16] : memref<32x128xbf16, #tpu.memory_space<vmem>>, vector<32x128xbf16>
    %cst_17 = arith.constant dense<0.000000e+00> : vector<512x128xf32>
    %34 = tpu.matmul %32, %33, %cst_17 {dimension_numbers = #tpu.dot_dimension_numbers<[1], [0], [0], [1], [0, 0, 1, 1], [], []>} : vector<512x32xbf16>, vector<32x128xbf16>, vector<512x128xf32> -> vector<512x128xf32>
    %c0_18 = arith.constant 0 : index
    %c0_19 = arith.constant 0 : index
    %35 = vector.load %arg8[%c0_18, %c0_19] : memref<1x128xf32, #tpu.memory_space<vmem>>, vector<1x128xf32>
    %36 = vector.broadcast %35 : vector<1x128xf32> to vector<512x128xf32>
    %37 = arith.addf %34, %36 : vector<512x128xf32>
    %c0_20 = arith.constant 0 : index
    %c0_21 = arith.constant 0 : index
    %38 = vector.load %arg9[%c0_20, %c0_21] : memref<512x32xf32, #tpu.memory_space<vmem>>, vector<512x32xf32>
    tpu.vector_store %arg9[%c0_20, %c0_21], %29 {strides = array<i32>} : memref<512x32xf32, #tpu.memory_space<vmem>>, vector<512x32xf32>,
    %c0_22 = arith.constant 0 : index
    %c0_23 = arith.constant 0 : index
    %39 = vector.load %arg10[%c0_22, %c0_23] : memref<512x32xf32, #tpu.memory_space<vmem>>, vector<512x32xf32>
    tpu.vector_store %arg10[%c0_22, %c0_23], %27 {strides = array<i32>} : memref<512x32xf32, #tpu.memory_space<vmem>>, vector<512x32xf32>,
    %40 = vector.extract_strided_slice %37 {offsets = [0, 0], sizes = [512, 2], strides = [1, 1]} : vector<512x128xf32> to vector<512x2xf32>
    %c0_24 = arith.constant 0 : index
    %c0_25 = arith.constant 0 : index
    %41 = vector.load %arg11[%c0_24, %c0_25] : memref<512x2xf32, #tpu.memory_space<vmem>>, vector<512x2xf32>
    tpu.vector_store %arg11[%c0_24, %c0_25], %40 {strides = array<i32>} : memref<512x2xf32, #tpu.memory_space<vmem>>, vector<512x2xf32>,
    return
  }
  func.func @transform_0(%arg0: i32) -> (i32, i32) {
    %c0_i32 = arith.constant 0 : i32
    %c0_i32_0 = arith.constant 0 : i32
    return %arg0, %c0_i32 : i32, i32
  }
  func.func @transform_1(%arg0: i32) -> (i32, i32) {
    %c0_i32 = arith.constant 0 : i32
    %c0_i32_0 = arith.constant 0 : i32
    return %arg0, %c0_i32 : i32, i32
  }
  func.func @transform_2(%arg0: i32) -> (i32, i32) {
    %c0_i32 = arith.constant 0 : i32
    %c0_i32_0 = arith.constant 0 : i32
    return %arg0, %c0_i32 : i32, i32
  }
  func.func @transform_3(%arg0: i32) -> (i32, i32) {
    %c0_i32 = arith.constant 0 : i32
    %c0_i32_0 = arith.constant 0 : i32
    %c0_i32_1 = arith.constant 0 : i32
    return %c0_i32, %c0_i32_0 : i32, i32
  }
  func.func @transform_4(%arg0: i32) -> (i32, i32) {
    %c0_i32 = arith.constant 0 : i32
    %c0_i32_0 = arith.constant 0 : i32
    %c0_i32_1 = arith.constant 0 : i32
    return %c0_i32, %c0_i32_0 : i32, i32
  }
  func.func @transform_5(%arg0: i32) -> (i32, i32) {
    %c0_i32 = arith.constant 0 : i32
    %c0_i32_0 = arith.constant 0 : i32
    %c0_i32_1 = arith.constant 0 : i32
    return %c0_i32, %c0_i32_0 : i32, i32
  }
  func.func @transform_6(%arg0: i32) -> (i32, i32) {
    %c0_i32 = arith.constant 0 : i32
    %c0_i32_0 = arith.constant 0 : i32
    %c0_i32_1 = arith.constant 0 : i32
    return %c0_i32, %c0_i32_0 : i32, i32
  }
  func.func @transform_7(%arg0: i32) -> (i32, i32) {
    %c0_i32 = arith.constant 0 : i32
    %c0_i32_0 = arith.constant 0 : i32
    %c0_i32_1 = arith.constant 0 : i32
    return %c0_i32, %c0_i32_0 : i32, i32
  }
  func.func @transform_8(%arg0: i32) -> (i32, i32) {
    %c0_i32 = arith.constant 0 : i32
    %c0_i32_0 = arith.constant 0 : i32
    return %arg0, %c0_i32 : i32, i32
  }
  func.func @transform_9(%arg0: i32) -> (i32, i32) {
    %c0_i32 = arith.constant 0 : i32
    %c0_i32_0 = arith.constant 0 : i32
    return %arg0, %c0_i32 : i32, i32
  }
  func.func @transform_10(%arg0: i32) -> (i32, i32) {
    %c0_i32 = arith.constant 0 : i32
    %c0_i32_0 = arith.constant 0 : i32
    return %arg0, %c0_i32 : i32, i32
  }
}

</mosaic_0001>

<llo_original>
// kernel: tpu_custom_call.1
$region0: #{tpu_custom_call.1}
  #allocation0 [shape = 'u32[]', space=smem, size = 0x4, offset = 0x4, fixed_abs, tag = 'smem constant byte address 0x4 - core index']
  #allocation1 [shape = 'u32[72,128]{1,0:T(1,128)}', space=vmem, size = 0x9000, scoped, tag = 'internal scratch']
  %s0 = inlined_call_operand.vmem [shape: f32[1000,165], index: 0, kind: input, shape index: {}]
  %s1 = inlined_call_operand.vmem [shape: f32[1000,32], index: 1, kind: input, shape index: {}]
  %s2 = inlined_call_operand.vmem [shape: f32[1000,32], index: 2, kind: input, shape index: {}]
  %s3 = inlined_call_operand.vmem [shape: bf16[165,128], index: 3, kind: input, shape index: {}]
  %s4 = inlined_call_operand.vmem [shape: bf16[32,128], index: 4, kind: input, shape index: {}]
  %s5 = inlined_call_operand.vmem [shape: f32[1,128], index: 5, kind: input, shape index: {}]
  %s6 = inlined_call_operand.vmem [shape: bf16[32,128], index: 6, kind: input, shape index: {}]
  %s7 = inlined_call_operand.vmem [shape: f32[1,128], index: 7, kind: input, shape index: {}]
  %s8 = inlined_call_operand.vmem [shape: f32[1000,32], index: 8, kind: output, shape index: {0}]
  %s9 = inlined_call_operand.vmem [shape: f32[1000,32], index: 9, kind: output, shape index: {1}]
  %s10 = inlined_call_operand.vmem [shape: f32[1000,2], index: 10, kind: output, shape index: {2}]
  %11 = xla_tuple %s8, %s9, %s10
  %s12 = sld [smem:[#allocation0]]
  $region225: #{tpu_custom_call.1} parent=0
    _
  %s14 = ssub.s32 1, %s12
  %s15 = scalar_select 0, %s14, %s12
  $region1: #{tpu_custom_call.1} parent=0
    #allocation2 [shape = 'u8[524288]{0}', space=vmem, size = 0x80000, scoped, tag = 'output window, operand 0']
    #allocation3 [shape = 'u8[524288]{0}', space=vmem, size = 0x80000, scoped, tag = 'output window, operand 1']
    #allocation4 [shape = 'u8[524288]{0}', space=vmem, size = 0x80000, scoped, tag = 'output window, operand 2']
    loop: start=0, step=1, limit=4
    $region2: #{tpu_custom_call.1} parent=1 // loop_pre_header
      _
    $region3: #{tpu_custom_call.1} parent=1 // loop_header
      %s17 = sphi 0, %s21
      %p18 = scmp.ge.s32.totalorder %s17, 4
      %s27 = sphi 0, %s29
      %s30 = sphi 0, %s27
      %s31 = sphi 0, %s30
      %s47 = sphi 0, %s31
      %s53 = sphi 0, %s55
      %s56 = sphi 0, %s53
      %s57 = sphi 0, %s56
      %s73 = sphi 0, %s57
      %s79 = sphi 0, %s81
      %s82 = sphi 0, %s79
      %s83 = sphi 0, %s82
      %s99 = sphi 0, %s83
      %s103 = sphi 0, %s103
      %s105 = sphi 0, %s103
      %s106 = sphi 0, %s105
      %s120 = sphi 0, %s106
      %s124 = sphi 0, %s124
      %s126 = sphi 0, %s124
      %s127 = sphi 0, %s126
      %s141 = sphi 0, %s127
      %s145 = sphi 0, %s145
      %s147 = sphi 0, %s145
      %s148 = sphi 0, %s147
      %s162 = sphi 0, %s148
      %s166 = sphi 0, %s166
      %s168 = sphi 0, %s166
      %s169 = sphi 0, %s168
      %s183 = sphi 0, %s169
      %s187 = sphi 0, %s187
      %s189 = sphi 0, %s187
      %s190 = sphi 0, %s189
      %s204 = sphi 0, %s190
      %s210 = sphi 0, %s212
      %s213 = sphi 0, %s210
      %s214 = sphi 0, %s213
      %s230 = sphi 0, %s214
      %s236 = sphi 0, %s238
      %s239 = sphi 0, %s236
      %s240 = sphi 0, %s239
      %s256 = sphi 0, %s240
      %s262 = sphi 0, %s264
      %s265 = sphi 0, %s262
      %s266 = sphi 0, %s265
      %s282 = sphi 0, %s266
    $region4: #{tpu_custom_call.1} parent=1 // loop_header_branch
      %20 = sbr.rel (%p18) target = $region8
    $region5: #{tpu_custom_call.1} parent=1 // loop_body
      %s22 = ssub.s32 %s17, 1
      %s23 = ssub.s32 %s17, 2
      %s24 = sadd.s32 %s17, 1
      %s25 = ssub.s32 %s17, %s24
      %p26 = scmp.eq.s32.totalorder %s25, 0
      %s28 = sadd.s32 %s27, 1
      %s29 = scalar_select %p26, %s27, %s28
      %p32 = pneg %p26
      %p33 = scmp.eq.s32.totalorder %s17, 1
      %p34 = por %p32, %p33
      %p35 = scmp.ne.s32.totalorder %s27, %s30
      %p36 = scmp.eq.s32.totalorder %s17, 0
      %p37 = por %p35, %p36
      %p38 = scmp.ne.s32.totalorder %s27, %s30
      %p39 = scmp.eq.s32.totalorder %s22, 1
      %p40 = por %p38, %p39
      %p41 = scmp.ne.s32.totalorder %s30, %s31
      %p42 = scmp.eq.s32.totalorder %s22, 0
      %p43 = por %p41, %p42
      %p44 = scmp.ne.s32.totalorder %s30, %s31
      %p45 = scmp.eq.s32.totalorder %s23, 1
      %p46 = por %p44, %p45
      %p48 = scmp.ne.s32.totalorder %s31, %s47
      %p49 = scmp.eq.s32.totalorder %s23, 0
      %p50 = por %p48, %p49
      %s51 = ssub.s32 %s17, %s24
      %p52 = scmp.eq.s32.totalorder %s51, 0
      %s54 = sadd.s32 %s53, 1
      %s55 = scalar_select %p52, %s53, %s54
      %p58 = pneg %p52
      %p59 = scmp.eq.s32.totalorder %s17, 1
      %p60 = por %p58, %p59
      %p61 = scmp.ne.s32.totalorder %s53, %s56
      %p62 = scmp.eq.s32.totalorder %s17, 0
      %p63 = por %p61, %p62
      %p64 = scmp.ne.s32.totalorder %s53, %s56
      %p65 = scmp.eq.s32.totalorder %s22, 1
      %p66 = por %p64, %p65
      %p67 = scmp.ne.s32.totalorder %s56, %s57
      %p68 = scmp.eq.s32.totalorder %s22, 0
      %p69 = por %p67, %p68
      %p70 = scmp.ne.s32.totalorder %s56, %s57
      %p71 = scmp.eq.s32.totalorder %s23, 1
      %p72 = por %p70, %p71
      %p74 = scmp.ne.s32.totalorder %s57, %s73
      %p75 = scmp.eq.s32.totalorder %s23, 0
      %p76 = por %p74, %p75
      %s77 = ssub.s32 %s17, %s24
      %p78 = scmp.eq.s32.totalorder %s77, 0
      %s80 = sadd.s32 %s79, 1
      %s81 = scalar_select %p78, %s79, %s80
      %p84 = pneg %p78
      %p85 = scmp.eq.s32.totalorder %s17, 1
      %p86 = por %p84, %p85
      %p87 = scmp.ne.s32.totalorder %s79, %s82
      %p88 = scmp.eq.s32.totalorder %s17, 0
      %p89 = por %p87, %p88
      %p90 = scmp.ne.s32.totalorder %s79, %s82
      %p91 = scmp.eq.s32.totalorder %s22, 1
      %p92 = por %p90, %p91
      %p93 = scmp.ne.s32.totalorder %s82, %s83
      %p94 = scmp.eq.s32.totalorder %s22, 0
      %p95 = por %p93, %p94
      %p96 = scmp.ne.s32.totalorder %s82, %s83
      %p97 = scmp.eq.s32.totalorder %s23, 1
      %p98 = por %p96, %p97
      %p100 = scmp.ne.s32.totalorder %s83, %s99
      %p101 = scmp.eq.s32.totalorder %s23, 0
      %p102 = por %p100, %p101
      %s104 = sadd.s32 %s103, 1
      %p107 = scmp.eq.s32.totalorder %s17, 1
      %p108 = scmp.ne.s32.totalorder %s103, %s105
      %p109 = scmp.eq.s32.totalorder %s17, 0
      %p110 = por %p108, %p109
      %p111 = scmp.ne.s32.totalorder %s103, %s105
      %p112 = scmp.eq.s32.totalorder %s22, 1
      %p113 = por %p111, %p112
      %p114 = scmp.ne.s32.totalorder %s105, %s106
      %p115 = scmp.eq.s32.totalorder %s22, 0
      %p116 = por %p114, %p115
      %p117 = scmp.ne.s32.totalorder %s105, %s106
      %p118 = scmp.eq.s32.totalorder %s23, 1
      %p119 = por %p117, %p118
      %p121 = scmp.ne.s32.totalorder %s106, %s120
      %p122 = scmp.eq.s32.totalorder %s23, 0
      %p123 = por %p121, %p122
      %s125 = sadd.s32 %s124, 1
      %p128 = scmp.eq.s32.totalorder %s17, 1
      %p129 = scmp.ne.s32.totalorder %s124, %s126
      %p130 = scmp.eq.s32.totalorder %s17, 0
      %p131 = por %p129, %p130
      %p132 = scmp.ne.s32.totalorder %s124, %s126
      %p133 = scmp.eq.s32.totalorder %s22, 1
      %p134 = por %p132, %p133
      %p135 = scmp.ne.s32.totalorder %s126, %s127
      %p136 = scmp.eq.s32.totalorder %s22, 0
      %p137 = por %p135, %p136
      %p138 = scmp.ne.s32.totalorder %s126, %s127
      %p139 = scmp.eq.s32.totalorder %s23, 1
      %p140 = por %p138, %p139
      %p142 = scmp.ne.s32.totalorder %s127, %s141
      %p143 = scmp.eq.s32.totalorder %s23, 0
      %p144 = por %p142, %p143
      %s146 = sadd.s32 %s145, 1
      %p149 = scmp.eq.s32.totalorder %s17, 1
      %p150 = scmp.ne.s32.totalorder %s145, %s147
      %p151 = scmp.eq.s32.totalorder %s17, 0
      %p152 = por %p150, %p151
      %p153 = scmp.ne.s32.totalorder %s145, %s147
      %p154 = scmp.eq.s32.totalorder %s22, 1
      %p155 = por %p153, %p154
      %p156 = scmp.ne.s32.totalorder %s147, %s148
      %p157 = scmp.eq.s32.totalorder %s22, 0
      %p158 = por %p156, %p157
      %p159 = scmp.ne.s32.totalorder %s147, %s148
      %p160 = scmp.eq.s32.totalorder %s23, 1
      %p161 = por %p159, %p160
      %p163 = scmp.ne.s32.totalorder %s148, %s162
      %p164 = scmp.eq.s32.totalorder %s23, 0
      %p165 = por %p163, %p164
      %s167 = sadd.s32 %s166, 1
      %p170 = scmp.eq.s32.totalorder %s17, 1
      %p171 = scmp.ne.s32.totalorder %s166, %s168
      %p172 = scmp.eq.s32.totalorder %s17, 0
      %p173 = por %p171, %p172
      %p174 = scmp.ne.s32.totalorder %s166, %s168
      %p175 = scmp.eq.s32.totalorder %s22, 1
      %p176 = por %p174, %p175
      %p177 = scmp.ne.s32.totalorder %s168, %s169
      %p178 = scmp.eq.s32.totalorder %s22, 0
      %p179 = por %p177, %p178
      %p180 = scmp.ne.s32.totalorder %s168, %s169
      %p181 = scmp.eq.s32.totalorder %s23, 1
      %p182 = por %p180, %p181
      %p184 = scmp.ne.s32.totalorder %s169, %s183
      %p185 = scmp.eq.s32.totalorder %s23, 0
      %p186 = por %p184, %p185
      %s188 = sadd.s32 %s187, 1
      %p191 = scmp.eq.s32.totalorder %s17, 1
      %p192 = scmp.ne.s32.totalorder %s187, %s189
      %p193 = scmp.eq.s32.totalorder %s17, 0
      %p194 = por %p192, %p193
      %p195 = scmp.ne.s32.totalorder %s187, %s189
      %p196 = scmp.eq.s32.totalorder %s22, 1
      %p197 = por %p195, %p196
      %p198 = scmp.ne.s32.totalorder %s189, %s190
      %p199 = scmp.eq.s32.totalorder %s22, 0
      %p200 = por %p198, %p199
      %p201 = scmp.ne.s32.totalorder %s189, %s190
      %p202 = scmp.eq.s32.totalorder %s23, 1
      %p203 = por %p201, %p202
      %p205 = scmp.ne.s32.totalorder %s190, %s204
      %p206 = scmp.eq.s32.totalorder %s23, 0
      %p207 = por %p205, %p206
      %s208 = ssub.s32 %s17, %s24
      %p209 = scmp.eq.s32.totalorder %s208, 0
      %s211 = sadd.s32 %s210, 1
      %s212 = scalar_select %p209, %s210, %s211
      %p215 = pneg %p209
      %p216 = scmp.eq.s32.totalorder %s17, 1
      %p217 = por %p215, %p216
      %p218 = scmp.ne.s32.totalorder %s210, %s213
      %p219 = scmp.eq.s32.totalorder %s17, 0
      %p220 = por %p218, %p219
      %p221 = scmp.ne.s32.totalorder %s210, %s213
      %p222 = scmp.eq.s32.totalorder %s22, 1
      %p223 = por %p221, %p222
      %p224 = scmp.ne.s32.totalorder %s213, %s214
      %p225 = scmp.eq.s32.totalorder %s22, 0
      %p226 = por %p224, %p225
      %p227 = scmp.ne.s32.totalorder %s213, %s214
      %p228 = scmp.eq.s32.totalorder %s23, 1
      %p229 = por %p227, %p228
      %p231 = scmp.ne.s32.totalorder %s214, %s230
      %p232 = scmp.eq.s32.totalorder %s23, 0
      %p233 = por %p231, %p232
      %s234 = ssub.s32 %s17, %s24
      %p235 = scmp.eq.s32.totalorder %s234, 0
      %s237 = sadd.s32 %s236, 1
      %s238 = scalar_select %p235, %s236, %s237
      %p241 = pneg %p235
      %p242 = scmp.eq.s32.totalorder %s17, 1
      %p243 = por %p241, %p242
      %p244 = scmp.ne.s32.totalorder %s236, %s239
      %p245 = scmp.eq.s32.totalorder %s17, 0
      %p246 = por %p244, %p245
      %p247 = scmp.ne.s32.totalorder %s236, %s239
      %p248 = scmp.eq.s32.totalorder %s22, 1
      %p249 = por %p247, %p248
      %p250 = scmp.ne.s32.totalorder %s239, %s240
      %p251 = scmp.eq.s32.totalorder %s22, 0
      %p252 = por %p250, %p251
      %p253 = scmp.ne.s32.totalorder %s239, %s240
      %p254 = scmp.eq.s32.totalorder %s23, 1
      %p255 = por %p253, %p254
      %p257 = scmp.ne.s32.totalorder %s240, %s256
      %p258 = scmp.eq.s32.totalorder %s23, 0
      %p259 = por %p257, %p258
      %s260 = ssub.s32 %s17, %s24
      %p261 = scmp.eq.s32.totalorder %s260, 0
      %s263 = sadd.s32 %s262, 1
      %s264 = scalar_select %p261, %s262, %s263
      %p267 = pneg %p261
      %p268 = scmp.eq.s32.totalorder %s17, 1
      %p269 = por %p267, %p268
      %p270 = scmp.ne.s32.totalorder %s262, %s265
      %p271 = scmp.eq.s32.totalorder %s17, 0
      %p272 = por %p270, %p271
      %p273 = scmp.ne.s32.totalorder %s262, %s265
      %p274 = scmp.eq.s32.totalorder %s22, 1
      %p275 = por %p273, %p274
      %p276 = scmp.ne.s32.totalorder %s265, %s266
      %p277 = scmp.eq.s32.totalorder %s22, 0
      %p278 = por %p276, %p277
      %p279 = scmp.ne.s32.totalorder %s265, %s266
      %p280 = scmp.eq.s32.totalorder %s23, 1
      %p281 = por %p279, %p280
      %p283 = scmp.ne.s32.totalorder %s266, %s282
      %p284 = scmp.eq.s32.totalorder %s23, 0
      %p285 = por %p283, %p284
      %p286 = scmp.le.s32.totalorder 1, %s17
      %p287 = scmp.lt.s32.totalorder %s17, 3
      %p288 = pnand %p286, %p287
      %p289 = pneg %p288
      // Predicated region
      $region9: #{tpu_custom_call.1} parent=5 // pred_check
        _
      $region10: #{tpu_custom_call.1} parent=5 // pred_check_branch
        %291 = sbr.rel (%p288) target = $region12
      $region11: #{tpu_custom_call.1} parent=5 // pred_region
        %s292 = ssub.s32 %s17, 1
        // Predicated region
        $region13: #{tpu_custom_call.1} parent=11 // pred_check
          %p293 = pneg %p116
        $region14: #{tpu_custom_call.1} parent=11 // pred_check_branch
          %295 = sbr.rel (%p293) target = $region16
        $region15: #{tpu_custom_call.1} parent=11 // pred_region
          _
        $region16: #{tpu_custom_call.1} parent=11 // pred_fallthru
          _
        // Predicated region
        $region17: #{tpu_custom_call.1} parent=11 // pred_check
          %p296 = pneg %p137
        $region18: #{tpu_custom_call.1} parent=11 // pred_check_branch
          %298 = sbr.rel (%p296) target = $region20
        $region19: #{tpu_custom_call.1} parent=11 // pred_region
          _
        $region20: #{tpu_custom_call.1} parent=11 // pred_fallthru
          _
        // Predicated region
        $region21: #{tpu_custom_call.1} parent=11 // pred_check
          %p299 = pneg %p158
        $region22: #{tpu_custom_call.1} parent=11 // pred_check_branch
          %301 = sbr.rel (%p299) target = $region24
        $region23: #{tpu_custom_call.1} parent=11 // pred_region
          _
        $region24: #{tpu_custom_call.1} parent=11 // pred_fallthru
          _
        // Predicated region
        $region25: #{tpu_custom_call.1} parent=11 // pred_check
          %p302 = pneg %p179
        $region26: #{tpu_custom_call.1} parent=11 // pred_check_branch
          %304 = sbr.rel (%p302) target = $region28
        $region27: #{tpu_custom_call.1} parent=11 // pred_region
          _
        $region28: #{tpu_custom_call.1} parent=11 // pred_fallthru
          _
        // Predicated region
        $region29: #{tpu_custom_call.1} parent=11 // pred_check
          %p305 = pneg %p200
        $region30: #{tpu_custom_call.1} parent=11 // pred_check_branch
          %307 = sbr.rel (%p305) target = $region32
        $region31: #{tpu_custom_call.1} parent=11 // pred_region
          _
        $region32: #{tpu_custom_call.1} parent=11 // pred_fallthru
          _
      $region12: #{tpu_custom_call.1} parent=5 // pred_fallthru
        _
      %p308 = scmp.lt.s32.totalorder %s17, 2
      // Predicated region
      $region33: #{tpu_custom_call.1} parent=5 // pred_check
        %p309 = pneg %p308
      $region34: #{tpu_custom_call.1} parent=5 // pred_check_branch
        %311 = sbr.rel (%p309) target = $region36
      $region35: #{tpu_custom_call.1} parent=5 // pred_region
        // Predicated region
        $region37: #{tpu_custom_call.1} parent=35 // pred_check
          %p312 = pneg %p37
        $region38: #{tpu_custom_call.1} parent=35 // pred_check_branch
          %314 = sbr.rel (%p312) target = $region40
        $region39: #{tpu_custom_call.1} parent=35 // pred_region
          %s315 = smul.u32 64, %s17
          %s316 = ssub.s32 125, %s315
          %p317 = scmp.lt.s32.totalorder %s316, 64
          %s318 = scalar_select %p317, %s316, 64
          %s319 = smul.u32 8, %s318
          %s320 = smul.u32 %s319, 2
          %p321 = scmp.lt.s32.totalorder %s315, 124
          %s322 = scalar_select %p321, %s315, 124
          %s323 = smul.addr %s322, 2
          %s324 = smul.addr %s323, 8
          %s325 = scalar_lea.vmem %s0, %s324
          %s326 = smul.u32 64, %s17
          %s327 = ssub.s32 125, %s326
          %p328 = scmp.lt.s32.totalorder %s327, 64
          %s329 = scalar_select %p328, %s327, 64
          %s330 = smul.u32 8, %s329
          %s331 = smul.u32 %s330, 2
        $region40: #{tpu_custom_call.1} parent=35 // pred_fallthru
          _
        // Predicated region
        $region41: #{tpu_custom_call.1} parent=35 // pred_check
          %p332 = pneg %p63
        $region42: #{tpu_custom_call.1} parent=35 // pred_check_branch
          %334 = sbr.rel (%p332) target = $region44
        $region43: #{tpu_custom_call.1} parent=35 // pred_region
          %s335 = smul.u32 64, %s17
          %s336 = ssub.s32 125, %s335
          %p337 = scmp.lt.s32.totalorder %s336, 64
          %s338 = scalar_select %p337, %s336, 64
          %s339 = smul.u32 8, %s338
          %p340 = scmp.lt.s32.totalorder %s335, 124
          %s341 = scalar_select %p340, %s335, 124
          %s342 = smul.addr %s341, 8
          %s343 = scalar_lea.vmem %s1, %s342
          %s344 = smul.u32 64, %s17
          %s345 = ssub.s32 125, %s344
          %p346 = scmp.lt.s32.totalorder %s345, 64
          %s347 = scalar_select %p346, %s345, 64
          %s348 = smul.u32 8, %s347
        $region44: #{tpu_custom_call.1} parent=35 // pred_fallthru
          _
        // Predicated region
        $region45: #{tpu_custom_call.1} parent=35 // pred_check
          %p349 = pneg %p89
        $region46: #{tpu_custom_call.1} parent=35 // pred_check_branch
          %351 = sbr.rel (%p349) target = $region48
        $region47: #{tpu_custom_call.1} parent=35 // pred_region
          %s352 = smul.u32 64, %s17
          %s353 = ssub.s32 125, %s352
          %p354 = scmp.lt.s32.totalorder %s353, 64
          %s355 = scalar_select %p354, %s353, 64
          %s356 = smul.u32 8, %s355
          %p357 = scmp.lt.s32.totalorder %s352, 124
          %s358 = scalar_select %p357, %s352, 124
          %s359 = smul.addr %s358, 8
          %s360 = scalar_lea.vmem %s2, %s359
          %s361 = smul.u32 64, %s17
          %s362 = ssub.s32 125, %s361
          %p363 = scmp.lt.s32.totalorder %s362, 64
          %s364 = scalar_select %p363, %s362, 64
          %s365 = smul.u32 8, %s364
        $region48: #{tpu_custom_call.1} parent=35 // pred_fallthru
          _
      $region36: #{tpu_custom_call.1} parent=5 // pred_fallthru
        _
      %p366 = scmp.le.s32.totalorder 1, %s17
      %p367 = scmp.lt.s32.totalorder %s17, 3
      %p368 = pnand %p366, %p367
      %p369 = pneg %p368
      // Predicated region
      $region49: #{tpu_custom_call.1} parent=5 // pred_check
        _
      $region50: #{tpu_custom_call.1} parent=5 // pred_check_branch
        %371 = sbr.rel (%p368) target = $region52
      $region51: #{tpu_custom_call.1} parent=5 // pred_region
        %s372 = ssub.s32 %s17, 1
        %s373 = smul.u32 64, %s22
        %s374 = ssub.s32 125, %s373
        %p375 = scmp.lt.s32.totalorder %s374, 64
        %s376 = scalar_select %p375, %s374, 64
        %s377 = smul.u32 8, %s376
        %s378 = smul.u32 %s377, 2
        %p379 = scmp.lt.s32.totalorder %s373, 124
        %s380 = scalar_select %p379, %s373, 124
        %s381 = smul.addr %s380, 2
        %s382 = smul.addr %s381, 8
        %s383 = scalar_lea.vmem %s0, %s382
        %p384 = pneg %p43
        %p385 = pneg %p40
        %s386 = smul.u32 64, %s22
        %s387 = ssub.s32 125, %s386
        %p388 = scmp.lt.s32.totalorder %s387, 64
        %s389 = scalar_select %p388, %s387, 64
        %s390 = smul.u32 8, %s389
        %p391 = scmp.lt.s32.totalorder %s386, 124
        %s392 = scalar_select %p391, %s386, 124
        %s393 = smul.addr %s392, 8
        %s394 = scalar_lea.vmem %s1, %s393
        %p395 = pneg %p69
        %p396 = pneg %p66
        %s397 = smul.u32 64, %s22
        %s398 = ssub.s32 125, %s397
        %p399 = scmp.lt.s32.totalorder %s398, 64
        %s400 = scalar_select %p399, %s398, 64
        %s401 = smul.u32 8, %s400
        %p402 = scmp.lt.s32.totalorder %s397, 124
        %s403 = scalar_select %p402, %s397, 124
        %s404 = smul.addr %s403, 8
        %s405 = scalar_lea.vmem %s2, %s404
        %p406 = pneg %p95
        %p407 = pneg %p92
        %p408 = pneg %p116
        %p409 = pneg %p113
        %p410 = pneg %p137
        %p411 = pneg %p134
        %p412 = pneg %p158
        %p413 = pneg %p155
        %p414 = pneg %p179
        %p415 = pneg %p176
        %p416 = pneg %p200
        %p417 = pneg %p197
        %p418 = pneg %p226
        %p419 = pneg %p223
        %s420 = sand.u32 %s213, 1
        %s421 = sand.u32 %s213, 1
        %s422 = smul.addr %s421, 512
        %s423 = scalar_lea.vmem [#allocation2], %s422
        %p424 = pneg %p252
        %p425 = pneg %p249
        %s426 = sand.u32 %s239, 1
        %s427 = sand.u32 %s239, 1
        %s428 = smul.addr %s427, 512
        %s429 = scalar_lea.vmem [#allocation3], %s428
        %p430 = pneg %p278
        %p431 = pneg %p275
        %s432 = sand.u32 %s265, 1
        %s433 = sand.u32 %s265, 1
        %s434 = smul.addr %s433, 512
        %s435 = scalar_lea.vmem [#allocation4], %s434
        %s436 = smul.u32 64, %s22
        %s437 = ssub.s32 125, %s436
        %p438 = scmp.lt.s32.totalorder %s437, 64
        %s439 = scalar_select %p438, %s437, 64
        %s440 = smul.u32 8, %s439
        %s441 = smul.u32 %s440, 2
        %p442 = scmp.lt.s32.totalorder %s436, 124
        %s443 = scalar_select %p442, %s436, 124
        %s444 = smul.addr %s443, 2
        %s445 = smul.addr %s444, 8
        %s446 = scalar_lea.vmem %s0, %s445
        %s447 = smul.u32 64, %s22
        %s448 = ssub.s32 125, %s447
        %p449 = scmp.lt.s32.totalorder %s448, 64
        %s450 = scalar_select %p449, %s448, 64
        %s451 = smul.u32 8, %s450
        %s452 = smul.u32 %s451, 2
        %s453 = smul.u32 64, %s22
        %s454 = ssub.s32 125, %s453
        %p455 = scmp.lt.s32.totalorder %s454, 64
        %s456 = scalar_select %p455, %s454, 64
        %s457 = smul.u32 8, %s456
        %p458 = scmp.lt.s32.totalorder %s453, 124
        %s459 = scalar_select %p458, %s453, 124
        %s460 = smul.addr %s459, 8
        %s461 = scalar_lea.vmem %s1, %s460
        %s462 = smul.u32 64, %s22
        %s463 = ssub.s32 125, %s462
        %p464 = scmp.lt.s32.totalorder %s463, 64
        %s465 = scalar_select %p464, %s463, 64
        %s466 = smul.u32 8, %s465
        %s467 = smul.u32 64, %s22
        %s468 = ssub.s32 125, %s467
        %p469 = scmp.lt.s32.totalorder %s468, 64
        %s470 = scalar_select %p469, %s468, 64
        %s471 = smul.u32 8, %s470
        %p472 = scmp.lt.s32.totalorder %s467, 124
        %s473 = scalar_select %p472, %s467, 124
        %s474 = smul.addr %s473, 8
        %s475 = scalar_lea.vmem %s2, %s474
        %s476 = smul.u32 64, %s22
        %s477 = ssub.s32 125, %s476
        %p478 = scmp.lt.s32.totalorder %s477, 64
        %s479 = scalar_select %p478, %s477, 64
        %s480 = smul.u32 8, %s479
        %s481 = smul.u32 64, %s22
        %s482 = ssub.s32 125, %s481
        %p483 = scmp.lt.s32.totalorder %s482, 64
        %s484 = scalar_select %p483, %s482, 64
        %s485 = smul.u32 8, %s484
        %s486 = smul.u32 64, %s22
        %s487 = ssub.s32 125, %s486
        %p488 = scmp.lt.s32.totalorder %s487, 64
        %s489 = scalar_select %p488, %s487, 64
        %s490 = smul.u32 8, %s489
        %s491 = smul.u32 64, %s22
        %s492 = ssub.s32 125, %s491
        %p493 = scmp.lt.s32.totalorder %s492, 64
        %s494 = scalar_select %p493, %s492, 64
        %s495 = smul.u32 8, %s494
        %v497 = vld [vmem:[%s446] sm:$0xff]
        %v498 = vld [vmem:[%s446 + $0x8] sm:$0xff]
        %v499 = vld [vmem:[%s446 + $0x10] sm:$0xff]
        %v500 = vld [vmem:[%s446 + $0x18] sm:$0xff]
        %v501 = vld [vmem:[%s446 + $0x20] sm:$0xff]
        %v502 = vld [vmem:[%s446 + $0x28] sm:$0xff]
        %v503 = vld [vmem:[%s446 + $0x30] sm:$0xff]
        %v504 = vld [vmem:[%s446 + $0x38] sm:$0xff]
        %v505 = vld [vmem:[%s446 + $0x40] sm:$0xff]
        %v506 = vld [vmem:[%s446 + $0x48] sm:$0xff]
        %v507 = vld [vmem:[%s446 + $0x50] sm:$0xff]
        %v508 = vld [vmem:[%s446 + $0x58] sm:$0xff]
        %v509 = vld [vmem:[%s446 + $0x60] sm:$0xff]
        %v510 = vld [vmem:[%s446 + $0x68] sm:$0xff]
        %v511 = vld [vmem:[%s446 + $0x70] sm:$0xff]
        %v512 = vld [vmem:[%s446 + $0x78] sm:$0xff]
        %v513 = vld [vmem:[%s446 + $0x80] sm:$0xff]
        %v514 = vld [vmem:[%s446 + $0x88] sm:$0xff]
        %v515 = vld [vmem:[%s446 + $0x90] sm:$0xff]
        %v516 = vld [vmem:[%s446 + $0x98] sm:$0xff]
        %v517 = vld [vmem:[%s446 + $0xa0] sm:$0xff]
        %v518 = vld [vmem:[%s446 + $0xa8] sm:$0xff]
        %v519 = vld [vmem:[%s446 + $0xb0] sm:$0xff]
        %v520 = vld [vmem:[%s446 + $0xb8] sm:$0xff]
        %v521 = vld [vmem:[%s446 + $0xc0] sm:$0xff]
        %v522 = vld [vmem:[%s446 + $0xc8] sm:$0xff]
        %v523 = vld [vmem:[%s446 + $0xd0] sm:$0xff]
        %v524 = vld [vmem:[%s446 + $0xd8] sm:$0xff]
        %v525 = vld [vmem:[%s446 + $0xe0] sm:$0xff]
        %v526 = vld [vmem:[%s446 + $0xe8] sm:$0xff]
        %v527 = vld [vmem:[%s446 + $0xf0] sm:$0xff]
        %v528 = vld [vmem:[%s446 + $0xf8] sm:$0xff]
        %v529 = vld [vmem:[%s446 + $0x100] sm:$0xff]
        %v530 = vld [vmem:[%s446 + $0x108] sm:$0xff]
        %v531 = vld [vmem:[%s446 + $0x110] sm:$0xff]
        %v532 = vld [vmem:[%s446 + $0x118] sm:$0xff]
        %v533 = vld [vmem:[%s446 + $0x120] sm:$0xff]
        %v534 = vld [vmem:[%s446 + $0x128] sm:$0xff]
        %v535 = vld [vmem:[%s446 + $0x130] sm:$0xff]
        %v536 = vld [vmem:[%s446 + $0x138] sm:$0xff]
        %v537 = vld [vmem:[%s446 + $0x140] sm:$0xff]
        %v538 = vld [vmem:[%s446 + $0x148] sm:$0xff]
        %v539 = vld [vmem:[%s446 + $0x150] sm:$0xff]
        %v540 = vld [vmem:[%s446 + $0x158] sm:$0xff]
        %v541 = vld [vmem:[%s446 + $0x160] sm:$0xff]
        %v542 = vld [vmem:[%s446 + $0x168] sm:$0xff]
        %v543 = vld [vmem:[%s446 + $0x170] sm:$0xff]
        %v544 = vld [vmem:[%s446 + $0x178] sm:$0xff]
        %v545 = vld [vmem:[%s446 + $0x180] sm:$0xff]
        %v546 = vld [vmem:[%s446 + $0x188] sm:$0xff]
        %v547 = vld [vmem:[%s446 + $0x190] sm:$0xff]
        %v548 = vld [vmem:[%s446 + $0x198] sm:$0xff]
        %v549 = vld [vmem:[%s446 + $0x1a0] sm:$0xff]
        %v550 = vld [vmem:[%s446 + $0x1a8] sm:$0xff]
        %v551 = vld [vmem:[%s446 + $0x1b0] sm:$0xff]
        %v552 = vld [vmem:[%s446 + $0x1b8] sm:$0xff]
        %v553 = vld [vmem:[%s446 + $0x1c0] sm:$0xff]
        %v554 = vld [vmem:[%s446 + $0x1c8] sm:$0xff]
        %v555 = vld [vmem:[%s446 + $0x1d0] sm:$0xff]
        %v556 = vld [vmem:[%s446 + $0x1d8] sm:$0xff]
        %v557 = vld [vmem:[%s446 + $0x1e0] sm:$0xff]
        %v558 = vld [vmem:[%s446 + $0x1e8] sm:$0xff]
        %v559 = vld [vmem:[%s446 + $0x1f0] sm:$0xff]
        %v560 = vld [vmem:[%s446 + $0x1f8] sm:$0xff]
        %v561 = vld [vmem:[%s446 + $0x200] sm:$0xff]
        %v562 = vld [vmem:[%s446 + $0x208] sm:$0xff]
        %v563 = vld [vmem:[%s446 + $0x210] sm:$0xff]
        %v564 = vld [vmem:[%s446 + $0x218] sm:$0xff]
        %v565 = vld [vmem:[%s446 + $0x220] sm:$0xff]
        %v566 = vld [vmem:[%s446 + $0x228] sm:$0xff]
        %v567 = vld [vmem:[%s446 + $0x230] sm:$0xff]
        %v568 = vld [vmem:[%s446 + $0x238] sm:$0xff]
        %v569 = vld [vmem:[%s446 + $0x240] sm:$0xff]
        %v570 = vld [vmem:[%s446 + $0x248] sm:$0xff]
        %v571 = vld [vmem:[%s446 + $0x250] sm:$0xff]
        %v572 = vld [vmem:[%s446 + $0x258] sm:$0xff]
        %v573 = vld [vmem:[%s446 + $0x260] sm:$0xff]
        %v574 = vld [vmem:[%s446 + $0x268] sm:$0xff]
        %v575 = vld [vmem:[%s446 + $0x270] sm:$0xff]
        %v576 = vld [vmem:[%s446 + $0x278] sm:$0xff]
        %v577 = vld [vmem:[%s446 + $0x280] sm:$0xff]
        %v578 = vld [vmem:[%s446 + $0x288] sm:$0xff]
        %v579 = vld [vmem:[%s446 + $0x290] sm:$0xff]
        %v580 = vld [vmem:[%s446 + $0x298] sm:$0xff]
        %v581 = vld [vmem:[%s446 + $0x2a0] sm:$0xff]
        %v582 = vld [vmem:[%s446 + $0x2a8] sm:$0xff]
        %v583 = vld [vmem:[%s446 + $0x2b0] sm:$0xff]
        %v584 = vld [vmem:[%s446 + $0x2b8] sm:$0xff]
        %v585 = vld [vmem:[%s446 + $0x2c0] sm:$0xff]
        %v586 = vld [vmem:[%s446 + $0x2c8] sm:$0xff]
        %v587 = vld [vmem:[%s446 + $0x2d0] sm:$0xff]
        %v588 = vld [vmem:[%s446 + $0x2d8] sm:$0xff]
        %v589 = vld [vmem:[%s446 + $0x2e0] sm:$0xff]
        %v590 = vld [vmem:[%s446 + $0x2e8] sm:$0xff]
        %v591 = vld [vmem:[%s446 + $0x2f0] sm:$0xff]
        %v592 = vld [vmem:[%s446 + $0x2f8] sm:$0xff]
        %v593 = vld [vmem:[%s446 + $0x300] sm:$0xff]
        %v594 = vld [vmem:[%s446 + $0x308] sm:$0xff]
        %v595 = vld [vmem:[%s446 + $0x310] sm:$0xff]
        %v596 = vld [vmem:[%s446 + $0x318] sm:$0xff]
        %v597 = vld [vmem:[%s446 + $0x320] sm:$0xff]
        %v598 = vld [vmem:[%s446 + $0x328] sm:$0xff]
        %v599 = vld [vmem:[%s446 + $0x330] sm:$0xff]
        %v600 = vld [vmem:[%s446 + $0x338] sm:$0xff]
        %v601 = vld [vmem:[%s446 + $0x340] sm:$0xff]
        %v602 = vld [vmem:[%s446 + $0x348] sm:$0xff]
        %v603 = vld [vmem:[%s446 + $0x350] sm:$0xff]
        %v604 = vld [vmem:[%s446 + $0x358] sm:$0xff]
        %v605 = vld [vmem:[%s446 + $0x360] sm:$0xff]
        %v606 = vld [vmem:[%s446 + $0x368] sm:$0xff]
        %v607 = vld [vmem:[%s446 + $0x370] sm:$0xff]
        %v608 = vld [vmem:[%s446 + $0x378] sm:$0xff]
        %v609 = vld [vmem:[%s446 + $0x380] sm:$0xff]
        %v610 = vld [vmem:[%s446 + $0x388] sm:$0xff]
        %v611 = vld [vmem:[%s446 + $0x390] sm:$0xff]
        %v612 = vld [vmem:[%s446 + $0x398] sm:$0xff]
        %v613 = vld [vmem:[%s446 + $0x3a0] sm:$0xff]
        %v614 = vld [vmem:[%s446 + $0x3a8] sm:$0xff]
        %v615 = vld [vmem:[%s446 + $0x3b0] sm:$0xff]
        %v616 = vld [vmem:[%s446 + $0x3b8] sm:$0xff]
        %v617 = vld [vmem:[%s446 + $0x3c0] sm:$0xff]
        %v618 = vld [vmem:[%s446 + $0x3c8] sm:$0xff]
        %v619 = vld [vmem:[%s446 + $0x3d0] sm:$0xff]
        %v620 = vld [vmem:[%s446 + $0x3d8] sm:$0xff]
        %v621 = vld [vmem:[%s446 + $0x3e0] sm:$0xff]
        %v622 = vld [vmem:[%s446 + $0x3e8] sm:$0xff]
        %v623 = vld [vmem:[%s446 + $0x3f0] sm:$0xff]
        %v624 = vld [vmem:[%s446 + $0x3f8] sm:$0xff]
        %v625 = vpack.c.bf16 %v499, %v497
        %v626 = vpack.c.bf16 %v500, %v498
        %v627 = vpack.c.bf16 %v503, %v501
        %v628 = vpack.c.bf16 %v504, %v502
        %v629 = vpack.c.bf16 %v507, %v505
        %v630 = vpack.c.bf16 %v508, %v506
        %v631 = vpack.c.bf16 %v511, %v509
        %v632 = vpack.c.bf16 %v512, %v510
        %v633 = vpack.c.bf16 %v515, %v513
        %v634 = vpack.c.bf16 %v516, %v514
        %v635 = vpack.c.bf16 %v519, %v517
        %v636 = vpack.c.bf16 %v520, %v518
        %v637 = vpack.c.bf16 %v523, %v521
        %v638 = vpack.c.bf16 %v524, %v522
        %v639 = vpack.c.bf16 %v527, %v525
        %v640 = vpack.c.bf16 %v528, %v526
        %v641 = vpack.c.bf16 %v531, %v529
        %v642 = vpack.c.bf16 %v532, %v530
        %v643 = vpack.c.bf16 %v535, %v533
        %v644 = vpack.c.bf16 %v536, %v534
        %v645 = vpack.c.bf16 %v539, %v537
        %v646 = vpack.c.bf16 %v540, %v538
        %v647 = vpack.c.bf16 %v543, %v541
        %v648 = vpack.c.bf16 %v544, %v542
        %v649 = vpack.c.bf16 %v547, %v545
        %v650 = vpack.c.bf16 %v548, %v546
        %v651 = vpack.c.bf16 %v551, %v549
        %v652 = vpack.c.bf16 %v552, %v550
        %v653 = vpack.c.bf16 %v555, %v553
        %v654 = vpack.c.bf16 %v556, %v554
        %v655 = vpack.c.bf16 %v559, %v557
        %v656 = vpack.c.bf16 %v560, %v558
        %v657 = vpack.c.bf16 %v563, %v561
        %v658 = vpack.c.bf16 %v564, %v562
        %v659 = vpack.c.bf16 %v567, %v565
        %v660 = vpack.c.bf16 %v568, %v566
        %v661 = vpack.c.bf16 %v571, %v569
        %v662 = vpack.c.bf16 %v572, %v570
        %v663 = vpack.c.bf16 %v575, %v573
        %v664 = vpack.c.bf16 %v576, %v574
        %v665 = vpack.c.bf16 %v579, %v577
        %v666 = vpack.c.bf16 %v580, %v578
        %v667 = vpack.c.bf16 %v583, %v581
        %v668 = vpack.c.bf16 %v584, %v582
        %v669 = vpack.c.bf16 %v587, %v585
        %v670 = vpack.c.bf16 %v588, %v586
        %v671 = vpack.c.bf16 %v591, %v589
        %v672 = vpack.c.bf16 %v592, %v590
        %v673 = vpack.c.bf16 %v595, %v593
        %v674 = vpack.c.bf16 %v596, %v594
        %v675 = vpack.c.bf16 %v599, %v597
        %v676 = vpack.c.bf16 %v600, %v598
        %v677 = vpack.c.bf16 %v603, %v601
        %v678 = vpack.c.bf16 %v604, %v602
        %v679 = vpack.c.bf16 %v607, %v605
        %v680 = vpack.c.bf16 %v608, %v606
        %v681 = vpack.c.bf16 %v611, %v609
        %v682 = vpack.c.bf16 %v612, %v610
        %v683 = vpack.c.bf16 %v615, %v613
        %v684 = vpack.c.bf16 %v616, %v614
        %v685 = vpack.c.bf16 %v619, %v617
        %v686 = vpack.c.bf16 %v620, %v618
        %v687 = vpack.c.bf16 %v623, %v621
        %v688 = vpack.c.bf16 %v624, %v622
        %v689 = vld [vmem:[%s461] sm:$0xff]
        %v690 = vld [vmem:[%s461 + $0x8] sm:$0xff]
        %v691 = vld [vmem:[%s461 + $0x10] sm:$0xff]
        %v692 = vld [vmem:[%s461 + $0x18] sm:$0xff]
        %v693 = vld [vmem:[%s461 + $0x20] sm:$0xff]
        %v694 = vld [vmem:[%s461 + $0x28] sm:$0xff]
        %v695 = vld [vmem:[%s461 + $0x30] sm:$0xff]
        %v696 = vld [vmem:[%s461 + $0x38] sm:$0xff]
        %v697 = vld [vmem:[%s461 + $0x40] sm:$0xff]
        %v698 = vld [vmem:[%s461 + $0x48] sm:$0xff]
        %v699 = vld [vmem:[%s461 + $0x50] sm:$0xff]
        %v700 = vld [vmem:[%s461 + $0x58] sm:$0xff]
        %v701 = vld [vmem:[%s461 + $0x60] sm:$0xff]
        %v702 = vld [vmem:[%s461 + $0x68] sm:$0xff]
        %v703 = vld [vmem:[%s461 + $0x70] sm:$0xff]
        %v704 = vld [vmem:[%s461 + $0x78] sm:$0xff]
        %v705 = vld [vmem:[%s461 + $0x80] sm:$0xff]
        %v706 = vld [vmem:[%s461 + $0x88] sm:$0xff]
        %v707 = vld [vmem:[%s461 + $0x90] sm:$0xff]
        %v708 = vld [vmem:[%s461 + $0x98] sm:$0xff]
        %v709 = vld [vmem:[%s461 + $0xa0] sm:$0xff]
        %v710 = vld [vmem:[%s461 + $0xa8] sm:$0xff]
        %v711 = vld [vmem:[%s461 + $0xb0] sm:$0xff]
        %v712 = vld [vmem:[%s461 + $0xb8] sm:$0xff]
        %v713 = vld [vmem:[%s461 + $0xc0] sm:$0xff]
        %v714 = vld [vmem:[%s461 + $0xc8] sm:$0xff]
        %v715 = vld [vmem:[%s461 + $0xd0] sm:$0xff]
        %v716 = vld [vmem:[%s461 + $0xd8] sm:$0xff]
        %v717 = vld [vmem:[%s461 + $0xe0] sm:$0xff]
        %v718 = vld [vmem:[%s461 + $0xe8] sm:$0xff]
        %v719 = vld [vmem:[%s461 + $0xf0] sm:$0xff]
        %v720 = vld [vmem:[%s461 + $0xf8] sm:$0xff]
        %v721 = vld [vmem:[%s461 + $0x100] sm:$0xff]
        %v722 = vld [vmem:[%s461 + $0x108] sm:$0xff]
        %v723 = vld [vmem:[%s461 + $0x110] sm:$0xff]
        %v724 = vld [vmem:[%s461 + $0x118] sm:$0xff]
        %v725 = vld [vmem:[%s461 + $0x120] sm:$0xff]
        %v726 = vld [vmem:[%s461 + $0x128] sm:$0xff]
        %v727 = vld [vmem:[%s461 + $0x130] sm:$0xff]
        %v728 = vld [vmem:[%s461 + $0x138] sm:$0xff]
        %v729 = vld [vmem:[%s461 + $0x140] sm:$0xff]
        %v730 = vld [vmem:[%s461 + $0x148] sm:$0xff]
        %v731 = vld [vmem:[%s461 + $0x150] sm:$0xff]
        %v732 = vld [vmem:[%s461 + $0x158] sm:$0xff]
        %v733 = vld [vmem:[%s461 + $0x160] sm:$0xff]
        %v734 = vld [vmem:[%s461 + $0x168] sm:$0xff]
        %v735 = vld [vmem:[%s461 + $0x170] sm:$0xff]
        %v736 = vld [vmem:[%s461 + $0x178] sm:$0xff]
        %v737 = vld [vmem:[%s461 + $0x180] sm:$0xff]
        %v738 = vld [vmem:[%s461 + $0x188] sm:$0xff]
        %v739 = vld [vmem:[%s461 + $0x190] sm:$0xff]
        %v740 = vld [vmem:[%s461 + $0x198] sm:$0xff]
        %v741 = vld [vmem:[%s461 + $0x1a0] sm:$0xff]
        %v742 = vld [vmem:[%s461 + $0x1a8] sm:$0xff]
        %v743 = vld [vmem:[%s461 + $0x1b0] sm:$0xff]
        %v744 = vld [vmem:[%s461 + $0x1b8] sm:$0xff]
        %v745 = vld [vmem:[%s461 + $0x1c0] sm:$0xff]
        %v746 = vld [vmem:[%s461 + $0x1c8] sm:$0xff]
        %v747 = vld [vmem:[%s461 + $0x1d0] sm:$0xff]
        %v748 = vld [vmem:[%s461 + $0x1d8] sm:$0xff]
        %v749 = vld [vmem:[%s461 + $0x1e0] sm:$0xff]
        %v750 = vld [vmem:[%s461 + $0x1e8] sm:$0xff]
        %v751 = vld [vmem:[%s461 + $0x1f0] sm:$0xff]
        %v752 = vld [vmem:[%s461 + $0x1f8] sm:$0xff]
        %v753 = vpack.c.bf16 %v690, %v689
        %v754 = vpack.c.bf16 %v692, %v691
        %v755 = vpack.c.bf16 %v694, %v693
        %v756 = vpack.c.bf16 %v696, %v695
        %v757 = vpack.c.bf16 %v698, %v697
        %v758 = vpack.c.bf16 %v700, %v699
        %v759 = vpack.c.bf16 %v702, %v701
        %v760 = vpack.c.bf16 %v704, %v703
        %v761 = vpack.c.bf16 %v706, %v705
        %v762 = vpack.c.bf16 %v708, %v707
        %v763 = vpack.c.bf16 %v710, %v709
        %v764 = vpack.c.bf16 %v712, %v711
        %v765 = vpack.c.bf16 %v714, %v713
        %v766 = vpack.c.bf16 %v716, %v715
        %v767 = vpack.c.bf16 %v718, %v717
        %v768 = vpack.c.bf16 %v720, %v719
        %v769 = vpack.c.bf16 %v722, %v721
        %v770 = vpack.c.bf16 %v724, %v723
        %v771 = vpack.c.bf16 %v726, %v725
        %v772 = vpack.c.bf16 %v728, %v727
        %v773 = vpack.c.bf16 %v730, %v729
        %v774 = vpack.c.bf16 %v732, %v731
        %v775 = vpack.c.bf16 %v734, %v733
        %v776 = vpack.c.bf16 %v736, %v735
        %v777 = vpack.c.bf16 %v738, %v737
        %v778 = vpack.c.bf16 %v740, %v739
        %v779 = vpack.c.bf16 %v742, %v741
        %v780 = vpack.c.bf16 %v744, %v743
        %v781 = vpack.c.bf16 %v746, %v745
        %v782 = vpack.c.bf16 %v748, %v747
        %v783 = vpack.c.bf16 %v750, %v749
        %v784 = vpack.c.bf16 %v752, %v751
        %v785 = vld [vmem:[%s475] sm:$0xff]
        %v786 = vld [vmem:[%s475 + $0x8] sm:$0xff]
        %v787 = vld [vmem:[%s475 + $0x10] sm:$0xff]
        %v788 = vld [vmem:[%s475 + $0x18] sm:$0xff]
        %v789 = vld [vmem:[%s475 + $0x20] sm:$0xff]
        %v790 = vld [vmem:[%s475 + $0x28] sm:$0xff]
        %v791 = vld [vmem:[%s475 + $0x30] sm:$0xff]
        %v792 = vld [vmem:[%s475 + $0x38] sm:$0xff]
        %v793 = vld [vmem:[%s475 + $0x40] sm:$0xff]
        %v794 = vld [vmem:[%s475 + $0x48] sm:$0xff]
        %v795 = vld [vmem:[%s475 + $0x50] sm:$0xff]
        %v796 = vld [vmem:[%s475 + $0x58] sm:$0xff]
        %v797 = vld [vmem:[%s475 + $0x60] sm:$0xff]
        %v798 = vld [vmem:[%s475 + $0x68] sm:$0xff]
        %v799 = vld [vmem:[%s475 + $0x70] sm:$0xff]
        %v800 = vld [vmem:[%s475 + $0x78] sm:$0xff]
        %v801 = vld [vmem:[%s475 + $0x80] sm:$0xff]
        %v802 = vld [vmem:[%s475 + $0x88] sm:$0xff]
        %v803 = vld [vmem:[%s475 + $0x90] sm:$0xff]
        %v804 = vld [vmem:[%s475 + $0x98] sm:$0xff]
        %v805 = vld [vmem:[%s475 + $0xa0] sm:$0xff]
        %v806 = vld [vmem:[%s475 + $0xa8] sm:$0xff]
        %v807 = vld [vmem:[%s475 + $0xb0] sm:$0xff]
        %v808 = vld [vmem:[%s475 + $0xb8] sm:$0xff]
        %v809 = vld [vmem:[%s475 + $0xc0] sm:$0xff]
        %v810 = vld [vmem:[%s475 + $0xc8] sm:$0xff]
        %v811 = vld [vmem:[%s475 + $0xd0] sm:$0xff]
        %v812 = vld [vmem:[%s475 + $0xd8] sm:$0xff]
        %v813 = vld [vmem:[%s475 + $0xe0] sm:$0xff]
        %v814 = vld [vmem:[%s475 + $0xe8] sm:$0xff]
        %v815 = vld [vmem:[%s475 + $0xf0] sm:$0xff]
        %v816 = vld [vmem:[%s475 + $0xf8] sm:$0xff]
        %v817 = vld [vmem:[%s475 + $0x100] sm:$0xff]
        %v818 = vld [vmem:[%s475 + $0x108] sm:$0xff]
        %v819 = vld [vmem:[%s475 + $0x110] sm:$0xff]
        %v820 = vld [vmem:[%s475 + $0x118] sm:$0xff]
        %v821 = vld [vmem:[%s475 + $0x120] sm:$0xff]
        %v822 = vld [vmem:[%s475 + $0x128] sm:$0xff]
        %v823 = vld [vmem:[%s475 + $0x130] sm:$0xff]
        %v824 = vld [vmem:[%s475 + $0x138] sm:$0xff]
        %v825 = vld [vmem:[%s475 + $0x140] sm:$0xff]
        %v826 = vld [vmem:[%s475 + $0x148] sm:$0xff]
        %v827 = vld [vmem:[%s475 + $0x150] sm:$0xff]
        %v828 = vld [vmem:[%s475 + $0x158] sm:$0xff]
        %v829 = vld [vmem:[%s475 + $0x160] sm:$0xff]
        %v830 = vld [vmem:[%s475 + $0x168] sm:$0xff]
        %v831 = vld [vmem:[%s475 + $0x170] sm:$0xff]
        %v832 = vld [vmem:[%s475 + $0x178] sm:$0xff]
        %v833 = vld [vmem:[%s475 + $0x180] sm:$0xff]
        %v834 = vld [vmem:[%s475 + $0x188] sm:$0xff]
        %v835 = vld [vmem:[%s475 + $0x190] sm:$0xff]
        %v836 = vld [vmem:[%s475 + $0x198] sm:$0xff]
        %v837 = vld [vmem:[%s475 + $0x1a0] sm:$0xff]
        %v838 = vld [vmem:[%s475 + $0x1a8] sm:$0xff]
        %v839 = vld [vmem:[%s475 + $0x1b0] sm:$0xff]
        %v840 = vld [vmem:[%s475 + $0x1b8] sm:$0xff]
        %v841 = vld [vmem:[%s475 + $0x1c0] sm:$0xff]
        %v842 = vld [vmem:[%s475 + $0x1c8] sm:$0xff]
        %v843 = vld [vmem:[%s475 + $0x1d0] sm:$0xff]
        %v844 = vld [vmem:[%s475 + $0x1d8] sm:$0xff]
        %v845 = vld [vmem:[%s475 + $0x1e0] sm:$0xff]
        %v846 = vld [vmem:[%s475 + $0x1e8] sm:$0xff]
        %v847 = vld [vmem:[%s475 + $0x1f0] sm:$0xff]
        %v848 = vld [vmem:[%s475 + $0x1f8] sm:$0xff]
        %v849 = vld [vmem:[%s3] sm:$0xf]
        %v850 = vld [vmem:[%s3 + $0x4] sm:$0xf]
        %v851 = vld [vmem:[%s3 + $0x8] sm:$0xf]
        %v852 = vld [vmem:[%s3 + $0xc] sm:$0xf]
        %v853 = vld [vmem:[%s3 + $0x10] sm:$0xf]
        %v854 = vld [vmem:[%s3 + $0x14] sm:$0xf]
        %v855 = vld [vmem:[%s3 + $0x18] sm:$0xf]
        %v856 = vld [vmem:[%s3 + $0x1c] sm:$0xf]
        %v857 = vld [vmem:[%s3 + $0x20] sm:$0xf]
        %v858 = vld [vmem:[%s3 + $0x24] sm:$0xf]
        %v859 = vld [vmem:[%s3 + $0x28] sm:$0xf]
        %v860 = vld [vmem:[%s3 + $0x2c] sm:$0xf]
        %v861 = vld [vmem:[%s3 + $0x30] sm:$0xf]
        %v862 = vld [vmem:[%s3 + $0x34] sm:$0xf]
        %v863 = vld [vmem:[%s3 + $0x38] sm:$0xf]
        %v864 = vld [vmem:[%s3 + $0x3c] sm:$0xf]
        %v865 = vld [vmem:[%s3 + $0x40] sm:$0xf]
        %v866 = vld [vmem:[%s3 + $0x44] sm:$0xf]
        %v867 = vld [vmem:[%s3 + $0x48] sm:$0xf]
        %v868 = vld [vmem:[%s3 + $0x4c] sm:$0xf]
        %v869 = vld [vmem:[%s3 + $0x50] sm:$0x7]
        %v870 = vld [vmem:[%s4] sm:$0xf]
        %v871 = vld [vmem:[%s4 + $0x4] sm:$0xf]
        %v872 = vld [vmem:[%s4 + $0x8] sm:$0xf]
        %v873 = vld [vmem:[%s4 + $0xc] sm:$0xf]
        %v878 = vunpack.c.l.b16 %v870
        %v879 = vunpack.c.l.b16 %v871
        %v880 = vunpack.c.l.b16 %v872
        %v881 = vunpack.c.l.b16 %v873
        %v882 = vpack.c.b16 %v879, %v878
        %v883 = vpack.c.b16 %v881, %v880
        %vm886 = vcmask 261120
        %v888 = vsel %vm886, %v753, 0
        %v891 = vsel %vm886, %v754, 0
        %v894 = vsel %vm886, %v755, 0
        %v897 = vsel %vm886, %v756, 0
        %v900 = vsel %vm886, %v757, 0
        %v903 = vsel %vm886, %v758, 0
        %v906 = vsel %vm886, %v759, 0
        %v909 = vsel %vm886, %v760, 0
        %v912 = vsel %vm886, %v761, 0
        %v915 = vsel %vm886, %v762, 0
        %v918 = vsel %vm886, %v763, 0
        %v921 = vsel %vm886, %v764, 0
        %v924 = vsel %vm886, %v765, 0
        %v927 = vsel %vm886, %v766, 0
        %v930 = vsel %vm886, %v767, 0
        %v933 = vsel %vm886, %v768, 0
        %v936 = vsel %vm886, %v769, 0
        %v939 = vsel %vm886, %v770, 0
        %v942 = vsel %vm886, %v771, 0
        %v945 = vsel %vm886, %v772, 0
        %v948 = vsel %vm886, %v773, 0
        %v951 = vsel %vm886, %v774, 0
        %v954 = vsel %vm886, %v775, 0
        %v957 = vsel %vm886, %v776, 0
        %v960 = vsel %vm886, %v777, 0
        %v963 = vsel %vm886, %v778, 0
        %v966 = vsel %vm886, %v779, 0
        %v969 = vsel %vm886, %v780, 0
        %v972 = vsel %vm886, %v781, 0
        %v975 = vsel %vm886, %v782, 0
        %v978 = vsel %vm886, %v783, 0
        %v981 = vsel %vm886, %v784, 0
        %983 = vmatpush.bf16.msra.mxu0 0
        %984 = vmatpush.bf16.msra.mxu0 0
        %985 = vmatpush.bf16.msra.mxu0 0
        %986 = vmatpush.bf16.msra.mxu0 0
        %987 = vmatpush.bf16.msra.mxu0 0
        %988 = vmatpush.bf16.msra.mxu0 0
        %989 = vmatpush.bf16.msra.mxu0 %v883
        %990 = vmatpush.bf16.msra.mxu0 %v882
        %991 = vmatmul.bf16.gmra.mxu0 %v888
        %v992 = vpop.f32.mrf.mxu0
        %v993 = vadd.f32 0.0, %v992
        %v994 = vpop.f32.mrf.mxu0
        %v995 = vadd.f32 0.0, %v994
        %996 = vmatmul.bf16.gmra.mxu0 %v891
        %v997 = vpop.f32.mrf.mxu0
        %v998 = vadd.f32 0.0, %v997
        %v999 = vpop.f32.mrf.mxu0
        %v1000 = vadd.f32 0.0, %v999
        %1001 = vmatmul.bf16.gmra.mxu0 %v894
        %v1002 = vpop.f32.mrf.mxu0
        %v1003 = vadd.f32 0.0, %v1002
        %v1004 = vpop.f32.mrf.mxu0
        %v1005 = vadd.f32 0.0, %v1004
        %1006 = vmatmul.bf16.gmra.mxu0 %v897
        %v1007 = vpop.f32.mrf.mxu0
        %v1008 = vadd.f32 0.0, %v1007
        %v1009 = vpop.f32.mrf.mxu0
        %v1010 = vadd.f32 0.0, %v1009
        %1011 = vmatmul.bf16.gmra.mxu0 %v900
        %v1012 = vpop.f32.mrf.mxu0
        %v1013 = vadd.f32 0.0, %v1012
        %v1014 = vpop.f32.mrf.mxu0
        %v1015 = vadd.f32 0.0, %v1014
        %1016 = vmatmul.bf16.gmra.mxu0 %v903
        %v1017 = vpop.f32.mrf.mxu0
        %v1018 = vadd.f32 0.0, %v1017
        %v1019 = vpop.f32.mrf.mxu0
        %v1020 = vadd.f32 0.0, %v1019
        %1021 = vmatmul.bf16.gmra.mxu0 %v906
        %v1022 = vpop.f32.mrf.mxu0
        %v1023 = vadd.f32 0.0, %v1022
        %v1024 = vpop.f32.mrf.mxu0
        %v1025 = vadd.f32 0.0, %v1024
        %1026 = vmatmul.bf16.gmra.mxu0 %v909
        %v1027 = vpop.f32.mrf.mxu0
        %v1028 = vadd.f32 0.0, %v1027
        %v1029 = vpop.f32.mrf.mxu0
        %v1030 = vadd.f32 0.0, %v1029
        %1031 = vmatmul.bf16.gmra.mxu0 %v912
        %v1032 = vpop.f32.mrf.mxu0
        %v1033 = vadd.f32 0.0, %v1032
        %v1034 = vpop.f32.mrf.mxu0
        %v1035 = vadd.f32 0.0, %v1034
        %1036 = vmatmul.bf16.gmra.mxu0 %v915
        %v1037 = vpop.f32.mrf.mxu0
        %v1038 = vadd.f32 0.0, %v1037
        %v1039 = vpop.f32.mrf.mxu0
        %v1040 = vadd.f32 0.0, %v1039
        %1041 = vmatmul.bf16.gmra.mxu0 %v918
        %v1042 = vpop.f32.mrf.mxu0
        %v1043 = vadd.f32 0.0, %v1042
        %v1044 = vpop.f32.mrf.mxu0
        %v1045 = vadd.f32 0.0, %v1044
        %1046 = vmatmul.bf16.gmra.mxu0 %v921
        %v1047 = vpop.f32.mrf.mxu0
        %v1048 = vadd.f32 0.0, %v1047
        %v1049 = vpop.f32.mrf.mxu0
        %v1050 = vadd.f32 0.0, %v1049
        %1051 = vmatmul.bf16.gmra.mxu0 %v924
        %v1052 = vpop.f32.mrf.mxu0
        %v1053 = vadd.f32 0.0, %v1052
        %v1054 = vpop.f32.mrf.mxu0
        %v1055 = vadd.f32 0.0, %v1054
        %1056 = vmatmul.bf16.gmra.mxu0 %v927
        %v1057 = vpop.f32.mrf.mxu0
        %v1058 = vadd.f32 0.0, %v1057
        %v1059 = vpop.f32.mrf.mxu0
        %v1060 = vadd.f32 0.0, %v1059
        %1061 = vmatmul.bf16.gmra.mxu0 %v930
        %v1062 = vpop.f32.mrf.mxu0
        %v1063 = vadd.f32 0.0, %v1062
        %v1064 = vpop.f32.mrf.mxu0
        %v1065 = vadd.f32 0.0, %v1064
        %1066 = vmatmul.bf16.gmra.mxu0 %v933
        %v1067 = vpop.f32.mrf.mxu0
        %v1068 = vadd.f32 0.0, %v1067
        %v1069 = vpop.f32.mrf.mxu0
        %v1070 = vadd.f32 0.0, %v1069
        %1071 = vmatmul.bf16.gmra.mxu0 %v936
        %v1072 = vpop.f32.mrf.mxu0
        %v1073 = vadd.f32 0.0, %v1072
        %v1074 = vpop.f32.mrf.mxu0
        %v1075 = vadd.f32 0.0, %v1074
        %1076 = vmatmul.bf16.gmra.mxu0 %v939
        %v1077 = vpop.f32.mrf.mxu0
        %v1078 = vadd.f32 0.0, %v1077
        %v1079 = vpop.f32.mrf.mxu0
        %v1080 = vadd.f32 0.0, %v1079
        %1081 = vmatmul.bf16.gmra.mxu0 %v942
        %v1082 = vpop.f32.mrf.mxu0
        %v1083 = vadd.f32 0.0, %v1082
        %v1084 = vpop.f32.mrf.mxu0
        %v1085 = vadd.f32 0.0, %v1084
        %1086 = vmatmul.bf16.gmra.mxu0 %v945
        %v1087 = vpop.f32.mrf.mxu0
        %v1088 = vadd.f32 0.0, %v1087
        %v1089 = vpop.f32.mrf.mxu0
        %v1090 = vadd.f32 0.0, %v1089
        %1091 = vmatmul.bf16.gmra.mxu0 %v948
        %v1092 = vpop.f32.mrf.mxu0
        %v1093 = vadd.f32 0.0, %v1092
        %v1094 = vpop.f32.mrf.mxu0
        %v1095 = vadd.f32 0.0, %v1094
        %1096 = vmatmul.bf16.gmra.mxu0 %v951
        %v1097 = vpop.f32.mrf.mxu0
        %v1098 = vadd.f32 0.0, %v1097
        %v1099 = vpop.f32.mrf.mxu0
        %v1100 = vadd.f32 0.0, %v1099
        %1101 = vmatmul.bf16.gmra.mxu0 %v954
        %v1102 = vpop.f32.mrf.mxu0
        %v1103 = vadd.f32 0.0, %v1102
        %v1104 = vpop.f32.mrf.mxu0
        %v1105 = vadd.f32 0.0, %v1104
        %1106 = vmatmul.bf16.gmra.mxu0 %v957
        %v1107 = vpop.f32.mrf.mxu0
        %v1108 = vadd.f32 0.0, %v1107
        %v1109 = vpop.f32.mrf.mxu0
        %v1110 = vadd.f32 0.0, %v1109
        %1111 = vmatmul.bf16.gmra.mxu0 %v960
        %v1112 = vpop.f32.mrf.mxu0
        %v1113 = vadd.f32 0.0, %v1112
        %v1114 = vpop.f32.mrf.mxu0
        %v1115 = vadd.f32 0.0, %v1114
        %1116 = vmatmul.bf16.gmra.mxu0 %v963
        %v1117 = vpop.f32.mrf.mxu0
        %v1118 = vadd.f32 0.0, %v1117
        %v1119 = vpop.f32.mrf.mxu0
        %v1120 = vadd.f32 0.0, %v1119
        %1121 = vmatmul.bf16.gmra.mxu0 %v966
        %v1122 = vpop.f32.mrf.mxu0
        %v1123 = vadd.f32 0.0, %v1122
        %v1124 = vpop.f32.mrf.mxu0
        %v1125 = vadd.f32 0.0, %v1124
        %1126 = vmatmul.bf16.gmra.mxu0 %v969
        %v1127 = vpop.f32.mrf.mxu0
        %v1128 = vadd.f32 0.0, %v1127
        %v1129 = vpop.f32.mrf.mxu0
        %v1130 = vadd.f32 0.0, %v1129
        %1131 = vmatmul.bf16.gmra.mxu0 %v972
        %v1132 = vpop.f32.mrf.mxu0
        %v1133 = vadd.f32 0.0, %v1132
        %v1134 = vpop.f32.mrf.mxu0
        %v1135 = vadd.f32 0.0, %v1134
        %1136 = vmatmul.bf16.gmra.mxu0 %v975
        %v1137 = vpop.f32.mrf.mxu0
        %v1138 = vadd.f32 0.0, %v1137
        %v1139 = vpop.f32.mrf.mxu0
        %v1140 = vadd.f32 0.0, %v1139
        %1141 = vmatmul.bf16.gmra.mxu0 %v978
        %v1142 = vpop.f32.mrf.mxu0
        %v1143 = vadd.f32 0.0, %v1142
        %v1144 = vpop.f32.mrf.mxu0
        %v1145 = vadd.f32 0.0, %v1144
        %1146 = vmatmul.bf16.gmra.mxu0 %v981
        %v1147 = vpop.f32.mrf.mxu0
        %v1148 = vadd.f32 0.0, %v1147
        %v1149 = vpop.f32.mrf.mxu0
        %v1150 = vadd.f32 0.0, %v1149
        %1151 = vdwg.mxu0
        %v1173 = vunpack.c.l.b16 %v849
        %v1174 = vunpack.c.l.b16 %v850
        %v1175 = vunpack.c.l.b16 %v851
        %v1176 = vunpack.c.l.b16 %v852
        %v1177 = vunpack.c.l.b16 %v853
        %v1178 = vunpack.c.l.b16 %v854
        %v1179 = vunpack.c.l.b16 %v855
        %v1180 = vunpack.c.l.b16 %v856
        %v1181 = vunpack.c.l.b16 %v857
        %v1182 = vunpack.c.l.b16 %v858
        %v1183 = vunpack.c.l.b16 %v859
        %v1184 = vunpack.c.l.b16 %v860
        %v1185 = vunpack.c.l.b16 %v861
        %v1186 = vunpack.c.l.b16 %v862
        %v1187 = vunpack.c.l.b16 %v863
        %v1188 = vunpack.c.l.b16 %v864
        %v1189 = vunpack.c.l.b16 %v865
        %v1190 = vunpack.c.l.b16 %v866
        %v1191 = vunpack.c.l.b16 %v867
        %v1192 = vunpack.c.l.b16 %v868
        %v1193 = vunpack.c.l.b16 %v869
        %v1194 = vpack.c.b16 %v1174, %v1173
        %v1195 = vpack.c.b16 %v1176, %v1175
        %v1196 = vpack.c.b16 %v1178, %v1177
        %v1197 = vpack.c.b16 %v1180, %v1179
        %v1198 = vpack.c.b16 %v1182, %v1181
        %v1199 = vpack.c.b16 %v1184, %v1183
        %v1200 = vpack.c.b16 %v1186, %v1185
        %v1201 = vpack.c.b16 %v1188, %v1187
        %v1202 = vpack.c.b16 %v1190, %v1189
        %v1203 = vpack.c.b16 %v1192, %v1191
        %v1204 = vpack.c.b16 %v1193, %v1193
        %vm1215 = vcmask 302080
        %v1217 = vsel %vm1215, %v626, 0
        %v1220 = vsel %vm1215, %v628, 0
        %v1223 = vsel %vm1215, %v630, 0
        %v1226 = vsel %vm1215, %v632, 0
        %v1229 = vsel %vm1215, %v634, 0
        %v1232 = vsel %vm1215, %v636, 0
        %v1235 = vsel %vm1215, %v638, 0
        %v1238 = vsel %vm1215, %v640, 0
        %v1241 = vsel %vm1215, %v642, 0
        %v1244 = vsel %vm1215, %v644, 0
        %v1247 = vsel %vm1215, %v646, 0
        %v1250 = vsel %vm1215, %v648, 0
        %v1253 = vsel %vm1215, %v650, 0
        %v1256 = vsel %vm1215, %v652, 0
        %v1259 = vsel %vm1215, %v654, 0
        %v1262 = vsel %vm1215, %v656, 0
        %v1265 = vsel %vm1215, %v658, 0
        %v1268 = vsel %vm1215, %v660, 0
        %v1271 = vsel %vm1215, %v662, 0
        %v1274 = vsel %vm1215, %v664, 0
        %v1277 = vsel %vm1215, %v666, 0
        %v1280 = vsel %vm1215, %v668, 0
        %v1283 = vsel %vm1215, %v670, 0
        %v1286 = vsel %vm1215, %v672, 0
        %v1289 = vsel %vm1215, %v674, 0
        %v1292 = vsel %vm1215, %v676, 0
        %v1295 = vsel %vm1215, %v678, 0
        %v1298 = vsel %vm1215, %v680, 0
        %v1301 = vsel %vm1215, %v682, 0
        %v1304 = vsel %vm1215, %v684, 0
        %v1307 = vsel %vm1215, %v686, 0
        %v1310 = vsel %vm1215, %v688, 0
        %vm1312 = vcmask 1041408
        %vm1313 = vcmask 1042432
        %v1314 = vsel %vm1312, 4294967295, 65535
        %v1315 = vsel %vm1313, %v1314, 0
        %v1317 = vand.u32 %v1204, %v1315
        %1319 = vmatpush.bf16.msra.mxu0 %v1201
        %1320 = vmatpush.bf16.msra.mxu0 %v1200
        %1321 = vmatpush.bf16.msra.mxu0 %v1199
        %1322 = vmatpush.bf16.msra.mxu0 %v1198
        %1323 = vmatpush.bf16.msra.mxu0 %v1197
        %1324 = vmatpush.bf16.msra.mxu0 %v1196
        %1325 = vmatpush.bf16.msra.mxu0 %v1195
        %1326 = vmatpush.bf16.msra.mxu0 %v1194
        %1327 = vmatmul.bf16.gmra.mxu0 %v625
        %v1328 = vpop.f32.mrf.mxu0
        %v1329 = vadd.f32 %v993, %v1328
        %v1330 = vpop.f32.mrf.mxu0
        %v1331 = vadd.f32 %v995, %v1330
        %1332 = vmatmul.bf16.gmra.mxu0 %v627
        %v1333 = vpop.f32.mrf.mxu0
        %v1334 = vadd.f32 %v998, %v1333
        %v1335 = vpop.f32.mrf.mxu0
        %v1336 = vadd.f32 %v1000, %v1335
        %1337 = vmatmul.bf16.gmra.mxu0 %v629
        %v1338 = vpop.f32.mrf.mxu0
        %v1339 = vadd.f32 %v1003, %v1338
        %v1340 = vpop.f32.mrf.mxu0
        %v1341 = vadd.f32 %v1005, %v1340
        %1342 = vmatmul.bf16.gmra.mxu0 %v631
        %v1343 = vpop.f32.mrf.mxu0
        %v1344 = vadd.f32 %v1008, %v1343
        %v1345 = vpop.f32.mrf.mxu0
        %v1346 = vadd.f32 %v1010, %v1345
        %1347 = vmatmul.bf16.gmra.mxu0 %v633
        %v1348 = vpop.f32.mrf.mxu0
        %v1349 = vadd.f32 %v1013, %v1348
        %v1350 = vpop.f32.mrf.mxu0
        %v1351 = vadd.f32 %v1015, %v1350
        %1352 = vmatmul.bf16.gmra.mxu0 %v635
        %v1353 = vpop.f32.mrf.mxu0
        %v1354 = vadd.f32 %v1018, %v1353
        %v1355 = vpop.f32.mrf.mxu0
        %v1356 = vadd.f32 %v1020, %v1355
        %1357 = vmatmul.bf16.gmra.mxu0 %v637
        %v1358 = vpop.f32.mrf.mxu0
        %v1359 = vadd.f32 %v1023, %v1358
        %v1360 = vpop.f32.mrf.mxu0
        %v1361 = vadd.f32 %v1025, %v1360
        %1362 = vmatmul.bf16.gmra.mxu0 %v639
        %v1363 = vpop.f32.mrf.mxu0
        %v1364 = vadd.f32 %v1028, %v1363
        %v1365 = vpop.f32.mrf.mxu0
        %v1366 = vadd.f32 %v1030, %v1365
        %1367 = vmatmul.bf16.gmra.mxu0 %v641
        %v1368 = vpop.f32.mrf.mxu0
        %v1369 = vadd.f32 %v1033, %v1368
        %v1370 = vpop.f32.mrf.mxu0
        %v1371 = vadd.f32 %v1035, %v1370
        %1372 = vmatmul.bf16.gmra.mxu0 %v643
        %v1373 = vpop.f32.mrf.mxu0
        %v1374 = vadd.f32 %v1038, %v1373
        %v1375 = vpop.f32.mrf.mxu0
        %v1376 = vadd.f32 %v1040, %v1375
        %1377 = vmatmul.bf16.gmra.mxu0 %v645
        %v1378 = vpop.f32.mrf.mxu0
        %v1379 = vadd.f32 %v1043, %v1378
        %v1380 = vpop.f32.mrf.mxu0
        %v1381 = vadd.f32 %v1045, %v1380
        %1382 = vmatmul.bf16.gmra.mxu0 %v647
        %v1383 = vpop.f32.mrf.mxu0
        %v1384 = vadd.f32 %v1048, %v1383
        %v1385 = vpop.f32.mrf.mxu0
        %v1386 = vadd.f32 %v1050, %v1385
        %1387 = vmatmul.bf16.gmra.mxu0 %v649
        %v1388 = vpop.f32.mrf.mxu0
        %v1389 = vadd.f32 %v1053, %v1388
        %v1390 = vpop.f32.mrf.mxu0
        %v1391 = vadd.f32 %v1055, %v1390
        %1392 = vmatmul.bf16.gmra.mxu0 %v651
        %v1393 = vpop.f32.mrf.mxu0
        %v1394 = vadd.f32 %v1058, %v1393
        %v1395 = vpop.f32.mrf.mxu0
        %v1396 = vadd.f32 %v1060, %v1395
        %1397 = vmatmul.bf16.gmra.mxu0 %v653
        %v1398 = vpop.f32.mrf.mxu0
        %v1399 = vadd.f32 %v1063, %v1398
        %v1400 = vpop.f32.mrf.mxu0
        %v1401 = vadd.f32 %v1065, %v1400
        %1402 = vmatmul.bf16.gmra.mxu0 %v655
        %v1403 = vpop.f32.mrf.mxu0
        %v1404 = vadd.f32 %v1068, %v1403
        %v1405 = vpop.f32.mrf.mxu0
        %v1406 = vadd.f32 %v1070, %v1405
        %1407 = vmatmul.bf16.gmra.mxu0 %v657
        %v1408 = vpop.f32.mrf.mxu0
        %v1409 = vadd.f32 %v1073, %v1408
        %v1410 = vpop.f32.mrf.mxu0
        %v1411 = vadd.f32 %v1075, %v1410
        %1412 = vmatmul.bf16.gmra.mxu0 %v659
        %v1413 = vpop.f32.mrf.mxu0
        %v1414 = vadd.f32 %v1078, %v1413
        %v1415 = vpop.f32.mrf.mxu0
        %v1416 = vadd.f32 %v1080, %v1415
        %1417 = vmatmul.bf16.gmra.mxu0 %v661
        %v1418 = vpop.f32.mrf.mxu0
        %v1419 = vadd.f32 %v1083, %v1418
        %v1420 = vpop.f32.mrf.mxu0
        %v1421 = vadd.f32 %v1085, %v1420
        %1422 = vmatmul.bf16.gmra.mxu0 %v663
        %v1423 = vpop.f32.mrf.mxu0
        %v1424 = vadd.f32 %v1088, %v1423
        %v1425 = vpop.f32.mrf.mxu0
        %v1426 = vadd.f32 %v1090, %v1425
        %1427 = vmatmul.bf16.gmra.mxu0 %v665
        %v1428 = vpop.f32.mrf.mxu0
        %v1429 = vadd.f32 %v1093, %v1428
        %v1430 = vpop.f32.mrf.mxu0
        %v1431 = vadd.f32 %v1095, %v1430
        %1432 = vmatmul.bf16.gmra.mxu0 %v667
        %v1433 = vpop.f32.mrf.mxu0
        %v1434 = vadd.f32 %v1098, %v1433
        %v1435 = vpop.f32.mrf.mxu0
        %v1436 = vadd.f32 %v1100, %v1435
        %1437 = vmatmul.bf16.gmra.mxu0 %v669
        %v1438 = vpop.f32.mrf.mxu0
        %v1439 = vadd.f32 %v1103, %v1438
        %v1440 = vpop.f32.mrf.mxu0
        %v1441 = vadd.f32 %v1105, %v1440
        %1442 = vmatmul.bf16.gmra.mxu0 %v671
        %v1443 = vpop.f32.mrf.mxu0
        %v1444 = vadd.f32 %v1108, %v1443
        %v1445 = vpop.f32.mrf.mxu0
        %v1446 = vadd.f32 %v1110, %v1445
        %1447 = vmatmul.bf16.gmra.mxu0 %v673
        %v1448 = vpop.f32.mrf.mxu0
        %v1449 = vadd.f32 %v1113, %v1448
        %v1450 = vpop.f32.mrf.mxu0
        %v1451 = vadd.f32 %v1115, %v1450
        %1452 = vmatmul.bf16.gmra.mxu0 %v675
        %v1453 = vpop.f32.mrf.mxu0
        %v1454 = vadd.f32 %v1118, %v1453
        %v1455 = vpop.f32.mrf.mxu0
        %v1456 = vadd.f32 %v1120, %v1455
        %1457 = vmatmul.bf16.gmra.mxu0 %v677
        %v1458 = vpop.f32.mrf.mxu0
        %v1459 = vadd.f32 %v1123, %v1458
        %v1460 = vpop.f32.mrf.mxu0
        %v1461 = vadd.f32 %v1125, %v1460
        %1462 = vmatmul.bf16.gmra.mxu0 %v679
        %v1463 = vpop.f32.mrf.mxu0
        %v1464 = vadd.f32 %v1128, %v1463
        %v1465 = vpop.f32.mrf.mxu0
        %v1466 = vadd.f32 %v1130, %v1465
        %1467 = vmatmul.bf16.gmra.mxu0 %v681
        %v1468 = vpop.f32.mrf.mxu0
        %v1469 = vadd.f32 %v1133, %v1468
        %v1470 = vpop.f32.mrf.mxu0
        %v1471 = vadd.f32 %v1135, %v1470
        %1472 = vmatmul.bf16.gmra.mxu0 %v683
        %v1473 = vpop.f32.mrf.mxu0
        %v1474 = vadd.f32 %v1138, %v1473
        %v1475 = vpop.f32.mrf.mxu0
        %v1476 = vadd.f32 %v1140, %v1475
        %1477 = vmatmul.bf16.gmra.mxu0 %v685
        %v1478 = vpop.f32.mrf.mxu0
        %v1479 = vadd.f32 %v1143, %v1478
        %v1480 = vpop.f32.mrf.mxu0
        %v1481 = vadd.f32 %v1145, %v1480
        %1482 = vmatmul.bf16.gmra.mxu0 %v687
        %v1483 = vpop.f32.mrf.mxu0
        %v1484 = vadd.f32 %v1148, %v1483
        %v1485 = vpop.f32.mrf.mxu0
        %v1486 = vadd.f32 %v1150, %v1485
        %1487 = vdwg.mxu0
        %1488 = vmatpush.bf16.msra.mxu0 0
        %1489 = vmatpush.bf16.msra.mxu0 0
        %1490 = vmatpush.bf16.msra.mxu0 0
        %1491 = vmatpush.bf16.msra.mxu0 0
        %1492 = vmatpush.bf16.msra.mxu0 0
        %1493 = vmatpush.bf16.msra.mxu0 %v1317
        %1494 = vmatpush.bf16.msra.mxu0 %v1203
        %1495 = vmatpush.bf16.msra.mxu0 %v1202
        %1496 = vmatmul.bf16.gmra.mxu0 %v1217
        %v1497 = vpop.f32.mrf.mxu0
        %v1498 = vadd.f32 %v1329, %v1497
        %v1499 = vpop.f32.mrf.mxu0
        %v1500 = vadd.f32 %v1331, %v1499
        %1501 = vmatmul.bf16.gmra.mxu0 %v1220
        %v1502 = vpop.f32.mrf.mxu0
        %v1503 = vadd.f32 %v1334, %v1502
        %v1504 = vpop.f32.mrf.mxu0
        %v1505 = vadd.f32 %v1336, %v1504
        %1506 = vmatmul.bf16.gmra.mxu0 %v1223
        %v1507 = vpop.f32.mrf.mxu0
        %v1508 = vadd.f32 %v1339, %v1507
        %v1509 = vpop.f32.mrf.mxu0
        %v1510 = vadd.f32 %v1341, %v1509
        %1511 = vmatmul.bf16.gmra.mxu0 %v1226
        %v1512 = vpop.f32.mrf.mxu0
        %v1513 = vadd.f32 %v1344, %v1512
        %v1514 = vpop.f32.mrf.mxu0
        %v1515 = vadd.f32 %v1346, %v1514
        %1516 = vmatmul.bf16.gmra.mxu0 %v1229
        %v1517 = vpop.f32.mrf.mxu0
        %v1518 = vadd.f32 %v1349, %v1517
        %v1519 = vpop.f32.mrf.mxu0
        %v1520 = vadd.f32 %v1351, %v1519
        %1521 = vmatmul.bf16.gmra.mxu0 %v1232
        %v1522 = vpop.f32.mrf.mxu0
        %v1523 = vadd.f32 %v1354, %v1522
        %v1524 = vpop.f32.mrf.mxu0
        %v1525 = vadd.f32 %v1356, %v1524
        %1526 = vmatmul.bf16.gmra.mxu0 %v1235
        %v1527 = vpop.f32.mrf.mxu0
        %v1528 = vadd.f32 %v1359, %v1527
        %v1529 = vpop.f32.mrf.mxu0
        %v1530 = vadd.f32 %v1361, %v1529
        %1531 = vmatmul.bf16.gmra.mxu0 %v1238
        %v1532 = vpop.f32.mrf.mxu0
        %v1533 = vadd.f32 %v1364, %v1532
        %v1534 = vpop.f32.mrf.mxu0
        %v1535 = vadd.f32 %v1366, %v1534
        %1536 = vmatmul.bf16.gmra.mxu0 %v1241
        %v1537 = vpop.f32.mrf.mxu0
        %v1538 = vadd.f32 %v1369, %v1537
        %v1539 = vpop.f32.mrf.mxu0
        %v1540 = vadd.f32 %v1371, %v1539
        %1541 = vmatmul.bf16.gmra.mxu0 %v1244
        %v1542 = vpop.f32.mrf.mxu0
        %v1543 = vadd.f32 %v1374, %v1542
        %v1544 = vpop.f32.mrf.mxu0
        %v1545 = vadd.f32 %v1376, %v1544
        %1546 = vmatmul.bf16.gmra.mxu0 %v1247
        %v1547 = vpop.f32.mrf.mxu0
        %v1548 = vadd.f32 %v1379, %v1547
        %v1549 = vpop.f32.mrf.mxu0
        %v1550 = vadd.f32 %v1381, %v1549
        %1551 = vmatmul.bf16.gmra.mxu0 %v1250
        %v1552 = vpop.f32.mrf.mxu0
        %v1553 = vadd.f32 %v1384, %v1552
        %v1554 = vpop.f32.mrf.mxu0
        %v1555 = vadd.f32 %v1386, %v1554
        %1556 = vmatmul.bf16.gmra.mxu0 %v1253
        %v1557 = vpop.f32.mrf.mxu0
        %v1558 = vadd.f32 %v1389, %v1557
        %v1559 = vpop.f32.mrf.mxu0
        %v1560 = vadd.f32 %v1391, %v1559
        %1561 = vmatmul.bf16.gmra.mxu0 %v1256
        %v1562 = vpop.f32.mrf.mxu0
        %v1563 = vadd.f32 %v1394, %v1562
        %v1564 = vpop.f32.mrf.mxu0
        %v1565 = vadd.f32 %v1396, %v1564
        %1566 = vmatmul.bf16.gmra.mxu0 %v1259
        %v1567 = vpop.f32.mrf.mxu0
        %v1568 = vadd.f32 %v1399, %v1567
        %v1569 = vpop.f32.mrf.mxu0
        %v1570 = vadd.f32 %v1401, %v1569
        %1571 = vmatmul.bf16.gmra.mxu0 %v1262
        %v1572 = vpop.f32.mrf.mxu0
        %v1573 = vadd.f32 %v1404, %v1572
        %v1574 = vpop.f32.mrf.mxu0
        %v1575 = vadd.f32 %v1406, %v1574
        %1576 = vmatmul.bf16.gmra.mxu0 %v1265
        %v1577 = vpop.f32.mrf.mxu0
        %v1578 = vadd.f32 %v1409, %v1577
        %v1579 = vpop.f32.mrf.mxu0
        %v1580 = vadd.f32 %v1411, %v1579
        %1581 = vmatmul.bf16.gmra.mxu0 %v1268
        %v1582 = vpop.f32.mrf.mxu0
        %v1583 = vadd.f32 %v1414, %v1582
        %v1584 = vpop.f32.mrf.mxu0
        %v1585 = vadd.f32 %v1416, %v1584
        %1586 = vmatmul.bf16.gmra.mxu0 %v1271
        %v1587 = vpop.f32.mrf.mxu0
        %v1588 = vadd.f32 %v1419, %v1587
        %v1589 = vpop.f32.mrf.mxu0
        %v1590 = vadd.f32 %v1421, %v1589
        %1591 = vmatmul.bf16.gmra.mxu0 %v1274
        %v1592 = vpop.f32.mrf.mxu0
        %v1593 = vadd.f32 %v1424, %v1592
        %v1594 = vpop.f32.mrf.mxu0
        %v1595 = vadd.f32 %v1426, %v1594
        %1596 = vmatmul.bf16.gmra.mxu0 %v1277
        %v1597 = vpop.f32.mrf.mxu0
        %v1598 = vadd.f32 %v1429, %v1597
        %v1599 = vpop.f32.mrf.mxu0
        %v1600 = vadd.f32 %v1431, %v1599
        %1601 = vmatmul.bf16.gmra.mxu0 %v1280
        %v1602 = vpop.f32.mrf.mxu0
        %v1603 = vadd.f32 %v1434, %v1602
        %v1604 = vpop.f32.mrf.mxu0
        %v1605 = vadd.f32 %v1436, %v1604
        %1606 = vmatmul.bf16.gmra.mxu0 %v1283
        %v1607 = vpop.f32.mrf.mxu0
        %v1608 = vadd.f32 %v1439, %v1607
        %v1609 = vpop.f32.mrf.mxu0
        %v1610 = vadd.f32 %v1441, %v1609
        %1611 = vmatmul.bf16.gmra.mxu0 %v1286
        %v1612 = vpop.f32.mrf.mxu0
        %v1613 = vadd.f32 %v1444, %v1612
        %v1614 = vpop.f32.mrf.mxu0
        %v1615 = vadd.f32 %v1446, %v1614
        %1616 = vmatmul.bf16.gmra.mxu0 %v1289
        %v1617 = vpop.f32.mrf.mxu0
        %v1618 = vadd.f32 %v1449, %v1617
        %v1619 = vpop.f32.mrf.mxu0
        %v1620 = vadd.f32 %v1451, %v1619
        %1621 = vmatmul.bf16.gmra.mxu0 %v1292
        %v1622 = vpop.f32.mrf.mxu0
        %v1623 = vadd.f32 %v1454, %v1622
        %v1624 = vpop.f32.mrf.mxu0
        %v1625 = vadd.f32 %v1456, %v1624
        %1626 = vmatmul.bf16.gmra.mxu0 %v1295
        %v1627 = vpop.f32.mrf.mxu0
        %v1628 = vadd.f32 %v1459, %v1627
        %v1629 = vpop.f32.mrf.mxu0
        %v1630 = vadd.f32 %v1461, %v1629
        %1631 = vmatmul.bf16.gmra.mxu0 %v1298
        %v1632 = vpop.f32.mrf.mxu0
        %v1633 = vadd.f32 %v1464, %v1632
        %v1634 = vpop.f32.mrf.mxu0
        %v1635 = vadd.f32 %v1466, %v1634
        %1636 = vmatmul.bf16.gmra.mxu0 %v1301
        %v1637 = vpop.f32.mrf.mxu0
        %v1638 = vadd.f32 %v1469, %v1637
        %v1639 = vpop.f32.mrf.mxu0
        %v1640 = vadd.f32 %v1471, %v1639
        %1641 = vmatmul.bf16.gmra.mxu0 %v1304
        %v1642 = vpop.f32.mrf.mxu0
        %v1643 = vadd.f32 %v1474, %v1642
        %v1644 = vpop.f32.mrf.mxu0
        %v1645 = vadd.f32 %v1476, %v1644
        %1646 = vmatmul.bf16.gmra.mxu0 %v1307
        %v1647 = vpop.f32.mrf.mxu0
        %v1648 = vadd.f32 %v1479, %v1647
        %v1649 = vpop.f32.mrf.mxu0
        %v1650 = vadd.f32 %v1481, %v1649
        %1651 = vmatmul.bf16.gmra.mxu0 %v1310
        %v1652 = vpop.f32.mrf.mxu0
        %v1653 = vadd.f32 %v1484, %v1652
        %v1654 = vpop.f32.mrf.mxu0
        %v1655 = vadd.f32 %v1486, %v1654
        %1656 = vdwg.mxu0
        %v1657 = vld [vmem:[%s5] sm:$0x1]
        %v1659 = vperm.slane %v1657, 0
        %v1661 = vadd.f32 %v1498, %v1659
        %v1662 = vadd.f32 %v1500, %v1659
        %v1663 = vadd.f32 %v1503, %v1659
        %v1664 = vadd.f32 %v1505, %v1659
        %v1665 = vadd.f32 %v1508, %v1659
        %v1666 = vadd.f32 %v1510, %v1659
        %v1667 = vadd.f32 %v1513, %v1659
        %v1668 = vadd.f32 %v1515, %v1659
        %v1669 = vadd.f32 %v1518, %v1659
        %v1670 = vadd.f32 %v1520, %v1659
        %v1671 = vadd.f32 %v1523, %v1659
        %v1672 = vadd.f32 %v1525, %v1659
        %v1673 = vadd.f32 %v1528, %v1659
        %v1674 = vadd.f32 %v1530, %v1659
        %v1675 = vadd.f32 %v1533, %v1659
        %v1676 = vadd.f32 %v1535, %v1659
        %v1677 = vadd.f32 %v1538, %v1659
        %v1678 = vadd.f32 %v1540, %v1659
        %v1679 = vadd.f32 %v1543, %v1659
        %v1680 = vadd.f32 %v1545, %v1659
        %v1681 = vadd.f32 %v1548, %v1659
        %v1682 = vadd.f32 %v1550, %v1659
        %v1683 = vadd.f32 %v1553, %v1659
        %v1684 = vadd.f32 %v1555, %v1659
        %v1685 = vadd.f32 %v1558, %v1659
        %v1686 = vadd.f32 %v1560, %v1659
        %v1687 = vadd.f32 %v1563, %v1659
        %v1688 = vadd.f32 %v1565, %v1659
        %v1689 = vadd.f32 %v1568, %v1659
        %v1690 = vadd.f32 %v1570, %v1659
        %v1691 = vadd.f32 %v1573, %v1659
        %v1692 = vadd.f32 %v1575, %v1659
        %v1693 = vadd.f32 %v1578, %v1659
        %v1694 = vadd.f32 %v1580, %v1659
        %v1695 = vadd.f32 %v1583, %v1659
        %v1696 = vadd.f32 %v1585, %v1659
        %v1697 = vadd.f32 %v1588, %v1659
        %v1698 = vadd.f32 %v1590, %v1659
        %v1699 = vadd.f32 %v1593, %v1659
        %v1700 = vadd.f32 %v1595, %v1659
        %v1701 = vadd.f32 %v1598, %v1659
        %v1702 = vadd.f32 %v1600, %v1659
        %v1703 = vadd.f32 %v1603, %v1659
        %v1704 = vadd.f32 %v1605, %v1659
        %v1705 = vadd.f32 %v1608, %v1659
        %v1706 = vadd.f32 %v1610, %v1659
        %v1707 = vadd.f32 %v1613, %v1659
        %v1708 = vadd.f32 %v1615, %v1659
        %v1709 = vadd.f32 %v1618, %v1659
        %v1710 = vadd.f32 %v1620, %v1659
        %v1711 = vadd.f32 %v1623, %v1659
        %v1712 = vadd.f32 %v1625, %v1659
        %v1713 = vadd.f32 %v1628, %v1659
        %v1714 = vadd.f32 %v1630, %v1659
        %v1715 = vadd.f32 %v1633, %v1659
        %v1716 = vadd.f32 %v1635, %v1659
        %v1717 = vadd.f32 %v1638, %v1659
        %v1718 = vadd.f32 %v1640, %v1659
        %v1719 = vadd.f32 %v1643, %v1659
        %v1720 = vadd.f32 %v1645, %v1659
        %v1721 = vadd.f32 %v1648, %v1659
        %v1722 = vadd.f32 %v1650, %v1659
        %v1723 = vadd.f32 %v1653, %v1659
        %v1724 = vadd.f32 %v1655, %v1659
        %v1725 = vsub.f32 0.0, %v1661
        %v1726 = vsub.f32 0.0, %v1662
        %v1727 = vsub.f32 0.0, %v1663
        %v1728 = vsub.f32 0.0, %v1664
        %v1729 = vsub.f32 0.0, %v1665
        %v1730 = vsub.f32 0.0, %v1666
        %v1731 = vsub.f32 0.0, %v1667
        %v1732 = vsub.f32 0.0, %v1668
        %v1733 = vsub.f32 0.0, %v1669
        %v1734 = vsub.f32 0.0, %v1670
        %v1735 = vsub.f32 0.0, %v1671
        %v1736 = vsub.f32 0.0, %v1672
        %v1737 = vsub.f32 0.0, %v1673
        %v1738 = vsub.f32 0.0, %v1674
        %v1739 = vsub.f32 0.0, %v1675
        %v1740 = vsub.f32 0.0, %v1676
        %v1741 = vsub.f32 0.0, %v1677
        %v1742 = vsub.f32 0.0, %v1678
        %v1743 = vsub.f32 0.0, %v1679
        %v1744 = vsub.f32 0.0, %v1680
        %v1745 = vsub.f32 0.0, %v1681
        %v1746 = vsub.f32 0.0, %v1682
        %v1747 = vsub.f32 0.0, %v1683
        %v1748 = vsub.f32 0.0, %v1684
        %v1749 = vsub.f32 0.0, %v1685
        %v1750 = vsub.f32 0.0, %v1686
        %v1751 = vsub.f32 0.0, %v1687
        %v1752 = vsub.f32 0.0, %v1688
        %v1753 = vsub.f32 0.0, %v1689
        %v1754 = vsub.f32 0.0, %v1690
        %v1755 = vsub.f32 0.0, %v1691
        %v1756 = vsub.f32 0.0, %v1692
        %v1757 = vsub.f32 0.0, %v1693
        %v1758 = vsub.f32 0.0, %v1694
        %v1759 = vsub.f32 0.0, %v1695
        %v1760 = vsub.f32 0.0, %v1696
        %v1761 = vsub.f32 0.0, %v1697
        %v1762 = vsub.f32 0.0, %v1698
        %v1763 = vsub.f32 0.0, %v1699
        %v1764 = vsub.f32 0.0, %v1700
        %v1765 = vsub.f32 0.0, %v1701
        %v1766 = vsub.f32 0.0, %v1702
        %v1767 = vsub.f32 0.0, %v1703
        %v1768 = vsub.f32 0.0, %v1704
        %v1769 = vsub.f32 0.0, %v1705
        %v1770 = vsub.f32 0.0, %v1706
        %v1771 = vsub.f32 0.0, %v1707
        %v1772 = vsub.f32 0.0, %v1708
        %v1773 = vsub.f32 0.0, %v1709
        %v1774 = vsub.f32 0.0, %v1710
        %v1775 = vsub.f32 0.0, %v1711
        %v1776 = vsub.f32 0.0, %v1712
        %v1777 = vsub.f32 0.0, %v1713
        %v1778 = vsub.f32 0.0, %v1714
        %v1779 = vsub.f32 0.0, %v1715
        %v1780 = vsub.f32 0.0, %v1716
        %v1781 = vsub.f32 0.0, %v1717
        %v1782 = vsub.f32 0.0, %v1718
        %v1783 = vsub.f32 0.0, %v1719
        %v1784 = vsub.f32 0.0, %v1720
        %v1785 = vsub.f32 0.0, %v1721
        %v1786 = vsub.f32 0.0, %v1722
        %v1787 = vsub.f32 0.0, %v1723
        %v1788 = vsub.f32 0.0, %v1724
        %v1789 = vmul.f32 %v1725, 1.442695
        %v1790 = vpow.pop %v1789
        %v1791 = vmul.f32 %v1726, 1.442695
        %v1792 = vpow.pop %v1791
        %v1793 = vmul.f32 %v1727, 1.442695
        %v1794 = vpow.pop %v1793
        %v1795 = vmul.f32 %v1728, 1.442695
        %v1796 = vpow.pop %v1795
        %v1797 = vmul.f32 %v1729, 1.442695
        %v1798 = vpow.pop %v1797
        %v1799 = vmul.f32 %v1730, 1.442695
        %v1800 = vpow.pop %v1799
        %v1801 = vmul.f32 %v1731, 1.442695
        %v1802 = vpow.pop %v1801
        %v1803 = vmul.f32 %v1732, 1.442695
        %v1804 = vpow.pop %v1803
        %v1805 = vmul.f32 %v1733, 1.442695
        %v1806 = vpow.pop %v1805
        %v1807 = vmul.f32 %v1734, 1.442695
        %v1808 = vpow.pop %v1807
        %v1809 = vmul.f32 %v1735, 1.442695
        %v1810 = vpow.pop %v1809
        %v1811 = vmul.f32 %v1736, 1.442695
        %v1812 = vpow.pop %v1811
        %v1813 = vmul.f32 %v1737, 1.442695
        %v1814 = vpow.pop %v1813
        %v1815 = vmul.f32 %v1738, 1.442695
        %v1816 = vpow.pop %v1815
        %v1817 = vmul.f32 %v1739, 1.442695
        %v1818 = vpow.pop %v1817
        %v1819 = vmul.f32 %v1740, 1.442695
        %v1820 = vpow.pop %v1819
        %v1821 = vmul.f32 %v1741, 1.442695
        %v1822 = vpow.pop %v1821
        %v1823 = vmul.f32 %v1742, 1.442695
        %v1824 = vpow.pop %v1823
        %v1825 = vmul.f32 %v1743, 1.442695
        %v1826 = vpow.pop %v1825
        %v1827 = vmul.f32 %v1744, 1.442695
        %v1828 = vpow.pop %v1827
        %v1829 = vmul.f32 %v1745, 1.442695
        %v1830 = vpow.pop %v1829
        %v1831 = vmul.f32 %v1746, 1.442695
        %v1832 = vpow.pop %v1831
        %v1833 = vmul.f32 %v1747, 1.442695
        %v1834 = vpow.pop %v1833
        %v1835 = vmul.f32 %v1748, 1.442695
        %v1836 = vpow.pop %v1835
        %v1837 = vmul.f32 %v1749, 1.442695
        %v1838 = vpow.pop %v1837
        %v1839 = vmul.f32 %v1750, 1.442695
        %v1840 = vpow.pop %v1839
        %v1841 = vmul.f32 %v1751, 1.442695
        %v1842 = vpow.pop %v1841
        %v1843 = vmul.f32 %v1752, 1.442695
        %v1844 = vpow.pop %v1843
        %v1845 = vmul.f32 %v1753, 1.442695
        %v1846 = vpow.pop %v1845
        %v1847 = vmul.f32 %v1754, 1.442695
        %v1848 = vpow.pop %v1847
        %v1849 = vmul.f32 %v1755, 1.442695
        %v1850 = vpow.pop %v1849
        %v1851 = vmul.f32 %v1756, 1.442695
        %v1852 = vpow.pop %v1851
        %v1853 = vmul.f32 %v1757, 1.442695
        %v1854 = vpow.pop %v1853
        %v1855 = vmul.f32 %v1758, 1.442695
        %v1856 = vpow.pop %v1855
        %v1857 = vmul.f32 %v1759, 1.442695
        %v1858 = vpow.pop %v1857
        %v1859 = vmul.f32 %v1760, 1.442695
        %v1860 = vpow.pop %v1859
        %v1861 = vmul.f32 %v1761, 1.442695
        %v1862 = vpow.pop %v1861
        %v1863 = vmul.f32 %v1762, 1.442695
        %v1864 = vpow.pop %v1863
        %v1865 = vmul.f32 %v1763, 1.442695
        %v1866 = vpow.pop %v1865
        %v1867 = vmul.f32 %v1764, 1.442695
        %v1868 = vpow.pop %v1867
        %v1869 = vmul.f32 %v1765, 1.442695
        %v1870 = vpow.pop %v1869
        %v1871 = vmul.f32 %v1766, 1.442695
        %v1872 = vpow.pop %v1871
        %v1873 = vmul.f32 %v1767, 1.442695
        %v1874 = vpow.pop %v1873
        %v1875 = vmul.f32 %v1768, 1.442695
        %v1876 = vpow.pop %v1875
        %v1877 = vmul.f32 %v1769, 1.442695
        %v1878 = vpow.pop %v1877
        %v1879 = vmul.f32 %v1770, 1.442695
        %v1880 = vpow.pop %v1879
        %v1881 = vmul.f32 %v1771, 1.442695
        %v1882 = vpow.pop %v1881
        %v1883 = vmul.f32 %v1772, 1.442695
        %v1884 = vpow.pop %v1883
        %v1885 = vmul.f32 %v1773, 1.442695
        %v1886 = vpow.pop %v1885
        %v1887 = vmul.f32 %v1774, 1.442695
        %v1888 = vpow.pop %v1887
        %v1889 = vmul.f32 %v1775, 1.442695
        %v1890 = vpow.pop %v1889
        %v1891 = vmul.f32 %v1776, 1.442695
        %v1892 = vpow.pop %v1891
        %v1893 = vmul.f32 %v1777, 1.442695
        %v1894 = vpow.pop %v1893
        %v1895 = vmul.f32 %v1778, 1.442695
        %v1896 = vpow.pop %v1895
        %v1897 = vmul.f32 %v1779, 1.442695
        %v1898 = vpow.pop %v1897
        %v1899 = vmul.f32 %v1780, 1.442695
        %v1900 = vpow.pop %v1899
        %v1901 = vmul.f32 %v1781, 1.442695
        %v1902 = vpow.pop %v1901
        %v1903 = vmul.f32 %v1782, 1.442695
        %v1904 = vpow.pop %v1903
        %v1905 = vmul.f32 %v1783, 1.442695
        %v1906 = vpow.pop %v1905
        %v1907 = vmul.f32 %v1784, 1.442695
        %v1908 = vpow.pop %v1907
        %v1909 = vmul.f32 %v1785, 1.442695
        %v1910 = vpow.pop %v1909
        %v1911 = vmul.f32 %v1786, 1.442695
        %v1912 = vpow.pop %v1911
        %v1913 = vmul.f32 %v1787, 1.442695
        %v1914 = vpow.pop %v1913
        %v1915 = vmul.f32 %v1788, 1.442695
        %v1916 = vpow.pop %v1915
        %v1917 = vadd.f32 %v1790, 1.0
        %v1918 = vadd.f32 %v1792, 1.0
        %v1919 = vadd.f32 %v1794, 1.0
        %v1920 = vadd.f32 %v1796, 1.0
        %v1921 = vadd.f32 %v1798, 1.0
        %v1922 = vadd.f32 %v1800, 1.0
        %v1923 = vadd.f32 %v1802, 1.0
        %v1924 = vadd.f32 %v1804, 1.0
        %v1925 = vadd.f32 %v1806, 1.0
        %v1926 = vadd.f32 %v1808, 1.0
        %v1927 = vadd.f32 %v1810, 1.0
        %v1928 = vadd.f32 %v1812, 1.0
        %v1929 = vadd.f32 %v1814, 1.0
        %v1930 = vadd.f32 %v1816, 1.0
        %v1931 = vadd.f32 %v1818, 1.0
        %v1932 = vadd.f32 %v1820, 1.0
        %v1933 = vadd.f32 %v1822, 1.0
        %v1934 = vadd.f32 %v1824, 1.0
        %v1935 = vadd.f32 %v1826, 1.0
        %v1936 = vadd.f32 %v1828, 1.0
        %v1937 = vadd.f32 %v1830, 1.0
        %v1938 = vadd.f32 %v1832, 1.0
        %v1939 = vadd.f32 %v1834, 1.0
        %v1940 = vadd.f32 %v1836, 1.0
        %v1941 = vadd.f32 %v1838, 1.0
        %v1942 = vadd.f32 %v1840, 1.0
        %v1943 = vadd.f32 %v1842, 1.0
        %v1944 = vadd.f32 %v1844, 1.0
        %v1945 = vadd.f32 %v1846, 1.0
        %v1946 = vadd.f32 %v1848, 1.0
        %v1947 = vadd.f32 %v1850, 1.0
        %v1948 = vadd.f32 %v1852, 1.0
        %v1949 = vadd.f32 %v1854, 1.0
        %v1950 = vadd.f32 %v1856, 1.0
        %v1951 = vadd.f32 %v1858, 1.0
        %v1952 = vadd.f32 %v1860, 1.0
        %v1953 = vadd.f32 %v1862, 1.0
        %v1954 = vadd.f32 %v1864, 1.0
        %v1955 = vadd.f32 %v1866, 1.0
        %v1956 = vadd.f32 %v1868, 1.0
        %v1957 = vadd.f32 %v1870, 1.0
        %v1958 = vadd.f32 %v1872, 1.0
        %v1959 = vadd.f32 %v1874, 1.0
        %v1960 = vadd.f32 %v1876, 1.0
        %v1961 = vadd.f32 %v1878, 1.0
        %v1962 = vadd.f32 %v1880, 1.0
        %v1963 = vadd.f32 %v1882, 1.0
        %v1964 = vadd.f32 %v1884, 1.0
        %v1965 = vadd.f32 %v1886, 1.0
        %v1966 = vadd.f32 %v1888, 1.0
        %v1967 = vadd.f32 %v1890, 1.0
        %v1968 = vadd.f32 %v1892, 1.0
        %v1969 = vadd.f32 %v1894, 1.0
        %v1970 = vadd.f32 %v1896, 1.0
        %v1971 = vadd.f32 %v1898, 1.0
        %v1972 = vadd.f32 %v1900, 1.0
        %v1973 = vadd.f32 %v1902, 1.0
        %v1974 = vadd.f32 %v1904, 1.0
        %v1975 = vadd.f32 %v1906, 1.0
        %v1976 = vadd.f32 %v1908, 1.0
        %v1977 = vadd.f32 %v1910, 1.0
        %v1978 = vadd.f32 %v1912, 1.0
        %v1979 = vadd.f32 %v1914, 1.0
        %v1980 = vadd.f32 %v1916, 1.0
        %v1981 = vrcp.pop %v1917
        %v1982 = vmul.f32 %v1917, %v1981
        %v1983 = vsub.f32 1.0, %v1982
        %v1984 = vmul.f32 %v1981, %v1983
        %v1985 = vadd.f32 %v1981, %v1984
        %vm1986 = vweird.f32 %v1917
        %vm1987 = vweird.f32 %v1981
        %vm1988 = vmor %vm1986, %vm1987
        %v1989 = vsel %vm1988, %v1981, %v1985
        %v1990 = vand.u32 2147483647, %v1917
        %vm1991 = vcmp.eq.f32.partialorder %v1990, 8.507059e+37
        %v1992 = vand.u32 %v1917, 2147483648
        %v1993 = vor.u32 1.1754944e-38, %v1992
        %v1994 = vsel %vm1991, %v1993, %v1989
        %v1995 = vrcp.pop %v1918
        %v1996 = vmul.f32 %v1918, %v1995
        %v1997 = vsub.f32 1.0, %v1996
        %v1998 = vmul.f32 %v1995, %v1997
        %v1999 = vadd.f32 %v1995, %v1998
        %vm2000 = vweird.f32 %v1918
        %vm2001 = vweird.f32 %v1995
        %vm2002 = vmor %vm2000, %vm2001
        %v2003 = vsel %vm2002, %v1995, %v1999
        %v2004 = vand.u32 2147483647, %v1918
        %vm2005 = vcmp.eq.f32.partialorder %v2004, 8.507059e+37
        %v2006 = vand.u32 %v1918, 2147483648
        %v2007 = vor.u32 1.1754944e-38, %v2006
        %v2008 = vsel %vm2005, %v2007, %v2003
        %v2009 = vrcp.pop %v1919
        %v2010 = vmul.f32 %v1919, %v2009
        %v2011 = vsub.f32 1.0, %v2010
        %v2012 = vmul.f32 %v2009, %v2011
        %v2013 = vadd.f32 %v2009, %v2012
        %vm2014 = vweird.f32 %v1919
        %vm2015 = vweird.f32 %v2009
        %vm2016 = vmor %vm2014, %vm2015
        %v2017 = vsel %vm2016, %v2009, %v2013
        %v2018 = vand.u32 2147483647, %v1919
        %vm2019 = vcmp.eq.f32.partialorder %v2018, 8.507059e+37
        %v2020 = vand.u32 %v1919, 2147483648
        %v2021 = vor.u32 1.1754944e-38, %v2020
        %v2022 = vsel %vm2019, %v2021, %v2017
        %v2023 = vrcp.pop %v1920
        %v2024 = vmul.f32 %v1920, %v2023
        %v2025 = vsub.f32 1.0, %v2024
        %v2026 = vmul.f32 %v2023, %v2025
        %v2027 = vadd.f32 %v2023, %v2026
        %vm2028 = vweird.f32 %v1920
        %vm2029 = vweird.f32 %v2023
        %vm2030 = vmor %vm2028, %vm2029
        %v2031 = vsel %vm2030, %v2023, %v2027
        %v2032 = vand.u32 2147483647, %v1920
        %vm2033 = vcmp.eq.f32.partialorder %v2032, 8.507059e+37
        %v2034 = vand.u32 %v1920, 2147483648
        %v2035 = vor.u32 1.1754944e-38, %v2034
        %v2036 = vsel %vm2033, %v2035, %v2031
        %v2037 = vrcp.pop %v1921
        %v2038 = vmul.f32 %v1921, %v2037
        %v2039 = vsub.f32 1.0, %v2038
        %v2040 = vmul.f32 %v2037, %v2039
        %v2041 = vadd.f32 %v2037, %v2040
        %vm2042 = vweird.f32 %v1921
        %vm2043 = vweird.f32 %v2037
        %vm2044 = vmor %vm2042, %vm2043
        %v2045 = vsel %vm2044, %v2037, %v2041
        %v2046 = vand.u32 2147483647, %v1921
        %vm2047 = vcmp.eq.f32.partialorder %v2046, 8.507059e+37
        %v2048 = vand.u32 %v1921, 2147483648
        %v2049 = vor.u32 1.1754944e-38, %v2048
        %v2050 = vsel %vm2047, %v2049, %v2045
        %v2051 = vrcp.pop %v1922
        %v2052 = vmul.f32 %v1922, %v2051
        %v2053 = vsub.f32 1.0, %v2052
        %v2054 = vmul.f32 %v2051, %v2053
        %v2055 = vadd.f32 %v2051, %v2054
        %vm2056 = vweird.f32 %v1922
        %vm2057 = vweird.f32 %v2051
        %vm2058 = vmor %vm2056, %vm2057
        %v2059 = vsel %vm2058, %v2051, %v2055
        %v2060 = vand.u32 2147483647, %v1922
        %vm2061 = vcmp.eq.f32.partialorder %v2060, 8.507059e+37
        %v2062 = vand.u32 %v1922, 2147483648
        %v2063 = vor.u32 1.1754944e-38, %v2062
        %v2064 = vsel %vm2061, %v2063, %v2059
        %v2065 = vrcp.pop %v1923
        %v2066 = vmul.f32 %v1923, %v2065
        %v2067 = vsub.f32 1.0, %v2066
        %v2068 = vmul.f32 %v2065, %v2067
        %v2069 = vadd.f32 %v2065, %v2068
        %vm2070 = vweird.f32 %v1923
        %vm2071 = vweird.f32 %v2065
        %vm2072 = vmor %vm2070, %vm2071
        %v2073 = vsel %vm2072, %v2065, %v2069
        %v2074 = vand.u32 2147483647, %v1923
        %vm2075 = vcmp.eq.f32.partialorder %v2074, 8.507059e+37
        %v2076 = vand.u32 %v1923, 2147483648
        %v2077 = vor.u32 1.1754944e-38, %v2076
        %v2078 = vsel %vm2075, %v2077, %v2073
        %v2079 = vrcp.pop %v1924
        %v2080 = vmul.f32 %v1924, %v2079
        %v2081 = vsub.f32 1.0, %v2080
        %v2082 = vmul.f32 %v2079, %v2081
        %v2083 = vadd.f32 %v2079, %v2082
        %vm2084 = vweird.f32 %v1924
        %vm2085 = vweird.f32 %v2079
        %vm2086 = vmor %vm2084, %vm2085
        %v2087 = vsel %vm2086, %v2079, %v2083
        %v2088 = vand.u32 2147483647, %v1924
        %vm2089 = vcmp.eq.f32.partialorder %v2088, 8.507059e+37
        %v2090 = vand.u32 %v1924, 2147483648
        %v2091 = vor.u32 1.1754944e-38, %v2090
        %v2092 = vsel %vm2089, %v2091, %v2087
        %v2093 = vrcp.pop %v1925
        %v2094 = vmul.f32 %v1925, %v2093
        %v2095 = vsub.f32 1.0, %v2094
        %v2096 = vmul.f32 %v2093, %v2095
        %v2097 = vadd.f32 %v2093, %v2096
        %vm2098 = vweird.f32 %v1925
        %vm2099 = vweird.f32 %v2093
        %vm2100 = vmor %vm2098, %vm2099
        %v2101 = vsel %vm2100, %v2093, %v2097
        %v2102 = vand.u32 2147483647, %v1925
        %vm2103 = vcmp.eq.f32.partialorder %v2102, 8.507059e+37
        %v2104 = vand.u32 %v1925, 2147483648
        %v2105 = vor.u32 1.1754944e-38, %v2104
        %v2106 = vsel %vm2103, %v2105, %v2101
        %v2107 = vrcp.pop %v1926
        %v2108 = vmul.f32 %v1926, %v2107
        %v2109 = vsub.f32 1.0, %v2108
        %v2110 = vmul.f32 %v2107, %v2109
        %v2111 = vadd.f32 %v2107, %v2110
        %vm2112 = vweird.f32 %v1926
        %vm2113 = vweird.f32 %v2107
        %vm2114 = vmor %vm2112, %vm2113
        %v2115 = vsel %vm2114, %v2107, %v2111
        %v2116 = vand.u32 2147483647, %v1926
        %vm2117 = vcmp.eq.f32.partialorder %v2116, 8.507059e+37
        %v2118 = vand.u32 %v1926, 2147483648
        %v2119 = vor.u32 1.1754944e-38, %v2118
        %v2120 = vsel %vm2117, %v2119, %v2115
        %v2121 = vrcp.pop %v1927
        %v2122 = vmul.f32 %v1927, %v2121
        %v2123 = vsub.f32 1.0, %v2122
        %v2124 = vmul.f32 %v2121, %v2123
        %v2125 = vadd.f32 %v2121, %v2124
        %vm2126 = vweird.f32 %v1927
        %vm2127 = vweird.f32 %v2121
        %vm2128 = vmor %vm2126, %vm2127
        %v2129 = vsel %vm2128, %v2121, %v2125
        %v2130 = vand.u32 2147483647, %v1927
        %vm2131 = vcmp.eq.f32.partialorder %v2130, 8.507059e+37
        %v2132 = vand.u32 %v1927, 2147483648
        %v2133 = vor.u32 1.1754944e-38, %v2132
        %v2134 = vsel %vm2131, %v2133, %v2129
        %v2135 = vrcp.pop %v1928
        %v2136 = vmul.f32 %v1928, %v2135
        %v2137 = vsub.f32 1.0, %v2136
        %v2138 = vmul.f32 %v2135, %v2137
        %v2139 = vadd.f32 %v2135, %v2138
        %vm2140 = vweird.f32 %v1928
        %vm2141 = vweird.f32 %v2135
        %vm2142 = vmor %vm2140, %vm2141
        %v2143 = vsel %vm2142, %v2135, %v2139
        %v2144 = vand.u32 2147483647, %v1928
        %vm2145 = vcmp.eq.f32.partialorder %v2144, 8.507059e+37
        %v2146 = vand.u32 %v1928, 2147483648
        %v2147 = vor.u32 1.1754944e-38, %v2146
        %v2148 = vsel %vm2145, %v2147, %v2143
        %v2149 = vrcp.pop %v1929
        %v2150 = vmul.f32 %v1929, %v2149
        %v2151 = vsub.f32 1.0, %v2150
        %v2152 = vmul.f32 %v2149, %v2151
        %v2153 = vadd.f32 %v2149, %v2152
        %vm2154 = vweird.f32 %v1929
        %vm2155 = vweird.f32 %v2149
        %vm2156 = vmor %vm2154, %vm2155
        %v2157 = vsel %vm2156, %v2149, %v2153
        %v2158 = vand.u32 2147483647, %v1929
        %vm2159 = vcmp.eq.f32.partialorder %v2158, 8.507059e+37
        %v2160 = vand.u32 %v1929, 2147483648
        %v2161 = vor.u32 1.1754944e-38, %v2160
        %v2162 = vsel %vm2159, %v2161, %v2157
        %v2163 = vrcp.pop %v1930
        %v2164 = vmul.f32 %v1930, %v2163
        %v2165 = vsub.f32 1.0, %v2164
        %v2166 = vmul.f32 %v2163, %v2165
        %v2167 = vadd.f32 %v2163, %v2166
        %vm2168 = vweird.f32 %v1930
        %vm2169 = vweird.f32 %v2163
        %vm2170 = vmor %vm2168, %vm2169
        %v2171 = vsel %vm2170, %v2163, %v2167
        %v2172 = vand.u32 2147483647, %v1930
        %vm2173 = vcmp.eq.f32.partialorder %v2172, 8.507059e+37
        %v2174 = vand.u32 %v1930, 2147483648
        %v2175 = vor.u32 1.1754944e-38, %v2174
        %v2176 = vsel %vm2173, %v2175, %v2171
        %v2177 = vrcp.pop %v1931
        %v2178 = vmul.f32 %v1931, %v2177
        %v2179 = vsub.f32 1.0, %v2178
        %v2180 = vmul.f32 %v2177, %v2179
        %v2181 = vadd.f32 %v2177, %v2180
        %vm2182 = vweird.f32 %v1931
        %vm2183 = vweird.f32 %v2177
        %vm2184 = vmor %vm2182, %vm2183
        %v2185 = vsel %vm2184, %v2177, %v2181
        %v2186 = vand.u32 2147483647, %v1931
        %vm2187 = vcmp.eq.f32.partialorder %v2186, 8.507059e+37
        %v2188 = vand.u32 %v1931, 2147483648
        %v2189 = vor.u32 1.1754944e-38, %v2188
        %v2190 = vsel %vm2187, %v2189, %v2185
        %v2191 = vrcp.pop %v1932
        %v2192 = vmul.f32 %v1932, %v2191
        %v2193 = vsub.f32 1.0, %v2192
        %v2194 = vmul.f32 %v2191, %v2193
        %v2195 = vadd.f32 %v2191, %v2194
        %vm2196 = vweird.f32 %v1932
        %vm2197 = vweird.f32 %v2191
        %vm2198 = vmor %vm2196, %vm2197
        %v2199 = vsel %vm2198, %v2191, %v2195
        %v2200 = vand.u32 2147483647, %v1932
        %vm2201 = vcmp.eq.f32.partialorder %v2200, 8.507059e+37
        %v2202 = vand.u32 %v1932, 2147483648
        %v2203 = vor.u32 1.1754944e-38, %v2202
        %v2204 = vsel %vm2201, %v2203, %v2199
        %v2205 = vrcp.pop %v1933
        %v2206 = vmul.f32 %v1933, %v2205
        %v2207 = vsub.f32 1.0, %v2206
        %v2208 = vmul.f32 %v2205, %v2207
        %v2209 = vadd.f32 %v2205, %v2208
        %vm2210 = vweird.f32 %v1933
        %vm2211 = vweird.f32 %v2205
        %vm2212 = vmor %vm2210, %vm2211
        %v2213 = vsel %vm2212, %v2205, %v2209
        %v2214 = vand.u32 2147483647, %v1933
        %vm2215 = vcmp.eq.f32.partialorder %v2214, 8.507059e+37
        %v2216 = vand.u32 %v1933, 2147483648
        %v2217 = vor.u32 1.1754944e-38, %v2216
        %v2218 = vsel %vm2215, %v2217, %v2213
        %v2219 = vrcp.pop %v1934
        %v2220 = vmul.f32 %v1934, %v2219
        %v2221 = vsub.f32 1.0, %v2220
        %v2222 = vmul.f32 %v2219, %v2221
        %v2223 = vadd.f32 %v2219, %v2222
        %vm2224 = vweird.f32 %v1934
        %vm2225 = vweird.f32 %v2219
        %vm2226 = vmor %vm2224, %vm2225
        %v2227 = vsel %vm2226, %v2219, %v2223
        %v2228 = vand.u32 2147483647, %v1934
        %vm2229 = vcmp.eq.f32.partialorder %v2228, 8.507059e+37
        %v2230 = vand.u32 %v1934, 2147483648
        %v2231 = vor.u32 1.1754944e-38, %v2230
        %v2232 = vsel %vm2229, %v2231, %v2227
        %v2233 = vrcp.pop %v1935
        %v2234 = vmul.f32 %v1935, %v2233
        %v2235 = vsub.f32 1.0, %v2234
        %v2236 = vmul.f32 %v2233, %v2235
        %v2237 = vadd.f32 %v2233, %v2236
        %vm2238 = vweird.f32 %v1935
        %vm2239 = vweird.f32 %v2233
        %vm2240 = vmor %vm2238, %vm2239
        %v2241 = vsel %vm2240, %v2233, %v2237
        %v2242 = vand.u32 2147483647, %v1935
        %vm2243 = vcmp.eq.f32.partialorder %v2242, 8.507059e+37
        %v2244 = vand.u32 %v1935, 2147483648
        %v2245 = vor.u32 1.1754944e-38, %v2244
        %v2246 = vsel %vm2243, %v2245, %v2241
        %v2247 = vrcp.pop %v1936
        %v2248 = vmul.f32 %v1936, %v2247
        %v2249 = vsub.f32 1.0, %v2248
        %v2250 = vmul.f32 %v2247, %v2249
        %v2251 = vadd.f32 %v2247, %v2250
        %vm2252 = vweird.f32 %v1936
        %vm2253 = vweird.f32 %v2247
        %vm2254 = vmor %vm2252, %vm2253
        %v2255 = vsel %vm2254, %v2247, %v2251
        %v2256 = vand.u32 2147483647, %v1936
        %vm2257 = vcmp.eq.f32.partialorder %v2256, 8.507059e+37
        %v2258 = vand.u32 %v1936, 2147483648
        %v2259 = vor.u32 1.1754944e-38, %v2258
        %v2260 = vsel %vm2257, %v2259, %v2255
        %v2261 = vrcp.pop %v1937
        %v2262 = vmul.f32 %v1937, %v2261
        %v2263 = vsub.f32 1.0, %v2262
        %v2264 = vmul.f32 %v2261, %v2263
        %v2265 = vadd.f32 %v2261, %v2264
        %vm2266 = vweird.f32 %v1937
        %vm2267 = vweird.f32 %v2261
        %vm2268 = vmor %vm2266, %vm2267
        %v2269 = vsel %vm2268, %v2261, %v2265
        %v2270 = vand.u32 2147483647, %v1937
        %vm2271 = vcmp.eq.f32.partialorder %v2270, 8.507059e+37
        %v2272 = vand.u32 %v1937, 2147483648
        %v2273 = vor.u32 1.1754944e-38, %v2272
        %v2274 = vsel %vm2271, %v2273, %v2269
        %v2275 = vrcp.pop %v1938
        %v2276 = vmul.f32 %v1938, %v2275
        %v2277 = vsub.f32 1.0, %v2276
        %v2278 = vmul.f32 %v2275, %v2277
        %v2279 = vadd.f32 %v2275, %v2278
        %vm2280 = vweird.f32 %v1938
        %vm2281 = vweird.f32 %v2275
        %vm2282 = vmor %vm2280, %vm2281
        %v2283 = vsel %vm2282, %v2275, %v2279
        %v2284 = vand.u32 2147483647, %v1938
        %vm2285 = vcmp.eq.f32.partialorder %v2284, 8.507059e+37
        %v2286 = vand.u32 %v1938, 2147483648
        %v2287 = vor.u32 1.1754944e-38, %v2286
        %v2288 = vsel %vm2285, %v2287, %v2283
        %v2289 = vrcp.pop %v1939
        %v2290 = vmul.f32 %v1939, %v2289
        %v2291 = vsub.f32 1.0, %v2290
        %v2292 = vmul.f32 %v2289, %v2291
        %v2293 = vadd.f32 %v2289, %v2292
        %vm2294 = vweird.f32 %v1939
        %vm2295 = vweird.f32 %v2289
        %vm2296 = vmor %vm2294, %vm2295
        %v2297 = vsel %vm2296, %v2289, %v2293
        %v2298 = vand.u32 2147483647, %v1939
        %vm2299 = vcmp.eq.f32.partialorder %v2298, 8.507059e+37
        %v2300 = vand.u32 %v1939, 2147483648
        %v2301 = vor.u32 1.1754944e-38, %v2300
        %v2302 = vsel %vm2299, %v2301, %v2297
        %v2303 = vrcp.pop %v1940
        %v2304 = vmul.f32 %v1940, %v2303
        %v2305 = vsub.f32 1.0, %v2304
        %v2306 = vmul.f32 %v2303, %v2305
        %v2307 = vadd.f32 %v2303, %v2306
        %vm2308 = vweird.f32 %v1940
        %vm2309 = vweird.f32 %v2303
        %vm2310 = vmor %vm2308, %vm2309
        %v2311 = vsel %vm2310, %v2303, %v2307
        %v2312 = vand.u32 2147483647, %v1940
        %vm2313 = vcmp.eq.f32.partialorder %v2312, 8.507059e+37
        %v2314 = vand.u32 %v1940, 2147483648
        %v2315 = vor.u32 1.1754944e-38, %v2314
        %v2316 = vsel %vm2313, %v2315, %v2311
        %v2317 = vrcp.pop %v1941
        %v2318 = vmul.f32 %v1941, %v2317
        %v2319 = vsub.f32 1.0, %v2318
        %v2320 = vmul.f32 %v2317, %v2319
        %v2321 = vadd.f32 %v2317, %v2320
        %vm2322 = vweird.f32 %v1941
        %vm2323 = vweird.f32 %v2317
        %vm2324 = vmor %vm2322, %vm2323
        %v2325 = vsel %vm2324, %v2317, %v2321
        %v2326 = vand.u32 2147483647, %v1941
        %vm2327 = vcmp.eq.f32.partialorder %v2326, 8.507059e+37
        %v2328 = vand.u32 %v1941, 2147483648
        %v2329 = vor.u32 1.1754944e-38, %v2328
        %v2330 = vsel %vm2327, %v2329, %v2325
        %v2331 = vrcp.pop %v1942
        %v2332 = vmul.f32 %v1942, %v2331
        %v2333 = vsub.f32 1.0, %v2332
        %v2334 = vmul.f32 %v2331, %v2333
        %v2335 = vadd.f32 %v2331, %v2334
        %vm2336 = vweird.f32 %v1942
        %vm2337 = vweird.f32 %v2331
        %vm2338 = vmor %vm2336, %vm2337
        %v2339 = vsel %vm2338, %v2331, %v2335
        %v2340 = vand.u32 2147483647, %v1942
        %vm2341 = vcmp.eq.f32.partialorder %v2340, 8.507059e+37
        %v2342 = vand.u32 %v1942, 2147483648
        %v2343 = vor.u32 1.1754944e-38, %v2342
        %v2344 = vsel %vm2341, %v2343, %v2339
        %v2345 = vrcp.pop %v1943
        %v2346 = vmul.f32 %v1943, %v2345
        %v2347 = vsub.f32 1.0, %v2346
        %v2348 = vmul.f32 %v2345, %v2347
        %v2349 = vadd.f32 %v2345, %v2348
        %vm2350 = vweird.f32 %v1943
        %vm2351 = vweird.f32 %v2345
        %vm2352 = vmor %vm2350, %vm2351
        %v2353 = vsel %vm2352, %v2345, %v2349
        %v2354 = vand.u32 2147483647, %v1943
        %vm2355 = vcmp.eq.f32.partialorder %v2354, 8.507059e+37
        %v2356 = vand.u32 %v1943, 2147483648
        %v2357 = vor.u32 1.1754944e-38, %v2356
        %v2358 = vsel %vm2355, %v2357, %v2353
        %v2359 = vrcp.pop %v1944
        %v2360 = vmul.f32 %v1944, %v2359
        %v2361 = vsub.f32 1.0, %v2360
        %v2362 = vmul.f32 %v2359, %v2361
        %v2363 = vadd.f32 %v2359, %v2362
        %vm2364 = vweird.f32 %v1944
        %vm2365 = vweird.f32 %v2359
        %vm2366 = vmor %vm2364, %vm2365
        %v2367 = vsel %vm2366, %v2359, %v2363
        %v2368 = vand.u32 2147483647, %v1944
        %vm2369 = vcmp.eq.f32.partialorder %v2368, 8.507059e+37
        %v2370 = vand.u32 %v1944, 2147483648
        %v2371 = vor.u32 1.1754944e-38, %v2370
        %v2372 = vsel %vm2369, %v2371, %v2367
        %v2373 = vrcp.pop %v1945
        %v2374 = vmul.f32 %v1945, %v2373
        %v2375 = vsub.f32 1.0, %v2374
        %v2376 = vmul.f32 %v2373, %v2375
        %v2377 = vadd.f32 %v2373, %v2376
        %vm2378 = vweird.f32 %v1945
        %vm2379 = vweird.f32 %v2373
        %vm2380 = vmor %vm2378, %vm2379
        %v2381 = vsel %vm2380, %v2373, %v2377
        %v2382 = vand.u32 2147483647, %v1945
        %vm2383 = vcmp.eq.f32.partialorder %v2382, 8.507059e+37
        %v2384 = vand.u32 %v1945, 2147483648
        %v2385 = vor.u32 1.1754944e-38, %v2384
        %v2386 = vsel %vm2383, %v2385, %v2381
        %v2387 = vrcp.pop %v1946
        %v2388 = vmul.f32 %v1946, %v2387
        %v2389 = vsub.f32 1.0, %v2388
        %v2390 = vmul.f32 %v2387, %v2389
        %v2391 = vadd.f32 %v2387, %v2390
        %vm2392 = vweird.f32 %v1946
        %vm2393 = vweird.f32 %v2387
        %vm2394 = vmor %vm2392, %vm2393
        %v2395 = vsel %vm2394, %v2387, %v2391
        %v2396 = vand.u32 2147483647, %v1946
        %vm2397 = vcmp.eq.f32.partialorder %v2396, 8.507059e+37
        %v2398 = vand.u32 %v1946, 2147483648
        %v2399 = vor.u32 1.1754944e-38, %v2398
        %v2400 = vsel %vm2397, %v2399, %v2395
        %v2401 = vrcp.pop %v1947
        %v2402 = vmul.f32 %v1947, %v2401
        %v2403 = vsub.f32 1.0, %v2402
        %v2404 = vmul.f32 %v2401, %v2403
        %v2405 = vadd.f32 %v2401, %v2404
        %vm2406 = vweird.f32 %v1947
        %vm2407 = vweird.f32 %v2401
        %vm2408 = vmor %vm2406, %vm2407
        %v2409 = vsel %vm2408, %v2401, %v2405
        %v2410 = vand.u32 2147483647, %v1947
        %vm2411 = vcmp.eq.f32.partialorder %v2410, 8.507059e+37
        %v2412 = vand.u32 %v1947, 2147483648
        %v2413 = vor.u32 1.1754944e-38, %v2412
        %v2414 = vsel %vm2411, %v2413, %v2409
        %v2415 = vrcp.pop %v1948
        %v2416 = vmul.f32 %v1948, %v2415
        %v2417 = vsub.f32 1.0, %v2416
        %v2418 = vmul.f32 %v2415, %v2417
        %v2419 = vadd.f32 %v2415, %v2418
        %vm2420 = vweird.f32 %v1948
        %vm2421 = vweird.f32 %v2415
        %vm2422 = vmor %vm2420, %vm2421
        %v2423 = vsel %vm2422, %v2415, %v2419
        %v2424 = vand.u32 2147483647, %v1948
        %vm2425 = vcmp.eq.f32.partialorder %v2424, 8.507059e+37
        %v2426 = vand.u32 %v1948, 2147483648
        %v2427 = vor.u32 1.1754944e-38, %v2426
        %v2428 = vsel %vm2425, %v2427, %v2423
        %v2429 = vrcp.pop %v1949
        %v2430 = vmul.f32 %v1949, %v2429
        %v2431 = vsub.f32 1.0, %v2430
        %v2432 = vmul.f32 %v2429, %v2431
        %v2433 = vadd.f32 %v2429, %v2432
        %vm2434 = vweird.f32 %v1949
        %vm2435 = vweird.f32 %v2429
        %vm2436 = vmor %vm2434, %vm2435
        %v2437 = vsel %vm2436, %v2429, %v2433
        %v2438 = vand.u32 2147483647, %v1949
        %vm2439 = vcmp.eq.f32.partialorder %v2438, 8.507059e+37
        %v2440 = vand.u32 %v1949, 2147483648
        %v2441 = vor.u32 1.1754944e-38, %v2440
        %v2442 = vsel %vm2439, %v2441, %v2437
        %v2443 = vrcp.pop %v1950
        %v2444 = vmul.f32 %v1950, %v2443
        %v2445 = vsub.f32 1.0, %v2444
        %v2446 = vmul.f32 %v2443, %v2445
        %v2447 = vadd.f32 %v2443, %v2446
        %vm2448 = vweird.f32 %v1950
        %vm2449 = vweird.f32 %v2443
        %vm2450 = vmor %vm2448, %vm2449
        %v2451 = vsel %vm2450, %v2443, %v2447
        %v2452 = vand.u32 2147483647, %v1950
        %vm2453 = vcmp.eq.f32.partialorder %v2452, 8.507059e+37
        %v2454 = vand.u32 %v1950, 2147483648
        %v2455 = vor.u32 1.1754944e-38, %v2454
        %v2456 = vsel %vm2453, %v2455, %v2451
        %v2457 = vrcp.pop %v1951
        %v2458 = vmul.f32 %v1951, %v2457
        %v2459 = vsub.f32 1.0, %v2458
        %v2460 = vmul.f32 %v2457, %v2459
        %v2461 = vadd.f32 %v2457, %v2460
        %vm2462 = vweird.f32 %v1951
        %vm2463 = vweird.f32 %v2457
        %vm2464 = vmor %vm2462, %vm2463
        %v2465 = vsel %vm2464, %v2457, %v2461
        %v2466 = vand.u32 2147483647, %v1951
        %vm2467 = vcmp.eq.f32.partialorder %v2466, 8.507059e+37
        %v2468 = vand.u32 %v1951, 2147483648
        %v2469 = vor.u32 1.1754944e-38, %v2468
        %v2470 = vsel %vm2467, %v2469, %v2465
        %v2471 = vrcp.pop %v1952
        %v2472 = vmul.f32 %v1952, %v2471
        %v2473 = vsub.f32 1.0, %v2472
        %v2474 = vmul.f32 %v2471, %v2473
        %v2475 = vadd.f32 %v2471, %v2474
        %vm2476 = vweird.f32 %v1952
        %vm2477 = vweird.f32 %v2471
        %vm2478 = vmor %vm2476, %vm2477
        %v2479 = vsel %vm2478, %v2471, %v2475
        %v2480 = vand.u32 2147483647, %v1952
        %vm2481 = vcmp.eq.f32.partialorder %v2480, 8.507059e+37
        %v2482 = vand.u32 %v1952, 2147483648
        %v2483 = vor.u32 1.1754944e-38, %v2482
        %v2484 = vsel %vm2481, %v2483, %v2479
        %v2485 = vrcp.pop %v1953
        %v2486 = vmul.f32 %v1953, %v2485
        %v2487 = vsub.f32 1.0, %v2486
        %v2488 = vmul.f32 %v2485, %v2487
        %v2489 = vadd.f32 %v2485, %v2488
        %vm2490 = vweird.f32 %v1953
        %vm2491 = vweird.f32 %v2485
        %vm2492 = vmor %vm2490, %vm2491
        %v2493 = vsel %vm2492, %v2485, %v2489
        %v2494 = vand.u32 2147483647, %v1953
        %vm2495 = vcmp.eq.f32.partialorder %v2494, 8.507059e+37
        %v2496 = vand.u32 %v1953, 2147483648
        %v2497 = vor.u32 1.1754944e-38, %v2496
        %v2498 = vsel %vm2495, %v2497, %v2493
        %v2499 = vrcp.pop %v1954
        %v2500 = vmul.f32 %v1954, %v2499
        %v2501 = vsub.f32 1.0, %v2500
        %v2502 = vmul.f32 %v2499, %v2501
        %v2503 = vadd.f32 %v2499, %v2502
        %vm2504 = vweird.f32 %v1954
        %vm2505 = vweird.f32 %v2499
        %vm2506 = vmor %vm2504, %vm2505
        %v2507 = vsel %vm2506, %v2499, %v2503
        %v2508 = vand.u32 2147483647, %v1954
        %vm2509 = vcmp.eq.f32.partialorder %v2508, 8.507059e+37
        %v2510 = vand.u32 %v1954, 2147483648
        %v2511 = vor.u32 1.1754944e-38, %v2510
        %v2512 = vsel %vm2509, %v2511, %v2507
        %v2513 = vrcp.pop %v1955
        %v2514 = vmul.f32 %v1955, %v2513
        %v2515 = vsub.f32 1.0, %v2514
        %v2516 = vmul.f32 %v2513, %v2515
        %v2517 = vadd.f32 %v2513, %v2516
        %vm2518 = vweird.f32 %v1955
        %vm2519 = vweird.f32 %v2513
        %vm2520 = vmor %vm2518, %vm2519
        %v2521 = vsel %vm2520, %v2513, %v2517
        %v2522 = vand.u32 2147483647, %v1955
        %vm2523 = vcmp.eq.f32.partialorder %v2522, 8.507059e+37
        %v2524 = vand.u32 %v1955, 2147483648
        %v2525 = vor.u32 1.1754944e-38, %v2524
        %v2526 = vsel %vm2523, %v2525, %v2521
        %v2527 = vrcp.pop %v1956
        %v2528 = vmul.f32 %v1956, %v2527
        %v2529 = vsub.f32 1.0, %v2528
        %v2530 = vmul.f32 %v2527, %v2529
        %v2531 = vadd.f32 %v2527, %v2530
        %vm2532 = vweird.f32 %v1956
        %vm2533 = vweird.f32 %v2527
        %vm2534 = vmor %vm2532, %vm2533
        %v2535 = vsel %vm2534, %v2527, %v2531
        %v2536 = vand.u32 2147483647, %v1956
        %vm2537 = vcmp.eq.f32.partialorder %v2536, 8.507059e+37
        %v2538 = vand.u32 %v1956, 2147483648
        %v2539 = vor.u32 1.1754944e-38, %v2538
        %v2540 = vsel %vm2537, %v2539, %v2535
        %v2541 = vrcp.pop %v1957
        %v2542 = vmul.f32 %v1957, %v2541
        %v2543 = vsub.f32 1.0, %v2542
        %v2544 = vmul.f32 %v2541, %v2543
        %v2545 = vadd.f32 %v2541, %v2544
        %vm2546 = vweird.f32 %v1957
        %vm2547 = vweird.f32 %v2541
        %vm2548 = vmor %vm2546, %vm2547
        %v2549 = vsel %vm2548, %v2541, %v2545
        %v2550 = vand.u32 2147483647, %v1957
        %vm2551 = vcmp.eq.f32.partialorder %v2550, 8.507059e+37
        %v2552 = vand.u32 %v1957, 2147483648
        %v2553 = vor.u32 1.1754944e-38, %v2552
        %v2554 = vsel %vm2551, %v2553, %v2549
        %v2555 = vrcp.pop %v1958
        %v2556 = vmul.f32 %v1958, %v2555
        %v2557 = vsub.f32 1.0, %v2556
        %v2558 = vmul.f32 %v2555, %v2557
        %v2559 = vadd.f32 %v2555, %v2558
        %vm2560 = vweird.f32 %v1958
        %vm2561 = vweird.f32 %v2555
        %vm2562 = vmor %vm2560, %vm2561
        %v2563 = vsel %vm2562, %v2555, %v2559
        %v2564 = vand.u32 2147483647, %v1958
        %vm2565 = vcmp.eq.f32.partialorder %v2564, 8.507059e+37
        %v2566 = vand.u32 %v1958, 2147483648
        %v2567 = vor.u32 1.1754944e-38, %v2566
        %v2568 = vsel %vm2565, %v2567, %v2563
        %v2569 = vrcp.pop %v1959
        %v2570 = vmul.f32 %v1959, %v2569
        %v2571 = vsub.f32 1.0, %v2570
        %v2572 = vmul.f32 %v2569, %v2571
        %v2573 = vadd.f32 %v2569, %v2572
        %vm2574 = vweird.f32 %v1959
        %vm2575 = vweird.f32 %v2569
        %vm2576 = vmor %vm2574, %vm2575
        %v2577 = vsel %vm2576, %v2569, %v2573
        %v2578 = vand.u32 2147483647, %v1959
        %vm2579 = vcmp.eq.f32.partialorder %v2578, 8.507059e+37
        %v2580 = vand.u32 %v1959, 2147483648
        %v2581 = vor.u32 1.1754944e-38, %v2580
        %v2582 = vsel %vm2579, %v2581, %v2577
        %v2583 = vrcp.pop %v1960
        %v2584 = vmul.f32 %v1960, %v2583
        %v2585 = vsub.f32 1.0, %v2584
        %v2586 = vmul.f32 %v2583, %v2585
        %v2587 = vadd.f32 %v2583, %v2586
        %vm2588 = vweird.f32 %v1960
        %vm2589 = vweird.f32 %v2583
        %vm2590 = vmor %vm2588, %vm2589
        %v2591 = vsel %vm2590, %v2583, %v2587
        %v2592 = vand.u32 2147483647, %v1960
        %vm2593 = vcmp.eq.f32.partialorder %v2592, 8.507059e+37
        %v2594 = vand.u32 %v1960, 2147483648
        %v2595 = vor.u32 1.1754944e-38, %v2594
        %v2596 = vsel %vm2593, %v2595, %v2591
        %v2597 = vrcp.pop %v1961
        %v2598 = vmul.f32 %v1961, %v2597
        %v2599 = vsub.f32 1.0, %v2598
        %v2600 = vmul.f32 %v2597, %v2599
        %v2601 = vadd.f32 %v2597, %v2600
        %vm2602 = vweird.f32 %v1961
        %vm2603 = vweird.f32 %v2597
        %vm2604 = vmor %vm2602, %vm2603
        %v2605 = vsel %vm2604, %v2597, %v2601
        %v2606 = vand.u32 2147483647, %v1961
        %vm2607 = vcmp.eq.f32.partialorder %v2606, 8.507059e+37
        %v2608 = vand.u32 %v1961, 2147483648
        %v2609 = vor.u32 1.1754944e-38, %v2608
        %v2610 = vsel %vm2607, %v2609, %v2605
        %v2611 = vrcp.pop %v1962
        %v2612 = vmul.f32 %v1962, %v2611
        %v2613 = vsub.f32 1.0, %v2612
        %v2614 = vmul.f32 %v2611, %v2613
        %v2615 = vadd.f32 %v2611, %v2614
        %vm2616 = vweird.f32 %v1962
        %vm2617 = vweird.f32 %v2611
        %vm2618 = vmor %vm2616, %vm2617
        %v2619 = vsel %vm2618, %v2611, %v2615
        %v2620 = vand.u32 2147483647, %v1962
        %vm2621 = vcmp.eq.f32.partialorder %v2620, 8.507059e+37
        %v2622 = vand.u32 %v1962, 2147483648
        %v2623 = vor.u32 1.1754944e-38, %v2622
        %v2624 = vsel %vm2621, %v2623, %v2619
        %v2625 = vrcp.pop %v1963
        %v2626 = vmul.f32 %v1963, %v2625
        %v2627 = vsub.f32 1.0, %v2626
        %v2628 = vmul.f32 %v2625, %v2627
        %v2629 = vadd.f32 %v2625, %v2628
        %vm2630 = vweird.f32 %v1963
        %vm2631 = vweird.f32 %v2625
        %vm2632 = vmor %vm2630, %vm2631
        %v2633 = vsel %vm2632, %v2625, %v2629
        %v2634 = vand.u32 2147483647, %v1963
        %vm2635 = vcmp.eq.f32.partialorder %v2634, 8.507059e+37
        %v2636 = vand.u32 %v1963, 2147483648
        %v2637 = vor.u32 1.1754944e-38, %v2636
        %v2638 = vsel %vm2635, %v2637, %v2633
        %v2639 = vrcp.pop %v1964
        %v2640 = vmul.f32 %v1964, %v2639
        %v2641 = vsub.f32 1.0, %v2640
        %v2642 = vmul.f32 %v2639, %v2641
        %v2643 = vadd.f32 %v2639, %v2642
        %vm2644 = vweird.f32 %v1964
        %vm2645 = vweird.f32 %v2639
        %vm2646 = vmor %vm2644, %vm2645
        %v2647 = vsel %vm2646, %v2639, %v2643
        %v2648 = vand.u32 2147483647, %v1964
        %vm2649 = vcmp.eq.f32.partialorder %v2648, 8.507059e+37
        %v2650 = vand.u32 %v1964, 2147483648
        %v2651 = vor.u32 1.1754944e-38, %v2650
        %v2652 = vsel %vm2649, %v2651, %v2647
        %v2653 = vrcp.pop %v1965
        %v2654 = vmul.f32 %v1965, %v2653
        %v2655 = vsub.f32 1.0, %v2654
        %v2656 = vmul.f32 %v2653, %v2655
        %v2657 = vadd.f32 %v2653, %v2656
        %vm2658 = vweird.f32 %v1965
        %vm2659 = vweird.f32 %v2653
        %vm2660 = vmor %vm2658, %vm2659
        %v2661 = vsel %vm2660, %v2653, %v2657
        %v2662 = vand.u32 2147483647, %v1965
        %vm2663 = vcmp.eq.f32.partialorder %v2662, 8.507059e+37
        %v2664 = vand.u32 %v1965, 2147483648
        %v2665 = vor.u32 1.1754944e-38, %v2664
        %v2666 = vsel %vm2663, %v2665, %v2661
        %v2667 = vrcp.pop %v1966
        %v2668 = vmul.f32 %v1966, %v2667
        %v2669 = vsub.f32 1.0, %v2668
        %v2670 = vmul.f32 %v2667, %v2669
        %v2671 = vadd.f32 %v2667, %v2670
        %vm2672 = vweird.f32 %v1966
        %vm2673 = vweird.f32 %v2667
        %vm2674 = vmor %vm2672, %vm2673
        %v2675 = vsel %vm2674, %v2667, %v2671
        %v2676 = vand.u32 2147483647, %v1966
        %vm2677 = vcmp.eq.f32.partialorder %v2676, 8.507059e+37
        %v2678 = vand.u32 %v1966, 2147483648
        %v2679 = vor.u32 1.1754944e-38, %v2678
        %v2680 = vsel %vm2677, %v2679, %v2675
        %v2681 = vrcp.pop %v1967
        %v2682 = vmul.f32 %v1967, %v2681
        %v2683 = vsub.f32 1.0, %v2682
        %v2684 = vmul.f32 %v2681, %v2683
        %v2685 = vadd.f32 %v2681, %v2684
        %vm2686 = vweird.f32 %v1967
        %vm2687 = vweird.f32 %v2681
        %vm2688 = vmor %vm2686, %vm2687
        %v2689 = vsel %vm2688, %v2681, %v2685
        %v2690 = vand.u32 2147483647, %v1967
        %vm2691 = vcmp.eq.f32.partialorder %v2690, 8.507059e+37
        %v2692 = vand.u32 %v1967, 2147483648
        %v2693 = vor.u32 1.1754944e-38, %v2692
        %v2694 = vsel %vm2691, %v2693, %v2689
        %v2695 = vrcp.pop %v1968
        %v2696 = vmul.f32 %v1968, %v2695
        %v2697 = vsub.f32 1.0, %v2696
        %v2698 = vmul.f32 %v2695, %v2697
        %v2699 = vadd.f32 %v2695, %v2698
        %vm2700 = vweird.f32 %v1968
        %vm2701 = vweird.f32 %v2695
        %vm2702 = vmor %vm2700, %vm2701
        %v2703 = vsel %vm2702, %v2695, %v2699
        %v2704 = vand.u32 2147483647, %v1968
        %vm2705 = vcmp.eq.f32.partialorder %v2704, 8.507059e+37
        %v2706 = vand.u32 %v1968, 2147483648
        %v2707 = vor.u32 1.1754944e-38, %v2706
        %v2708 = vsel %vm2705, %v2707, %v2703
        %v2709 = vrcp.pop %v1969
        %v2710 = vmul.f32 %v1969, %v2709
        %v2711 = vsub.f32 1.0, %v2710
        %v2712 = vmul.f32 %v2709, %v2711
        %v2713 = vadd.f32 %v2709, %v2712
        %vm2714 = vweird.f32 %v1969
        %vm2715 = vweird.f32 %v2709
        %vm2716 = vmor %vm2714, %vm2715
        %v2717 = vsel %vm2716, %v2709, %v2713
        %v2718 = vand.u32 2147483647, %v1969
        %vm2719 = vcmp.eq.f32.partialorder %v2718, 8.507059e+37
        %v2720 = vand.u32 %v1969, 2147483648
        %v2721 = vor.u32 1.1754944e-38, %v2720
        %v2722 = vsel %vm2719, %v2721, %v2717
        %v2723 = vrcp.pop %v1970
        %v2724 = vmul.f32 %v1970, %v2723
        %v2725 = vsub.f32 1.0, %v2724
        %v2726 = vmul.f32 %v2723, %v2725
        %v2727 = vadd.f32 %v2723, %v2726
        %vm2728 = vweird.f32 %v1970
        %vm2729 = vweird.f32 %v2723
        %vm2730 = vmor %vm2728, %vm2729
        %v2731 = vsel %vm2730, %v2723, %v2727
        %v2732 = vand.u32 2147483647, %v1970
        %vm2733 = vcmp.eq.f32.partialorder %v2732, 8.507059e+37
        %v2734 = vand.u32 %v1970, 2147483648
        %v2735 = vor.u32 1.1754944e-38, %v2734
        %v2736 = vsel %vm2733, %v2735, %v2731
        %v2737 = vrcp.pop %v1971
        %v2738 = vmul.f32 %v1971, %v2737
        %v2739 = vsub.f32 1.0, %v2738
        %v2740 = vmul.f32 %v2737, %v2739
        %v2741 = vadd.f32 %v2737, %v2740
        %vm2742 = vweird.f32 %v1971
        %vm2743 = vweird.f32 %v2737
        %vm2744 = vmor %vm2742, %vm2743
        %v2745 = vsel %vm2744, %v2737, %v2741
        %v2746 = vand.u32 2147483647, %v1971
        %vm2747 = vcmp.eq.f32.partialorder %v2746, 8.507059e+37
        %v2748 = vand.u32 %v1971, 2147483648
        %v2749 = vor.u32 1.1754944e-38, %v2748
        %v2750 = vsel %vm2747, %v2749, %v2745
        %v2751 = vrcp.pop %v1972
        %v2752 = vmul.f32 %v1972, %v2751
        %v2753 = vsub.f32 1.0, %v2752
        %v2754 = vmul.f32 %v2751, %v2753
        %v2755 = vadd.f32 %v2751, %v2754
        %vm2756 = vweird.f32 %v1972
        %vm2757 = vweird.f32 %v2751
        %vm2758 = vmor %vm2756, %vm2757
        %v2759 = vsel %vm2758, %v2751, %v2755
        %v2760 = vand.u32 2147483647, %v1972
        %vm2761 = vcmp.eq.f32.partialorder %v2760, 8.507059e+37
        %v2762 = vand.u32 %v1972, 2147483648
        %v2763 = vor.u32 1.1754944e-38, %v2762
        %v2764 = vsel %vm2761, %v2763, %v2759
        %v2765 = vrcp.pop %v1973
        %v2766 = vmul.f32 %v1973, %v2765
        %v2767 = vsub.f32 1.0, %v2766
        %v2768 = vmul.f32 %v2765, %v2767
        %v2769 = vadd.f32 %v2765, %v2768
        %vm2770 = vweird.f32 %v1973
        %vm2771 = vweird.f32 %v2765
        %vm2772 = vmor %vm2770, %vm2771
        %v2773 = vsel %vm2772, %v2765, %v2769
        %v2774 = vand.u32 2147483647, %v1973
        %vm2775 = vcmp.eq.f32.partialorder %v2774, 8.507059e+37
        %v2776 = vand.u32 %v1973, 2147483648
        %v2777 = vor.u32 1.1754944e-38, %v2776
        %v2778 = vsel %vm2775, %v2777, %v2773
        %v2779 = vrcp.pop %v1974
        %v2780 = vmul.f32 %v1974, %v2779
        %v2781 = vsub.f32 1.0, %v2780
        %v2782 = vmul.f32 %v2779, %v2781
        %v2783 = vadd.f32 %v2779, %v2782
        %vm2784 = vweird.f32 %v1974
        %vm2785 = vweird.f32 %v2779
        %vm2786 = vmor %vm2784, %vm2785
        %v2787 = vsel %vm2786, %v2779, %v2783
        %v2788 = vand.u32 2147483647, %v1974
        %vm2789 = vcmp.eq.f32.partialorder %v2788, 8.507059e+37
        %v2790 = vand.u32 %v1974, 2147483648
        %v2791 = vor.u32 1.1754944e-38, %v2790
        %v2792 = vsel %vm2789, %v2791, %v2787
        %v2793 = vrcp.pop %v1975
        %v2794 = vmul.f32 %v1975, %v2793
        %v2795 = vsub.f32 1.0, %v2794
        %v2796 = vmul.f32 %v2793, %v2795
        %v2797 = vadd.f32 %v2793, %v2796
        %vm2798 = vweird.f32 %v1975
        %vm2799 = vweird.f32 %v2793
        %vm2800 = vmor %vm2798, %vm2799
        %v2801 = vsel %vm2800, %v2793, %v2797
        %v2802 = vand.u32 2147483647, %v1975
        %vm2803 = vcmp.eq.f32.partialorder %v2802, 8.507059e+37
        %v2804 = vand.u32 %v1975, 2147483648
        %v2805 = vor.u32 1.1754944e-38, %v2804
        %v2806 = vsel %vm2803, %v2805, %v2801
        %v2807 = vrcp.pop %v1976
        %v2808 = vmul.f32 %v1976, %v2807
        %v2809 = vsub.f32 1.0, %v2808
        %v2810 = vmul.f32 %v2807, %v2809
        %v2811 = vadd.f32 %v2807, %v2810
        %vm2812 = vweird.f32 %v1976
        %vm2813 = vweird.f32 %v2807
        %vm2814 = vmor %vm2812, %vm2813
        %v2815 = vsel %vm2814, %v2807, %v2811
        %v2816 = vand.u32 2147483647, %v1976
        %vm2817 = vcmp.eq.f32.partialorder %v2816, 8.507059e+37
        %v2818 = vand.u32 %v1976, 2147483648
        %v2819 = vor.u32 1.1754944e-38, %v2818
        %v2820 = vsel %vm2817, %v2819, %v2815
        %v2821 = vrcp.pop %v1977
        %v2822 = vmul.f32 %v1977, %v2821
        %v2823 = vsub.f32 1.0, %v2822
        %v2824 = vmul.f32 %v2821, %v2823
        %v2825 = vadd.f32 %v2821, %v2824
        %vm2826 = vweird.f32 %v1977
        %vm2827 = vweird.f32 %v2821
        %vm2828 = vmor %vm2826, %vm2827
        %v2829 = vsel %vm2828, %v2821, %v2825
        %v2830 = vand.u32 2147483647, %v1977
        %vm2831 = vcmp.eq.f32.partialorder %v2830, 8.507059e+37
        %v2832 = vand.u32 %v1977, 2147483648
        %v2833 = vor.u32 1.1754944e-38, %v2832
        %v2834 = vsel %vm2831, %v2833, %v2829
        %v2835 = vrcp.pop %v1978
        %v2836 = vmul.f32 %v1978, %v2835
        %v2837 = vsub.f32 1.0, %v2836
        %v2838 = vmul.f32 %v2835, %v2837
        %v2839 = vadd.f32 %v2835, %v2838
        %vm2840 = vweird.f32 %v1978
        %vm2841 = vweird.f32 %v2835
        %vm2842 = vmor %vm2840, %vm2841
        %v2843 = vsel %vm2842, %v2835, %v2839
        %v2844 = vand.u32 2147483647, %v1978
        %vm2845 = vcmp.eq.f32.partialorder %v2844, 8.507059e+37
        %v2846 = vand.u32 %v1978, 2147483648
        %v2847 = vor.u32 1.1754944e-38, %v2846
        %v2848 = vsel %vm2845, %v2847, %v2843
        %v2849 = vrcp.pop %v1979
        %v2850 = vmul.f32 %v1979, %v2849
        %v2851 = vsub.f32 1.0, %v2850
        %v2852 = vmul.f32 %v2849, %v2851
        %v2853 = vadd.f32 %v2849, %v2852
        %vm2854 = vweird.f32 %v1979
        %vm2855 = vweird.f32 %v2849
        %vm2856 = vmor %vm2854, %vm2855
        %v2857 = vsel %vm2856, %v2849, %v2853
        %v2858 = vand.u32 2147483647, %v1979
        %vm2859 = vcmp.eq.f32.partialorder %v2858, 8.507059e+37
        %v2860 = vand.u32 %v1979, 2147483648
        %v2861 = vor.u32 1.1754944e-38, %v2860
        %v2862 = vsel %vm2859, %v2861, %v2857
        %v2863 = vrcp.pop %v1980
        %v2864 = vmul.f32 %v1980, %v2863
        %v2865 = vsub.f32 1.0, %v2864
        %v2866 = vmul.f32 %v2863, %v2865
        %v2867 = vadd.f32 %v2863, %v2866
        %vm2868 = vweird.f32 %v1980
        %vm2869 = vweird.f32 %v2863
        %vm2870 = vmor %vm2868, %vm2869
        %v2871 = vsel %vm2870, %v2863, %v2867
        %v2872 = vand.u32 2147483647, %v1980
        %vm2873 = vcmp.eq.f32.partialorder %v2872, 8.507059e+37
        %v2874 = vand.u32 %v1980, 2147483648
        %v2875 = vor.u32 1.1754944e-38, %v2874
        %v2876 = vsel %vm2873, %v2875, %v2871
        %v2877 = vtanh.pop %v1661
        %v2878 = vtanh.pop %v1662
        %v2879 = vtanh.pop %v1663
        %v2880 = vtanh.pop %v1664
        %v2881 = vtanh.pop %v1665
        %v2882 = vtanh.pop %v1666
        %v2883 = vtanh.pop %v1667
        %v2884 = vtanh.pop %v1668
        %v2885 = vtanh.pop %v1669
        %v2886 = vtanh.pop %v1670
        %v2887 = vtanh.pop %v1671
        %v2888 = vtanh.pop %v1672
        %v2889 = vtanh.pop %v1673
        %v2890 = vtanh.pop %v1674
        %v2891 = vtanh.pop %v1675
        %v2892 = vtanh.pop %v1676
        %v2893 = vtanh.pop %v1677
        %v2894 = vtanh.pop %v1678
        %v2895 = vtanh.pop %v1679
        %v2896 = vtanh.pop %v1680
        %v2897 = vtanh.pop %v1681
        %v2898 = vtanh.pop %v1682
        %v2899 = vtanh.pop %v1683
        %v2900 = vtanh.pop %v1684
        %v2901 = vtanh.pop %v1685
        %v2902 = vtanh.pop %v1686
        %v2903 = vtanh.pop %v1687
        %v2904 = vtanh.pop %v1688
        %v2905 = vtanh.pop %v1689
        %v2906 = vtanh.pop %v1690
        %v2907 = vtanh.pop %v1691
        %v2908 = vtanh.pop %v1692
        %v2909 = vtanh.pop %v1693
        %v2910 = vtanh.pop %v1694
        %v2911 = vtanh.pop %v1695
        %v2912 = vtanh.pop %v1696
        %v2913 = vtanh.pop %v1697
        %v2914 = vtanh.pop %v1698
        %v2915 = vtanh.pop %v1699
        %v2916 = vtanh.pop %v1700
        %v2917 = vtanh.pop %v1701
        %v2918 = vtanh.pop %v1702
        %v2919 = vtanh.pop %v1703
        %v2920 = vtanh.pop %v1704
        %v2921 = vtanh.pop %v1705
        %v2922 = vtanh.pop %v1706
        %v2923 = vtanh.pop %v1707
        %v2924 = vtanh.pop %v1708
        %v2925 = vtanh.pop %v1709
        %v2926 = vtanh.pop %v1710
        %v2927 = vtanh.pop %v1711
        %v2928 = vtanh.pop %v1712
        %v2929 = vtanh.pop %v1713
        %v2930 = vtanh.pop %v1714
        %v2931 = vtanh.pop %v1715
        %v2932 = vtanh.pop %v1716
        %v2933 = vtanh.pop %v1717
        %v2934 = vtanh.pop %v1718
        %v2935 = vtanh.pop %v1719
        %v2936 = vtanh.pop %v1720
        %v2937 = vtanh.pop %v1721
        %v2938 = vtanh.pop %v1722
        %v2939 = vtanh.pop %v1723
        %v2940 = vtanh.pop %v1724
        %3005 = vrot.lane.b32.xlu0 %v785, 32
        %v3006 = vpop.permute.xlu0 %3005
        %3007 = vrot.lane.b32.xlu0 %v786, 32
        %v3008 = vpop.permute.xlu0 %3007
        %3009 = vrot.lane.b32.xlu0 %v787, 32
        %v3010 = vpop.permute.xlu0 %3009
        %3011 = vrot.lane.b32.xlu0 %v788, 32
        %v3012 = vpop.permute.xlu0 %3011
        %3013 = vrot.lane.b32.xlu0 %v789, 32
        %v3014 = vpop.permute.xlu0 %3013
        %3015 = vrot.lane.b32.xlu0 %v790, 32
        %v3016 = vpop.permute.xlu0 %3015
        %3017 = vrot.lane.b32.xlu0 %v791, 32
        %v3018 = vpop.permute.xlu0 %3017
        %3019 = vrot.lane.b32.xlu0 %v792, 32
        %v3020 = vpop.permute.xlu0 %3019
        %3021 = vrot.lane.b32.xlu0 %v793, 32
        %v3022 = vpop.permute.xlu0 %3021
        %3023 = vrot.lane.b32.xlu0 %v794, 32
        %v3024 = vpop.permute.xlu0 %3023
        %3025 = vrot.lane.b32.xlu0 %v795, 32
        %v3026 = vpop.permute.xlu0 %3025
        %3027 = vrot.lane.b32.xlu0 %v796, 32
        %v3028 = vpop.permute.xlu0 %3027
        %3029 = vrot.lane.b32.xlu0 %v797, 32
        %v3030 = vpop.permute.xlu0 %3029
        %3031 = vrot.lane.b32.xlu0 %v798, 32
        %v3032 = vpop.permute.xlu0 %3031
        %3033 = vrot.lane.b32.xlu0 %v799, 32
        %v3034 = vpop.permute.xlu0 %3033
        %3035 = vrot.lane.b32.xlu0 %v800, 32
        %v3036 = vpop.permute.xlu0 %3035
        %3037 = vrot.lane.b32.xlu0 %v801, 32
        %v3038 = vpop.permute.xlu0 %3037
        %3039 = vrot.lane.b32.xlu0 %v802, 32
        %v3040 = vpop.permute.xlu0 %3039
        %3041 = vrot.lane.b32.xlu0 %v803, 32
        %v3042 = vpop.permute.xlu0 %3041
        %3043 = vrot.lane.b32.xlu0 %v804, 32
        %v3044 = vpop.permute.xlu0 %3043
        %3045 = vrot.lane.b32.xlu0 %v805, 32
        %v3046 = vpop.permute.xlu0 %3045
        %3047 = vrot.lane.b32.xlu0 %v806, 32
        %v3048 = vpop.permute.xlu0 %3047
        %3049 = vrot.lane.b32.xlu0 %v807, 32
        %v3050 = vpop.permute.xlu0 %3049
        %3051 = vrot.lane.b32.xlu0 %v808, 32
        %v3052 = vpop.permute.xlu0 %3051
        %3053 = vrot.lane.b32.xlu0 %v809, 32
        %v3054 = vpop.permute.xlu0 %3053
        %3055 = vrot.lane.b32.xlu0 %v810, 32
        %v3056 = vpop.permute.xlu0 %3055
        %3057 = vrot.lane.b32.xlu0 %v811, 32
        %v3058 = vpop.permute.xlu0 %3057
        %3059 = vrot.lane.b32.xlu0 %v812, 32
        %v3060 = vpop.permute.xlu0 %3059
        %3061 = vrot.lane.b32.xlu0 %v813, 32
        %v3062 = vpop.permute.xlu0 %3061
        %3063 = vrot.lane.b32.xlu0 %v814, 32
        %v3064 = vpop.permute.xlu0 %3063
        %3065 = vrot.lane.b32.xlu0 %v815, 32
        %v3066 = vpop.permute.xlu0 %3065
        %3067 = vrot.lane.b32.xlu0 %v816, 32
        %v3068 = vpop.permute.xlu0 %3067
        %3069 = vrot.lane.b32.xlu0 %v817, 32
        %v3070 = vpop.permute.xlu0 %3069
        %3071 = vrot.lane.b32.xlu0 %v818, 32
        %v3072 = vpop.permute.xlu0 %3071
        %3073 = vrot.lane.b32.xlu0 %v819, 32
        %v3074 = vpop.permute.xlu0 %3073
        %3075 = vrot.lane.b32.xlu0 %v820, 32
        %v3076 = vpop.permute.xlu0 %3075
        %3077 = vrot.lane.b32.xlu0 %v821, 32
        %v3078 = vpop.permute.xlu0 %3077
        %3079 = vrot.lane.b32.xlu0 %v822, 32
        %v3080 = vpop.permute.xlu0 %3079
        %3081 = vrot.lane.b32.xlu0 %v823, 32
        %v3082 = vpop.permute.xlu0 %3081
        %3083 = vrot.lane.b32.xlu0 %v824, 32
        %v3084 = vpop.permute.xlu0 %3083
        %3085 = vrot.lane.b32.xlu0 %v825, 32
        %v3086 = vpop.permute.xlu0 %3085
        %3087 = vrot.lane.b32.xlu0 %v826, 32
        %v3088 = vpop.permute.xlu0 %3087
        %3089 = vrot.lane.b32.xlu0 %v827, 32
        %v3090 = vpop.permute.xlu0 %3089
        %3091 = vrot.lane.b32.xlu0 %v828, 32
        %v3092 = vpop.permute.xlu0 %3091
        %3093 = vrot.lane.b32.xlu0 %v829, 32
        %v3094 = vpop.permute.xlu0 %3093
        %3095 = vrot.lane.b32.xlu0 %v830, 32
        %v3096 = vpop.permute.xlu0 %3095
        %3097 = vrot.lane.b32.xlu0 %v831, 32
        %v3098 = vpop.permute.xlu0 %3097
        %3099 = vrot.lane.b32.xlu0 %v832, 32
        %v3100 = vpop.permute.xlu0 %3099
        %3101 = vrot.lane.b32.xlu0 %v833, 32
        %v3102 = vpop.permute.xlu0 %3101
        %3103 = vrot.lane.b32.xlu0 %v834, 32
        %v3104 = vpop.permute.xlu0 %3103
        %3105 = vrot.lane.b32.xlu0 %v835, 32
        %v3106 = vpop.permute.xlu0 %3105
        %3107 = vrot.lane.b32.xlu0 %v836, 32
        %v3108 = vpop.permute.xlu0 %3107
        %3109 = vrot.lane.b32.xlu0 %v837, 32
        %v3110 = vpop.permute.xlu0 %3109
        %3111 = vrot.lane.b32.xlu0 %v838, 32
        %v3112 = vpop.permute.xlu0 %3111
        %3113 = vrot.lane.b32.xlu0 %v839, 32
        %v3114 = vpop.permute.xlu0 %3113
        %3115 = vrot.lane.b32.xlu0 %v840, 32
        %v3116 = vpop.permute.xlu0 %3115
        %3117 = vrot.lane.b32.xlu0 %v841, 32
        %v3118 = vpop.permute.xlu0 %3117
        %3119 = vrot.lane.b32.xlu0 %v842, 32
        %v3120 = vpop.permute.xlu0 %3119
        %3121 = vrot.lane.b32.xlu0 %v843, 32
        %v3122 = vpop.permute.xlu0 %3121
        %3123 = vrot.lane.b32.xlu0 %v844, 32
        %v3124 = vpop.permute.xlu0 %3123
        %3125 = vrot.lane.b32.xlu0 %v845, 32
        %v3126 = vpop.permute.xlu0 %3125
        %3127 = vrot.lane.b32.xlu0 %v846, 32
        %v3128 = vpop.permute.xlu0 %3127
        %3129 = vrot.lane.b32.xlu0 %v847, 32
        %v3130 = vpop.permute.xlu0 %3129
        %3131 = vrot.lane.b32.xlu0 %v848, 32
        %v3132 = vpop.permute.xlu0 %3131
        %v3197 = vmul.f32 %v1994, %v3006
        %v3198 = vmul.f32 %v2008, %v3008
        %v3199 = vmul.f32 %v2022, %v3010
        %v3200 = vmul.f32 %v2036, %v3012
        %v3201 = vmul.f32 %v2050, %v3014
        %v3202 = vmul.f32 %v2064, %v3016
        %v3203 = vmul.f32 %v2078, %v3018
        %v3204 = vmul.f32 %v2092, %v3020
        %v3205 = vmul.f32 %v2106, %v3022
        %v3206 = vmul.f32 %v2120, %v3024
        %v3207 = vmul.f32 %v2134, %v3026
        %v3208 = vmul.f32 %v2148, %v3028
        %v3209 = vmul.f32 %v2162, %v3030
        %v3210 = vmul.f32 %v2176, %v3032
        %v3211 = vmul.f32 %v2190, %v3034
        %v3212 = vmul.f32 %v2204, %v3036
        %v3213 = vmul.f32 %v2218, %v3038
        %v3214 = vmul.f32 %v2232, %v3040
        %v3215 = vmul.f32 %v2246, %v3042
        %v3216 = vmul.f32 %v2260, %v3044
        %v3217 = vmul.f32 %v2274, %v3046
        %v3218 = vmul.f32 %v2288, %v3048
        %v3219 = vmul.f32 %v2302, %v3050
        %v3220 = vmul.f32 %v2316, %v3052
        %v3221 = vmul.f32 %v2330, %v3054
        %v3222 = vmul.f32 %v2344, %v3056
        %v3223 = vmul.f32 %v2358, %v3058
        %v3224 = vmul.f32 %v2372, %v3060
        %v3225 = vmul.f32 %v2386, %v3062
        %v3226 = vmul.f32 %v2400, %v3064
        %v3227 = vmul.f32 %v2414, %v3066
        %v3228 = vmul.f32 %v2428, %v3068
        %v3229 = vmul.f32 %v2442, %v3070
        %v3230 = vmul.f32 %v2456, %v3072
        %v3231 = vmul.f32 %v2470, %v3074
        %v3232 = vmul.f32 %v2484, %v3076
        %v3233 = vmul.f32 %v2498, %v3078
        %v3234 = vmul.f32 %v2512, %v3080
        %v3235 = vmul.f32 %v2526, %v3082
        %v3236 = vmul.f32 %v2540, %v3084
        %v3237 = vmul.f32 %v2554, %v3086
        %v3238 = vmul.f32 %v2568, %v3088
        %v3239 = vmul.f32 %v2582, %v3090
        %v3240 = vmul.f32 %v2596, %v3092
        %v3241 = vmul.f32 %v2610, %v3094
        %v3242 = vmul.f32 %v2624, %v3096
        %v3243 = vmul.f32 %v2638, %v3098
        %v3244 = vmul.f32 %v2652, %v3100
        %v3245 = vmul.f32 %v2666, %v3102
        %v3246 = vmul.f32 %v2680, %v3104
        %v3247 = vmul.f32 %v2694, %v3106
        %v3248 = vmul.f32 %v2708, %v3108
        %v3249 = vmul.f32 %v2722, %v3110
        %v3250 = vmul.f32 %v2736, %v3112
        %v3251 = vmul.f32 %v2750, %v3114
        %v3252 = vmul.f32 %v2764, %v3116
        %v3253 = vmul.f32 %v2778, %v3118
        %v3254 = vmul.f32 %v2792, %v3120
        %v3255 = vmul.f32 %v2806, %v3122
        %v3256 = vmul.f32 %v2820, %v3124
        %v3257 = vmul.f32 %v2834, %v3126
        %v3258 = vmul.f32 %v2848, %v3128
        %v3259 = vmul.f32 %v2862, %v3130
        %v3260 = vmul.f32 %v2876, %v3132
        %3325 = vrot.lane.b32.xlu0 %v2877, 32
        %v3326 = vpop.permute.xlu0 %3325
        %3327 = vrot.lane.b32.xlu0 %v2878, 32
        %v3328 = vpop.permute.xlu0 %3327
        %3329 = vrot.lane.b32.xlu0 %v2879, 32
        %v3330 = vpop.permute.xlu0 %3329
        %3331 = vrot.lane.b32.xlu0 %v2880, 32
        %v3332 = vpop.permute.xlu0 %3331
        %3333 = vrot.lane.b32.xlu0 %v2881, 32
        %v3334 = vpop.permute.xlu0 %3333
        %3335 = vrot.lane.b32.xlu0 %v2882, 32
        %v3336 = vpop.permute.xlu0 %3335
        %3337 = vrot.lane.b32.xlu0 %v2883, 32
        %v3338 = vpop.permute.xlu0 %3337
        %3339 = vrot.lane.b32.xlu0 %v2884, 32
        %v3340 = vpop.permute.xlu0 %3339
        %3341 = vrot.lane.b32.xlu0 %v2885, 32
        %v3342 = vpop.permute.xlu0 %3341
        %3343 = vrot.lane.b32.xlu0 %v2886, 32
        %v3344 = vpop.permute.xlu0 %3343
        %3345 = vrot.lane.b32.xlu0 %v2887, 32
        %v3346 = vpop.permute.xlu0 %3345
        %3347 = vrot.lane.b32.xlu0 %v2888, 32
        %v3348 = vpop.permute.xlu0 %3347
        %3349 = vrot.lane.b32.xlu0 %v2889, 32
        %v3350 = vpop.permute.xlu0 %3349
        %3351 = vrot.lane.b32.xlu0 %v2890, 32
        %v3352 = vpop.permute.xlu0 %3351
        %3353 = vrot.lane.b32.xlu0 %v2891, 32
        %v3354 = vpop.permute.xlu0 %3353
        %3355 = vrot.lane.b32.xlu0 %v2892, 32
        %v3356 = vpop.permute.xlu0 %3355
        %3357 = vrot.lane.b32.xlu0 %v2893, 32
        %v3358 = vpop.permute.xlu0 %3357
        %3359 = vrot.lane.b32.xlu0 %v2894, 32
        %v3360 = vpop.permute.xlu0 %3359
        %3361 = vrot.lane.b32.xlu0 %v2895, 32
        %v3362 = vpop.permute.xlu0 %3361
        %3363 = vrot.lane.b32.xlu0 %v2896, 32
        %v3364 = vpop.permute.xlu0 %3363
        %3365 = vrot.lane.b32.xlu0 %v2897, 32
        %v3366 = vpop.permute.xlu0 %3365
        %3367 = vrot.lane.b32.xlu0 %v2898, 32
        %v3368 = vpop.permute.xlu0 %3367
        %3369 = vrot.lane.b32.xlu0 %v2899, 32
        %v3370 = vpop.permute.xlu0 %3369
        %3371 = vrot.lane.b32.xlu0 %v2900, 32
        %v3372 = vpop.permute.xlu0 %3371
        %3373 = vrot.lane.b32.xlu0 %v2901, 32
        %v3374 = vpop.permute.xlu0 %3373
        %3375 = vrot.lane.b32.xlu0 %v2902, 32
        %v3376 = vpop.permute.xlu0 %3375
        %3377 = vrot.lane.b32.xlu0 %v2903, 32
        %v3378 = vpop.permute.xlu0 %3377
        %3379 = vrot.lane.b32.xlu0 %v2904, 32
        %v3380 = vpop.permute.xlu0 %3379
        %3381 = vrot.lane.b32.xlu0 %v2905, 32
        %v3382 = vpop.permute.xlu0 %3381
        %3383 = vrot.lane.b32.xlu0 %v2906, 32
        %v3384 = vpop.permute.xlu0 %3383
        %3385 = vrot.lane.b32.xlu0 %v2907, 32
        %v3386 = vpop.permute.xlu0 %3385
        %3387 = vrot.lane.b32.xlu0 %v2908, 32
        %v3388 = vpop.permute.xlu0 %3387
        %3389 = vrot.lane.b32.xlu0 %v2909, 32
        %v3390 = vpop.permute.xlu0 %3389
        %3391 = vrot.lane.b32.xlu0 %v2910, 32
        %v3392 = vpop.permute.xlu0 %3391
        %3393 = vrot.lane.b32.xlu0 %v2911, 32
        %v3394 = vpop.permute.xlu0 %3393
        %3395 = vrot.lane.b32.xlu0 %v2912, 32
        %v3396 = vpop.permute.xlu0 %3395
        %3397 = vrot.lane.b32.xlu0 %v2913, 32
        %v3398 = vpop.permute.xlu0 %3397
        %3399 = vrot.lane.b32.xlu0 %v2914, 32
        %v3400 = vpop.permute.xlu0 %3399
        %3401 = vrot.lane.b32.xlu0 %v2915, 32
        %v3402 = vpop.permute.xlu0 %3401
        %3403 = vrot.lane.b32.xlu0 %v2916, 32
        %v3404 = vpop.permute.xlu0 %3403
        %3405 = vrot.lane.b32.xlu0 %v2917, 32
        %v3406 = vpop.permute.xlu0 %3405
        %3407 = vrot.lane.b32.xlu0 %v2918, 32
        %v3408 = vpop.permute.xlu0 %3407
        %3409 = vrot.lane.b32.xlu0 %v2919, 32
        %v3410 = vpop.permute.xlu0 %3409
        %3411 = vrot.lane.b32.xlu0 %v2920, 32
        %v3412 = vpop.permute.xlu0 %3411
        %3413 = vrot.lane.b32.xlu0 %v2921, 32
        %v3414 = vpop.permute.xlu0 %3413
        %3415 = vrot.lane.b32.xlu0 %v2922, 32
        %v3416 = vpop.permute.xlu0 %3415
        %3417 = vrot.lane.b32.xlu0 %v2923, 32
        %v3418 = vpop.permute.xlu0 %3417
        %3419 = vrot.lane.b32.xlu0 %v2924, 32
        %v3420 = vpop.permute.xlu0 %3419
        %3421 = vrot.lane.b32.xlu0 %v2925, 32
        %v3422 = vpop.permute.xlu0 %3421
        %3423 = vrot.lane.b32.xlu0 %v2926, 32
        %v3424 = vpop.permute.xlu0 %3423
        %3425 = vrot.lane.b32.xlu0 %v2927, 32
        %v3426 = vpop.permute.xlu0 %3425
        %3427 = vrot.lane.b32.xlu0 %v2928, 32
        %v3428 = vpop.permute.xlu0 %3427
        %3429 = vrot.lane.b32.xlu0 %v2929, 32
        %v3430 = vpop.permute.xlu0 %3429
        %3431 = vrot.lane.b32.xlu0 %v2930, 32
        %v3432 = vpop.permute.xlu0 %3431
        %3433 = vrot.lane.b32.xlu0 %v2931, 32
        %v3434 = vpop.permute.xlu0 %3433
        %3435 = vrot.lane.b32.xlu0 %v2932, 32
        %v3436 = vpop.permute.xlu0 %3435
        %3437 = vrot.lane.b32.xlu0 %v2933, 32
        %v3438 = vpop.permute.xlu0 %3437
        %3439 = vrot.lane.b32.xlu0 %v2934, 32
        %v3440 = vpop.permute.xlu0 %3439
        %3441 = vrot.lane.b32.xlu0 %v2935, 32
        %v3442 = vpop.permute.xlu0 %3441
        %3443 = vrot.lane.b32.xlu0 %v2936, 32
        %v3444 = vpop.permute.xlu0 %3443
        %3445 = vrot.lane.b32.xlu0 %v2937, 32
        %v3446 = vpop.permute.xlu0 %3445
        %3447 = vrot.lane.b32.xlu0 %v2938, 32
        %v3448 = vpop.permute.xlu0 %3447
        %3449 = vrot.lane.b32.xlu0 %v2939, 32
        %v3450 = vpop.permute.xlu0 %3449
        %3451 = vrot.lane.b32.xlu0 %v2940, 32
        %v3452 = vpop.permute.xlu0 %3451
        %v3517 = vmul.f32 %v1994, %v3326
        %v3518 = vmul.f32 %v2008, %v3328
        %v3519 = vmul.f32 %v2022, %v3330
        %v3520 = vmul.f32 %v2036, %v3332
        %v3521 = vmul.f32 %v2050, %v3334
        %v3522 = vmul.f32 %v2064, %v3336
        %v3523 = vmul.f32 %v2078, %v3338
        %v3524 = vmul.f32 %v2092, %v3340
        %v3525 = vmul.f32 %v2106, %v3342
        %v3526 = vmul.f32 %v2120, %v3344
        %v3527 = vmul.f32 %v2134, %v3346
        %v3528 = vmul.f32 %v2148, %v3348
        %v3529 = vmul.f32 %v2162, %v3350
        %v3530 = vmul.f32 %v2176, %v3352
        %v3531 = vmul.f32 %v2190, %v3354
        %v3532 = vmul.f32 %v2204, %v3356
        %v3533 = vmul.f32 %v2218, %v3358
        %v3534 = vmul.f32 %v2232, %v3360
        %v3535 = vmul.f32 %v2246, %v3362
        %v3536 = vmul.f32 %v2260, %v3364
        %v3537 = vmul.f32 %v2274, %v3366
        %v3538 = vmul.f32 %v2288, %v3368
        %v3539 = vmul.f32 %v2302, %v3370
        %v3540 = vmul.f32 %v2316, %v3372
        %v3541 = vmul.f32 %v2330, %v3374
        %v3542 = vmul.f32 %v2344, %v3376
        %v3543 = vmul.f32 %v2358, %v3378
        %v3544 = vmul.f32 %v2372, %v3380
        %v3545 = vmul.f32 %v2386, %v3382
        %v3546 = vmul.f32 %v2400, %v3384
        %v3547 = vmul.f32 %v2414, %v3386
        %v3548 = vmul.f32 %v2428, %v3388
        %v3549 = vmul.f32 %v2442, %v3390
        %v3550 = vmul.f32 %v2456, %v3392
        %v3551 = vmul.f32 %v2470, %v3394
        %v3552 = vmul.f32 %v2484, %v3396
        %v3553 = vmul.f32 %v2498, %v3398
        %v3554 = vmul.f32 %v2512, %v3400
        %v3555 = vmul.f32 %v2526, %v3402
        %v3556 = vmul.f32 %v2540, %v3404
        %v3557 = vmul.f32 %v2554, %v3406
        %v3558 = vmul.f32 %v2568, %v3408
        %v3559 = vmul.f32 %v2582, %v3410
        %v3560 = vmul.f32 %v2596, %v3412
        %v3561 = vmul.f32 %v2610, %v3414
        %v3562 = vmul.f32 %v2624, %v3416
        %v3563 = vmul.f32 %v2638, %v3418
        %v3564 = vmul.f32 %v2652, %v3420
        %v3565 = vmul.f32 %v2666, %v3422
        %v3566 = vmul.f32 %v2680, %v3424
        %v3567 = vmul.f32 %v2694, %v3426
        %v3568 = vmul.f32 %v2708, %v3428
        %v3569 = vmul.f32 %v2722, %v3430
        %v3570 = vmul.f32 %v2736, %v3432
        %v3571 = vmul.f32 %v2750, %v3434
        %v3572 = vmul.f32 %v2764, %v3436
        %v3573 = vmul.f32 %v2778, %v3438
        %v3574 = vmul.f32 %v2792, %v3440
        %v3575 = vmul.f32 %v2806, %v3442
        %v3576 = vmul.f32 %v2820, %v3444
        %v3577 = vmul.f32 %v2834, %v3446
        %v3578 = vmul.f32 %v2848, %v3448
        %v3579 = vmul.f32 %v2862, %v3450
        %v3580 = vmul.f32 %v2876, %v3452
        %3645 = vrot.lane.b32.xlu0 %v3517, 32
        %v3646 = vpop.permute.xlu0 %3645
        %3647 = vrot.lane.b32.xlu0 %v3518, 32
        %v3648 = vpop.permute.xlu0 %3647
        %3649 = vrot.lane.b32.xlu0 %v3519, 32
        %v3650 = vpop.permute.xlu0 %3649
        %3651 = vrot.lane.b32.xlu0 %v3520, 32
        %v3652 = vpop.permute.xlu0 %3651
        %3653 = vrot.lane.b32.xlu0 %v3521, 32
        %v3654 = vpop.permute.xlu0 %3653
        %3655 = vrot.lane.b32.xlu0 %v3522, 32
        %v3656 = vpop.permute.xlu0 %3655
        %3657 = vrot.lane.b32.xlu0 %v3523, 32
        %v3658 = vpop.permute.xlu0 %3657
        %3659 = vrot.lane.b32.xlu0 %v3524, 32
        %v3660 = vpop.permute.xlu0 %3659
        %3661 = vrot.lane.b32.xlu0 %v3525, 32
        %v3662 = vpop.permute.xlu0 %3661
        %3663 = vrot.lane.b32.xlu0 %v3526, 32
        %v3664 = vpop.permute.xlu0 %3663
        %3665 = vrot.lane.b32.xlu0 %v3527, 32
        %v3666 = vpop.permute.xlu0 %3665
        %3667 = vrot.lane.b32.xlu0 %v3528, 32
        %v3668 = vpop.permute.xlu0 %3667
        %3669 = vrot.lane.b32.xlu0 %v3529, 32
        %v3670 = vpop.permute.xlu0 %3669
        %3671 = vrot.lane.b32.xlu0 %v3530, 32
        %v3672 = vpop.permute.xlu0 %3671
        %3673 = vrot.lane.b32.xlu0 %v3531, 32
        %v3674 = vpop.permute.xlu0 %3673
        %3675 = vrot.lane.b32.xlu0 %v3532, 32
        %v3676 = vpop.permute.xlu0 %3675
        %3677 = vrot.lane.b32.xlu0 %v3533, 32
        %v3678 = vpop.permute.xlu0 %3677
        %3679 = vrot.lane.b32.xlu0 %v3534, 32
        %v3680 = vpop.permute.xlu0 %3679
        %3681 = vrot.lane.b32.xlu0 %v3535, 32
        %v3682 = vpop.permute.xlu0 %3681
        %3683 = vrot.lane.b32.xlu0 %v3536, 32
        %v3684 = vpop.permute.xlu0 %3683
        %3685 = vrot.lane.b32.xlu0 %v3537, 32
        %v3686 = vpop.permute.xlu0 %3685
        %3687 = vrot.lane.b32.xlu0 %v3538, 32
        %v3688 = vpop.permute.xlu0 %3687
        %3689 = vrot.lane.b32.xlu0 %v3539, 32
        %v3690 = vpop.permute.xlu0 %3689
        %3691 = vrot.lane.b32.xlu0 %v3540, 32
        %v3692 = vpop.permute.xlu0 %3691
        %3693 = vrot.lane.b32.xlu0 %v3541, 32
        %v3694 = vpop.permute.xlu0 %3693
        %3695 = vrot.lane.b32.xlu0 %v3542, 32
        %v3696 = vpop.permute.xlu0 %3695
        %3697 = vrot.lane.b32.xlu0 %v3543, 32
        %v3698 = vpop.permute.xlu0 %3697
        %3699 = vrot.lane.b32.xlu0 %v3544, 32
        %v3700 = vpop.permute.xlu0 %3699
        %3701 = vrot.lane.b32.xlu0 %v3545, 32
        %v3702 = vpop.permute.xlu0 %3701
        %3703 = vrot.lane.b32.xlu0 %v3546, 32
        %v3704 = vpop.permute.xlu0 %3703
        %3705 = vrot.lane.b32.xlu0 %v3547, 32
        %v3706 = vpop.permute.xlu0 %3705
        %3707 = vrot.lane.b32.xlu0 %v3548, 32
        %v3708 = vpop.permute.xlu0 %3707
        %3709 = vrot.lane.b32.xlu0 %v3549, 32
        %v3710 = vpop.permute.xlu0 %3709
        %3711 = vrot.lane.b32.xlu0 %v3550, 32
        %v3712 = vpop.permute.xlu0 %3711
        %3713 = vrot.lane.b32.xlu0 %v3551, 32
        %v3714 = vpop.permute.xlu0 %3713
        %3715 = vrot.lane.b32.xlu0 %v3552, 32
        %v3716 = vpop.permute.xlu0 %3715
        %3717 = vrot.lane.b32.xlu0 %v3553, 32
        %v3718 = vpop.permute.xlu0 %3717
        %3719 = vrot.lane.b32.xlu0 %v3554, 32
        %v3720 = vpop.permute.xlu0 %3719
        %3721 = vrot.lane.b32.xlu0 %v3555, 32
        %v3722 = vpop.permute.xlu0 %3721
        %3723 = vrot.lane.b32.xlu0 %v3556, 32
        %v3724 = vpop.permute.xlu0 %3723
        %3725 = vrot.lane.b32.xlu0 %v3557, 32
        %v3726 = vpop.permute.xlu0 %3725
        %3727 = vrot.lane.b32.xlu0 %v3558, 32
        %v3728 = vpop.permute.xlu0 %3727
        %3729 = vrot.lane.b32.xlu0 %v3559, 32
        %v3730 = vpop.permute.xlu0 %3729
        %3731 = vrot.lane.b32.xlu0 %v3560, 32
        %v3732 = vpop.permute.xlu0 %3731
        %3733 = vrot.lane.b32.xlu0 %v3561, 32
        %v3734 = vpop.permute.xlu0 %3733
        %3735 = vrot.lane.b32.xlu0 %v3562, 32
        %v3736 = vpop.permute.xlu0 %3735
        %3737 = vrot.lane.b32.xlu0 %v3563, 32
        %v3738 = vpop.permute.xlu0 %3737
        %3739 = vrot.lane.b32.xlu0 %v3564, 32
        %v3740 = vpop.permute.xlu0 %3739
        %3741 = vrot.lane.b32.xlu0 %v3565, 32
        %v3742 = vpop.permute.xlu0 %3741
        %3743 = vrot.lane.b32.xlu0 %v3566, 32
        %v3744 = vpop.permute.xlu0 %3743
        %3745 = vrot.lane.b32.xlu0 %v3567, 32
        %v3746 = vpop.permute.xlu0 %3745
        %3747 = vrot.lane.b32.xlu0 %v3568, 32
        %v3748 = vpop.permute.xlu0 %3747
        %3749 = vrot.lane.b32.xlu0 %v3569, 32
        %v3750 = vpop.permute.xlu0 %3749
        %3751 = vrot.lane.b32.xlu0 %v3570, 32
        %v3752 = vpop.permute.xlu0 %3751
        %3753 = vrot.lane.b32.xlu0 %v3571, 32
        %v3754 = vpop.permute.xlu0 %3753
        %3755 = vrot.lane.b32.xlu0 %v3572, 32
        %v3756 = vpop.permute.xlu0 %3755
        %3757 = vrot.lane.b32.xlu0 %v3573, 32
        %v3758 = vpop.permute.xlu0 %3757
        %3759 = vrot.lane.b32.xlu0 %v3574, 32
        %v3760 = vpop.permute.xlu0 %3759
        %3761 = vrot.lane.b32.xlu0 %v3575, 32
        %v3762 = vpop.permute.xlu0 %3761
        %3763 = vrot.lane.b32.xlu0 %v3576, 32
        %v3764 = vpop.permute.xlu0 %3763
        %3765 = vrot.lane.b32.xlu0 %v3577, 32
        %v3766 = vpop.permute.xlu0 %3765
        %3767 = vrot.lane.b32.xlu0 %v3578, 32
        %v3768 = vpop.permute.xlu0 %3767
        %3769 = vrot.lane.b32.xlu0 %v3579, 32
        %v3770 = vpop.permute.xlu0 %3769
        %3771 = vrot.lane.b32.xlu0 %v3580, 32
        %v3772 = vpop.permute.xlu0 %3771
        %v3837 = vadd.f32 %v3197, %v3646
        %v3838 = vadd.f32 %v3198, %v3648
        %v3839 = vadd.f32 %v3199, %v3650
        %v3840 = vadd.f32 %v3200, %v3652
        %v3841 = vadd.f32 %v3201, %v3654
        %v3842 = vadd.f32 %v3202, %v3656
        %v3843 = vadd.f32 %v3203, %v3658
        %v3844 = vadd.f32 %v3204, %v3660
        %v3845 = vadd.f32 %v3205, %v3662
        %v3846 = vadd.f32 %v3206, %v3664
        %v3847 = vadd.f32 %v3207, %v3666
        %v3848 = vadd.f32 %v3208, %v3668
        %v3849 = vadd.f32 %v3209, %v3670
        %v3850 = vadd.f32 %v3210, %v3672
        %v3851 = vadd.f32 %v3211, %v3674
        %v3852 = vadd.f32 %v3212, %v3676
        %v3853 = vadd.f32 %v3213, %v3678
        %v3854 = vadd.f32 %v3214, %v3680
        %v3855 = vadd.f32 %v3215, %v3682
        %v3856 = vadd.f32 %v3216, %v3684
        %v3857 = vadd.f32 %v3217, %v3686
        %v3858 = vadd.f32 %v3218, %v3688
        %v3859 = vadd.f32 %v3219, %v3690
        %v3860 = vadd.f32 %v3220, %v3692
        %v3861 = vadd.f32 %v3221, %v3694
        %v3862 = vadd.f32 %v3222, %v3696
        %v3863 = vadd.f32 %v3223, %v3698
        %v3864 = vadd.f32 %v3224, %v3700
        %v3865 = vadd.f32 %v3225, %v3702
        %v3866 = vadd.f32 %v3226, %v3704
        %v3867 = vadd.f32 %v3227, %v3706
        %v3868 = vadd.f32 %v3228, %v3708
        %v3869 = vadd.f32 %v3229, %v3710
        %v3870 = vadd.f32 %v3230, %v3712
        %v3871 = vadd.f32 %v3231, %v3714
        %v3872 = vadd.f32 %v3232, %v3716
        %v3873 = vadd.f32 %v3233, %v3718
        %v3874 = vadd.f32 %v3234, %v3720
        %v3875 = vadd.f32 %v3235, %v3722
        %v3876 = vadd.f32 %v3236, %v3724
        %v3877 = vadd.f32 %v3237, %v3726
        %v3878 = vadd.f32 %v3238, %v3728
        %v3879 = vadd.f32 %v3239, %v3730
        %v3880 = vadd.f32 %v3240, %v3732
        %v3881 = vadd.f32 %v3241, %v3734
        %v3882 = vadd.f32 %v3242, %v3736
        %v3883 = vadd.f32 %v3243, %v3738
        %v3884 = vadd.f32 %v3244, %v3740
        %v3885 = vadd.f32 %v3245, %v3742
        %v3886 = vadd.f32 %v3246, %v3744
        %v3887 = vadd.f32 %v3247, %v3746
        %v3888 = vadd.f32 %v3248, %v3748
        %v3889 = vadd.f32 %v3249, %v3750
        %v3890 = vadd.f32 %v3250, %v3752
        %v3891 = vadd.f32 %v3251, %v3754
        %v3892 = vadd.f32 %v3252, %v3756
        %v3893 = vadd.f32 %v3253, %v3758
        %v3894 = vadd.f32 %v3254, %v3760
        %v3895 = vadd.f32 %v3255, %v3762
        %v3896 = vadd.f32 %v3256, %v3764
        %v3897 = vadd.f32 %v3257, %v3766
        %v3898 = vadd.f32 %v3258, %v3768
        %v3899 = vadd.f32 %v3259, %v3770
        %v3900 = vadd.f32 %v3260, %v3772
        %v3901 = vtanh.pop %v3837
        %v3902 = vtanh.pop %v3838
        %v3903 = vtanh.pop %v3839
        %v3904 = vtanh.pop %v3840
        %v3905 = vtanh.pop %v3841
        %v3906 = vtanh.pop %v3842
        %v3907 = vtanh.pop %v3843
        %v3908 = vtanh.pop %v3844
        %v3909 = vtanh.pop %v3845
        %v3910 = vtanh.pop %v3846
        %v3911 = vtanh.pop %v3847
        %v3912 = vtanh.pop %v3848
        %v3913 = vtanh.pop %v3849
        %v3914 = vtanh.pop %v3850
        %v3915 = vtanh.pop %v3851
        %v3916 = vtanh.pop %v3852
        %v3917 = vtanh.pop %v3853
        %v3918 = vtanh.pop %v3854
        %v3919 = vtanh.pop %v3855
        %v3920 = vtanh.pop %v3856
        %v3921 = vtanh.pop %v3857
        %v3922 = vtanh.pop %v3858
        %v3923 = vtanh.pop %v3859
        %v3924 = vtanh.pop %v3860
        %v3925 = vtanh.pop %v3861
        %v3926 = vtanh.pop %v3862
        %v3927 = vtanh.pop %v3863
        %v3928 = vtanh.pop %v3864
        %v3929 = vtanh.pop %v3865
        %v3930 = vtanh.pop %v3866
        %v3931 = vtanh.pop %v3867
        %v3932 = vtanh.pop %v3868
        %v3933 = vtanh.pop %v3869
        %v3934 = vtanh.pop %v3870
        %v3935 = vtanh.pop %v3871
        %v3936 = vtanh.pop %v3872
        %v3937 = vtanh.pop %v3873
        %v3938 = vtanh.pop %v3874
        %v3939 = vtanh.pop %v3875
        %v3940 = vtanh.pop %v3876
        %v3941 = vtanh.pop %v3877
        %v3942 = vtanh.pop %v3878
        %v3943 = vtanh.pop %v3879
        %v3944 = vtanh.pop %v3880
        %v3945 = vtanh.pop %v3881
        %v3946 = vtanh.pop %v3882
        %v3947 = vtanh.pop %v3883
        %v3948 = vtanh.pop %v3884
        %v3949 = vtanh.pop %v3885
        %v3950 = vtanh.pop %v3886
        %v3951 = vtanh.pop %v3887
        %v3952 = vtanh.pop %v3888
        %v3953 = vtanh.pop %v3889
        %v3954 = vtanh.pop %v3890
        %v3955 = vtanh.pop %v3891
        %v3956 = vtanh.pop %v3892
        %v3957 = vtanh.pop %v3893
        %v3958 = vtanh.pop %v3894
        %v3959 = vtanh.pop %v3895
        %v3960 = vtanh.pop %v3896
        %v3961 = vtanh.pop %v3897
        %v3962 = vtanh.pop %v3898
        %v3963 = vtanh.pop %v3899
        %v3964 = vtanh.pop %v3900
        %4029 = vrot.lane.b32.xlu0 %v3901, 32
        %v4030 = vpop.permute.xlu0 %4029
        %4031 = vrot.lane.b32.xlu0 %v3902, 32
        %v4032 = vpop.permute.xlu0 %4031
        %4033 = vrot.lane.b32.xlu0 %v3903, 32
        %v4034 = vpop.permute.xlu0 %4033
        %4035 = vrot.lane.b32.xlu0 %v3904, 32
        %v4036 = vpop.permute.xlu0 %4035
        %4037 = vrot.lane.b32.xlu0 %v3905, 32
        %v4038 = vpop.permute.xlu0 %4037
        %4039 = vrot.lane.b32.xlu0 %v3906, 32
        %v4040 = vpop.permute.xlu0 %4039
        %4041 = vrot.lane.b32.xlu0 %v3907, 32
        %v4042 = vpop.permute.xlu0 %4041
        %4043 = vrot.lane.b32.xlu0 %v3908, 32
        %v4044 = vpop.permute.xlu0 %4043
        %4045 = vrot.lane.b32.xlu0 %v3909, 32
        %v4046 = vpop.permute.xlu0 %4045
        %4047 = vrot.lane.b32.xlu0 %v3910, 32
        %v4048 = vpop.permute.xlu0 %4047
        %4049 = vrot.lane.b32.xlu0 %v3911, 32
        %v4050 = vpop.permute.xlu0 %4049
        %4051 = vrot.lane.b32.xlu0 %v3912, 32
        %v4052 = vpop.permute.xlu0 %4051
        %4053 = vrot.lane.b32.xlu0 %v3913, 32
        %v4054 = vpop.permute.xlu0 %4053
        %4055 = vrot.lane.b32.xlu0 %v3914, 32
        %v4056 = vpop.permute.xlu0 %4055
        %4057 = vrot.lane.b32.xlu0 %v3915, 32
        %v4058 = vpop.permute.xlu0 %4057
        %4059 = vrot.lane.b32.xlu0 %v3916, 32
        %v4060 = vpop.permute.xlu0 %4059
        %4061 = vrot.lane.b32.xlu0 %v3917, 32
        %v4062 = vpop.permute.xlu0 %4061
        %4063 = vrot.lane.b32.xlu0 %v3918, 32
        %v4064 = vpop.permute.xlu0 %4063
        %4065 = vrot.lane.b32.xlu0 %v3919, 32
        %v4066 = vpop.permute.xlu0 %4065
        %4067 = vrot.lane.b32.xlu0 %v3920, 32
        %v4068 = vpop.permute.xlu0 %4067
        %4069 = vrot.lane.b32.xlu0 %v3921, 32
        %v4070 = vpop.permute.xlu0 %4069
        %4071 = vrot.lane.b32.xlu0 %v3922, 32
        %v4072 = vpop.permute.xlu0 %4071
        %4073 = vrot.lane.b32.xlu0 %v3923, 32
        %v4074 = vpop.permute.xlu0 %4073
        %4075 = vrot.lane.b32.xlu0 %v3924, 32
        %v4076 = vpop.permute.xlu0 %4075
        %4077 = vrot.lane.b32.xlu0 %v3925, 32
        %v4078 = vpop.permute.xlu0 %4077
        %4079 = vrot.lane.b32.xlu0 %v3926, 32
        %v4080 = vpop.permute.xlu0 %4079
        %4081 = vrot.lane.b32.xlu0 %v3927, 32
        %v4082 = vpop.permute.xlu0 %4081
        %4083 = vrot.lane.b32.xlu0 %v3928, 32
        %v4084 = vpop.permute.xlu0 %4083
        %4085 = vrot.lane.b32.xlu0 %v3929, 32
        %v4086 = vpop.permute.xlu0 %4085
        %4087 = vrot.lane.b32.xlu0 %v3930, 32
        %v4088 = vpop.permute.xlu0 %4087
        %4089 = vrot.lane.b32.xlu0 %v3931, 32
        %v4090 = vpop.permute.xlu0 %4089
        %4091 = vrot.lane.b32.xlu0 %v3932, 32
        %v4092 = vpop.permute.xlu0 %4091
        %4093 = vrot.lane.b32.xlu0 %v3933, 32
        %v4094 = vpop.permute.xlu0 %4093
        %4095 = vrot.lane.b32.xlu0 %v3934, 32
        %v4096 = vpop.permute.xlu0 %4095
        %4097 = vrot.lane.b32.xlu0 %v3935, 32
        %v4098 = vpop.permute.xlu0 %4097
        %4099 = vrot.lane.b32.xlu0 %v3936, 32
        %v4100 = vpop.permute.xlu0 %4099
        %4101 = vrot.lane.b32.xlu0 %v3937, 32
        %v4102 = vpop.permute.xlu0 %4101
        %4103 = vrot.lane.b32.xlu0 %v3938, 32
        %v4104 = vpop.permute.xlu0 %4103
        %4105 = vrot.lane.b32.xlu0 %v3939, 32
        %v4106 = vpop.permute.xlu0 %4105
        %4107 = vrot.lane.b32.xlu0 %v3940, 32
        %v4108 = vpop.permute.xlu0 %4107
        %4109 = vrot.lane.b32.xlu0 %v3941, 32
        %v4110 = vpop.permute.xlu0 %4109
        %4111 = vrot.lane.b32.xlu0 %v3942, 32
        %v4112 = vpop.permute.xlu0 %4111
        %4113 = vrot.lane.b32.xlu0 %v3943, 32
        %v4114 = vpop.permute.xlu0 %4113
        %4115 = vrot.lane.b32.xlu0 %v3944, 32
        %v4116 = vpop.permute.xlu0 %4115
        %4117 = vrot.lane.b32.xlu0 %v3945, 32
        %v4118 = vpop.permute.xlu0 %4117
        %4119 = vrot.lane.b32.xlu0 %v3946, 32
        %v4120 = vpop.permute.xlu0 %4119
        %4121 = vrot.lane.b32.xlu0 %v3947, 32
        %v4122 = vpop.permute.xlu0 %4121
        %4123 = vrot.lane.b32.xlu0 %v3948, 32
        %v4124 = vpop.permute.xlu0 %4123
        %4125 = vrot.lane.b32.xlu0 %v3949, 32
        %v4126 = vpop.permute.xlu0 %4125
        %4127 = vrot.lane.b32.xlu0 %v3950, 32
        %v4128 = vpop.permute.xlu0 %4127
        %4129 = vrot.lane.b32.xlu0 %v3951, 32
        %v4130 = vpop.permute.xlu0 %4129
        %4131 = vrot.lane.b32.xlu0 %v3952, 32
        %v4132 = vpop.permute.xlu0 %4131
        %4133 = vrot.lane.b32.xlu0 %v3953, 32
        %v4134 = vpop.permute.xlu0 %4133
        %4135 = vrot.lane.b32.xlu0 %v3954, 32
        %v4136 = vpop.permute.xlu0 %4135
        %4137 = vrot.lane.b32.xlu0 %v3955, 32
        %v4138 = vpop.permute.xlu0 %4137
        %4139 = vrot.lane.b32.xlu0 %v3956, 32
        %v4140 = vpop.permute.xlu0 %4139
        %4141 = vrot.lane.b32.xlu0 %v3957, 32
        %v4142 = vpop.permute.xlu0 %4141
        %4143 = vrot.lane.b32.xlu0 %v3958, 32
        %v4144 = vpop.permute.xlu0 %4143
        %4145 = vrot.lane.b32.xlu0 %v3959, 32
        %v4146 = vpop.permute.xlu0 %4145
        %4147 = vrot.lane.b32.xlu0 %v3960, 32
        %v4148 = vpop.permute.xlu0 %4147
        %4149 = vrot.lane.b32.xlu0 %v3961, 32
        %v4150 = vpop.permute.xlu0 %4149
        %4151 = vrot.lane.b32.xlu0 %v3962, 32
        %v4152 = vpop.permute.xlu0 %4151
        %4153 = vrot.lane.b32.xlu0 %v3963, 32
        %v4154 = vpop.permute.xlu0 %4153
        %4155 = vrot.lane.b32.xlu0 %v3964, 32
        %v4156 = vpop.permute.xlu0 %4155
        %v4221 = vmul.f32 %v1994, %v4030
        %v4222 = vmul.f32 %v2008, %v4032
        %v4223 = vmul.f32 %v2022, %v4034
        %v4224 = vmul.f32 %v2036, %v4036
        %v4225 = vmul.f32 %v2050, %v4038
        %v4226 = vmul.f32 %v2064, %v4040
        %v4227 = vmul.f32 %v2078, %v4042
        %v4228 = vmul.f32 %v2092, %v4044
        %v4229 = vmul.f32 %v2106, %v4046
        %v4230 = vmul.f32 %v2120, %v4048
        %v4231 = vmul.f32 %v2134, %v4050
        %v4232 = vmul.f32 %v2148, %v4052
        %v4233 = vmul.f32 %v2162, %v4054
        %v4234 = vmul.f32 %v2176, %v4056
        %v4235 = vmul.f32 %v2190, %v4058
        %v4236 = vmul.f32 %v2204, %v4060
        %v4237 = vmul.f32 %v2218, %v4062
        %v4238 = vmul.f32 %v2232, %v4064
        %v4239 = vmul.f32 %v2246, %v4066
        %v4240 = vmul.f32 %v2260, %v4068
        %v4241 = vmul.f32 %v2274, %v4070
        %v4242 = vmul.f32 %v2288, %v4072
        %v4243 = vmul.f32 %v2302, %v4074
        %v4244 = vmul.f32 %v2316, %v4076
        %v4245 = vmul.f32 %v2330, %v4078
        %v4246 = vmul.f32 %v2344, %v4080
        %v4247 = vmul.f32 %v2358, %v4082
        %v4248 = vmul.f32 %v2372, %v4084
        %v4249 = vmul.f32 %v2386, %v4086
        %v4250 = vmul.f32 %v2400, %v4088
        %v4251 = vmul.f32 %v2414, %v4090
        %v4252 = vmul.f32 %v2428, %v4092
        %v4253 = vmul.f32 %v2442, %v4094
        %v4254 = vmul.f32 %v2456, %v4096
        %v4255 = vmul.f32 %v2470, %v4098
        %v4256 = vmul.f32 %v2484, %v4100
        %v4257 = vmul.f32 %v2498, %v4102
        %v4258 = vmul.f32 %v2512, %v4104
        %v4259 = vmul.f32 %v2526, %v4106
        %v4260 = vmul.f32 %v2540, %v4108
        %v4261 = vmul.f32 %v2554, %v4110
        %v4262 = vmul.f32 %v2568, %v4112
        %v4263 = vmul.f32 %v2582, %v4114
        %v4264 = vmul.f32 %v2596, %v4116
        %v4265 = vmul.f32 %v2610, %v4118
        %v4266 = vmul.f32 %v2624, %v4120
        %v4267 = vmul.f32 %v2638, %v4122
        %v4268 = vmul.f32 %v2652, %v4124
        %v4269 = vmul.f32 %v2666, %v4126
        %v4270 = vmul.f32 %v2680, %v4128
        %v4271 = vmul.f32 %v2694, %v4130
        %v4272 = vmul.f32 %v2708, %v4132
        %v4273 = vmul.f32 %v2722, %v4134
        %v4274 = vmul.f32 %v2736, %v4136
        %v4275 = vmul.f32 %v2750, %v4138
        %v4276 = vmul.f32 %v2764, %v4140
        %v4277 = vmul.f32 %v2778, %v4142
        %v4278 = vmul.f32 %v2792, %v4144
        %v4279 = vmul.f32 %v2806, %v4146
        %v4280 = vmul.f32 %v2820, %v4148
        %v4281 = vmul.f32 %v2834, %v4150
        %v4282 = vmul.f32 %v2848, %v4152
        %v4283 = vmul.f32 %v2862, %v4154
        %v4284 = vmul.f32 %v2876, %v4156
        %v4285 = vmax.f32 %v4221, 0.0
        %v4286 = vmax.f32 %v4222, 0.0
        %v4287 = vmax.f32 %v4223, 0.0
        %v4288 = vmax.f32 %v4224, 0.0
        %v4289 = vmax.f32 %v4225, 0.0
        %v4290 = vmax.f32 %v4226, 0.0
        %v4291 = vmax.f32 %v4227, 0.0
        %v4292 = vmax.f32 %v4228, 0.0
        %v4293 = vmax.f32 %v4229, 0.0
        %v4294 = vmax.f32 %v4230, 0.0
        %v4295 = vmax.f32 %v4231, 0.0
        %v4296 = vmax.f32 %v4232, 0.0
        %v4297 = vmax.f32 %v4233, 0.0
        %v4298 = vmax.f32 %v4234, 0.0
        %v4299 = vmax.f32 %v4235, 0.0
        %v4300 = vmax.f32 %v4236, 0.0
        %v4301 = vmax.f32 %v4237, 0.0
        %v4302 = vmax.f32 %v4238, 0.0
        %v4303 = vmax.f32 %v4239, 0.0
        %v4304 = vmax.f32 %v4240, 0.0
        %v4305 = vmax.f32 %v4241, 0.0
        %v4306 = vmax.f32 %v4242, 0.0
        %v4307 = vmax.f32 %v4243, 0.0
        %v4308 = vmax.f32 %v4244, 0.0
        %v4309 = vmax.f32 %v4245, 0.0
        %v4310 = vmax.f32 %v4246, 0.0
        %v4311 = vmax.f32 %v4247, 0.0
        %v4312 = vmax.f32 %v4248, 0.0
        %v4313 = vmax.f32 %v4249, 0.0
        %v4314 = vmax.f32 %v4250, 0.0
        %v4315 = vmax.f32 %v4251, 0.0
        %v4316 = vmax.f32 %v4252, 0.0
        %v4317 = vmax.f32 %v4253, 0.0
        %v4318 = vmax.f32 %v4254, 0.0
        %v4319 = vmax.f32 %v4255, 0.0
        %v4320 = vmax.f32 %v4256, 0.0
        %v4321 = vmax.f32 %v4257, 0.0
        %v4322 = vmax.f32 %v4258, 0.0
        %v4323 = vmax.f32 %v4259, 0.0
        %v4324 = vmax.f32 %v4260, 0.0
        %v4325 = vmax.f32 %v4261, 0.0
        %v4326 = vmax.f32 %v4262, 0.0
        %v4327 = vmax.f32 %v4263, 0.0
        %v4328 = vmax.f32 %v4264, 0.0
        %v4329 = vmax.f32 %v4265, 0.0
        %v4330 = vmax.f32 %v4266, 0.0
        %v4331 = vmax.f32 %v4267, 0.0
        %v4332 = vmax.f32 %v4268, 0.0
        %v4333 = vmax.f32 %v4269, 0.0
        %v4334 = vmax.f32 %v4270, 0.0
        %v4335 = vmax.f32 %v4271, 0.0
        %v4336 = vmax.f32 %v4272, 0.0
        %v4337 = vmax.f32 %v4273, 0.0
        %v4338 = vmax.f32 %v4274, 0.0
        %v4339 = vmax.f32 %v4275, 0.0
        %v4340 = vmax.f32 %v4276, 0.0
        %v4341 = vmax.f32 %v4277, 0.0
        %v4342 = vmax.f32 %v4278, 0.0
        %v4343 = vmax.f32 %v4279, 0.0
        %v4344 = vmax.f32 %v4280, 0.0
        %v4345 = vmax.f32 %v4281, 0.0
        %v4346 = vmax.f32 %v4282, 0.0
        %v4347 = vmax.f32 %v4283, 0.0
        %v4348 = vmax.f32 %v4284, 0.0
        %v4349 = vpack.c.bf16 %v4286, %v4285
        %v4350 = vpack.c.bf16 %v4288, %v4287
        %v4351 = vpack.c.bf16 %v4290, %v4289
        %v4352 = vpack.c.bf16 %v4292, %v4291
        %v4353 = vpack.c.bf16 %v4294, %v4293
        %v4354 = vpack.c.bf16 %v4296, %v4295
        %v4355 = vpack.c.bf16 %v4298, %v4297
        %v4356 = vpack.c.bf16 %v4300, %v4299
        %v4357 = vpack.c.bf16 %v4302, %v4301
        %v4358 = vpack.c.bf16 %v4304, %v4303
        %v4359 = vpack.c.bf16 %v4306, %v4305
        %v4360 = vpack.c.bf16 %v4308, %v4307
        %v4361 = vpack.c.bf16 %v4310, %v4309
        %v4362 = vpack.c.bf16 %v4312, %v4311
        %v4363 = vpack.c.bf16 %v4314, %v4313
        %v4364 = vpack.c.bf16 %v4316, %v4315
        %v4365 = vpack.c.bf16 %v4318, %v4317
        %v4366 = vpack.c.bf16 %v4320, %v4319
        %v4367 = vpack.c.bf16 %v4322, %v4321
        %v4368 = vpack.c.bf16 %v4324, %v4323
        %v4369 = vpack.c.bf16 %v4326, %v4325
        %v4370 = vpack.c.bf16 %v4328, %v4327
        %v4371 = vpack.c.bf16 %v4330, %v4329
        %v4372 = vpack.c.bf16 %v4332, %v4331
        %v4373 = vpack.c.bf16 %v4334, %v4333
        %v4374 = vpack.c.bf16 %v4336, %v4335
        %v4375 = vpack.c.bf16 %v4338, %v4337
        %v4376 = vpack.c.bf16 %v4340, %v4339
        %v4377 = vpack.c.bf16 %v4342, %v4341
        %v4378 = vpack.c.bf16 %v4344, %v4343
        %v4379 = vpack.c.bf16 %v4346, %v4345
        %v4380 = vpack.c.bf16 %v4348, %v4347
        %v4381 = vld [vmem:[%s6] sm:$0xf]
        %v4382 = vld [vmem:[%s6 + $0x4] sm:$0xf]
        %v4383 = vld [vmem:[%s6 + $0x8] sm:$0xf]
        %v4384 = vld [vmem:[%s6 + $0xc] sm:$0xf]
        %v4385 = vld [vmem:[%s7] sm:$0x1]
        %v4387 = vperm.slane %v4385, 0
        %4421 = vrot.lane.b32.xlu0 %v4349, 64
        %v4422 = vpop.permute.xlu0 %4421
        %4423 = vrot.lane.b32.xlu0 %v4350, 64
        %v4424 = vpop.permute.xlu0 %4423
        %4425 = vrot.lane.b32.xlu0 %v4351, 64
        %v4426 = vpop.permute.xlu0 %4425
        %4427 = vrot.lane.b32.xlu0 %v4352, 64
        %v4428 = vpop.permute.xlu0 %4427
        %4429 = vrot.lane.b32.xlu0 %v4353, 64
        %v4430 = vpop.permute.xlu0 %4429
        %4431 = vrot.lane.b32.xlu0 %v4354, 64
        %v4432 = vpop.permute.xlu0 %4431
        %4433 = vrot.lane.b32.xlu0 %v4355, 64
        %v4434 = vpop.permute.xlu0 %4433
        %4435 = vrot.lane.b32.xlu0 %v4356, 64
        %v4436 = vpop.permute.xlu0 %4435
        %4437 = vrot.lane.b32.xlu0 %v4357, 64
        %v4438 = vpop.permute.xlu0 %4437
        %4439 = vrot.lane.b32.xlu0 %v4358, 64
        %v4440 = vpop.permute.xlu0 %4439
        %4441 = vrot.lane.b32.xlu0 %v4359, 64
        %v4442 = vpop.permute.xlu0 %4441
        %4443 = vrot.lane.b32.xlu0 %v4360, 64
        %v4444 = vpop.permute.xlu0 %4443
        %4445 = vrot.lane.b32.xlu0 %v4361, 64
        %v4446 = vpop.permute.xlu0 %4445
        %4447 = vrot.lane.b32.xlu0 %v4362, 64
        %v4448 = vpop.permute.xlu0 %4447
        %4449 = vrot.lane.b32.xlu0 %v4363, 64
        %v4450 = vpop.permute.xlu0 %4449
        %4451 = vrot.lane.b32.xlu0 %v4364, 64
        %v4452 = vpop.permute.xlu0 %4451
        %4453 = vrot.lane.b32.xlu0 %v4365, 64
        %v4454 = vpop.permute.xlu0 %4453
        %4455 = vrot.lane.b32.xlu0 %v4366, 64
        %v4456 = vpop.permute.xlu0 %4455
        %4457 = vrot.lane.b32.xlu0 %v4367, 64
        %v4458 = vpop.permute.xlu0 %4457
        %4459 = vrot.lane.b32.xlu0 %v4368, 64
        %v4460 = vpop.permute.xlu0 %4459
        %4461 = vrot.lane.b32.xlu0 %v4369, 64
        %v4462 = vpop.permute.xlu0 %4461
        %4463 = vrot.lane.b32.xlu0 %v4370, 64
        %v4464 = vpop.permute.xlu0 %4463
        %4465 = vrot.lane.b32.xlu0 %v4371, 64
        %v4466 = vpop.permute.xlu0 %4465
        %4467 = vrot.lane.b32.xlu0 %v4372, 64
        %v4468 = vpop.permute.xlu0 %4467
        %4469 = vrot.lane.b32.xlu0 %v4373, 64
        %v4470 = vpop.permute.xlu0 %4469
        %4471 = vrot.lane.b32.xlu0 %v4374, 64
        %v4472 = vpop.permute.xlu0 %4471
        %4473 = vrot.lane.b32.xlu0 %v4375, 64
        %v4474 = vpop.permute.xlu0 %4473
        %4475 = vrot.lane.b32.xlu0 %v4376, 64
        %v4476 = vpop.permute.xlu0 %4475
        %4477 = vrot.lane.b32.xlu0 %v4377, 64
        %v4478 = vpop.permute.xlu0 %4477
        %4479 = vrot.lane.b32.xlu0 %v4378, 64
        %v4480 = vpop.permute.xlu0 %4479
        %4481 = vrot.lane.b32.xlu0 %v4379, 64
        %v4482 = vpop.permute.xlu0 %4481
        %4483 = vrot.lane.b32.xlu0 %v4380, 64
        %v4484 = vpop.permute.xlu0 %4483
        %v4489 = vunpack.c.l.b16 %v4381
        %v4490 = vunpack.c.l.b16 %v4382
        %v4491 = vunpack.c.l.b16 %v4383
        %v4492 = vunpack.c.l.b16 %v4384
        %v4493 = vpack.c.b16 %v4490, %v4489
        %v4494 = vpack.c.b16 %v4492, %v4491
        %v4498 = vsel %vm886, %v4422, 0
        %v4501 = vsel %vm886, %v4424, 0
        %v4504 = vsel %vm886, %v4426, 0
        %v4507 = vsel %vm886, %v4428, 0
        %v4510 = vsel %vm886, %v4430, 0
        %v4513 = vsel %vm886, %v4432, 0
        %v4516 = vsel %vm886, %v4434, 0
        %v4519 = vsel %vm886, %v4436, 0
        %v4522 = vsel %vm886, %v4438, 0
        %v4525 = vsel %vm886, %v4440, 0
        %v4528 = vsel %vm886, %v4442, 0
        %v4531 = vsel %vm886, %v4444, 0
        %v4534 = vsel %vm886, %v4446, 0
        %v4537 = vsel %vm886, %v4448, 0
        %v4540 = vsel %vm886, %v4450, 0
        %v4543 = vsel %vm886, %v4452, 0
        %v4546 = vsel %vm886, %v4454, 0
        %v4549 = vsel %vm886, %v4456, 0
        %v4552 = vsel %vm886, %v4458, 0
        %v4555 = vsel %vm886, %v4460, 0
        %v4558 = vsel %vm886, %v4462, 0
        %v4561 = vsel %vm886, %v4464, 0
        %v4564 = vsel %vm886, %v4466, 0
        %v4567 = vsel %vm886, %v4468, 0
        %v4570 = vsel %vm886, %v4470, 0
        %v4573 = vsel %vm886, %v4472, 0
        %v4576 = vsel %vm886, %v4474, 0
        %v4579 = vsel %vm886, %v4476, 0
        %v4582 = vsel %vm886, %v4478, 0
        %v4585 = vsel %vm886, %v4480, 0
        %v4588 = vsel %vm886, %v4482, 0
        %v4591 = vsel %vm886, %v4484, 0
        %4593 = vmatpush.bf16.msra.mxu0 0
        %4594 = vmatpush.bf16.msra.mxu0 0
        %4595 = vmatpush.bf16.msra.mxu0 0
        %4596 = vmatpush.bf16.msra.mxu0 0
        %4597 = vmatpush.bf16.msra.mxu0 0
        %4598 = vmatpush.bf16.msra.mxu0 0
        %4599 = vmatpush.bf16.msra.mxu0 %v4494
        %4600 = vmatpush.bf16.msra.mxu0 %v4493
        %4601 = vmatmul.bf16.gmra.mxu0 %v4498
        %v4602 = vpop.f32.mrf.mxu0
        %v4603 = vadd.f32 %v4387, %v4602
        %v4604 = vpop.f32.mrf.mxu0
        %v4605 = vadd.f32 %v4387, %v4604
        %4606 = vmatmul.bf16.gmra.mxu0 %v4501
        %v4607 = vpop.f32.mrf.mxu0
        %v4608 = vadd.f32 %v4387, %v4607
        %v4609 = vpop.f32.mrf.mxu0
        %v4610 = vadd.f32 %v4387, %v4609
        %4611 = vmatmul.bf16.gmra.mxu0 %v4504
        %v4612 = vpop.f32.mrf.mxu0
        %v4613 = vadd.f32 %v4387, %v4612
        %v4614 = vpop.f32.mrf.mxu0
        %v4615 = vadd.f32 %v4387, %v4614
        %4616 = vmatmul.bf16.gmra.mxu0 %v4507
        %v4617 = vpop.f32.mrf.mxu0
        %v4618 = vadd.f32 %v4387, %v4617
        %v4619 = vpop.f32.mrf.mxu0
        %v4620 = vadd.f32 %v4387, %v4619
        %4621 = vmatmul.bf16.gmra.mxu0 %v4510
        %v4622 = vpop.f32.mrf.mxu0
        %v4623 = vadd.f32 %v4387, %v4622
        %v4624 = vpop.f32.mrf.mxu0
        %v4625 = vadd.f32 %v4387, %v4624
        %4626 = vmatmul.bf16.gmra.mxu0 %v4513
        %v4627 = vpop.f32.mrf.mxu0
        %v4628 = vadd.f32 %v4387, %v4627
        %v4629 = vpop.f32.mrf.mxu0
        %v4630 = vadd.f32 %v4387, %v4629
        %4631 = vmatmul.bf16.gmra.mxu0 %v4516
        %v4632 = vpop.f32.mrf.mxu0
        %v4633 = vadd.f32 %v4387, %v4632
        %v4634 = vpop.f32.mrf.mxu0
        %v4635 = vadd.f32 %v4387, %v4634
        %4636 = vmatmul.bf16.gmra.mxu0 %v4519
        %v4637 = vpop.f32.mrf.mxu0
        %v4638 = vadd.f32 %v4387, %v4637
        %v4639 = vpop.f32.mrf.mxu0
        %v4640 = vadd.f32 %v4387, %v4639
        %4641 = vmatmul.bf16.gmra.mxu0 %v4522
        %v4642 = vpop.f32.mrf.mxu0
        %v4643 = vadd.f32 %v4387, %v4642
        %v4644 = vpop.f32.mrf.mxu0
        %v4645 = vadd.f32 %v4387, %v4644
        %4646 = vmatmul.bf16.gmra.mxu0 %v4525
        %v4647 = vpop.f32.mrf.mxu0
        %v4648 = vadd.f32 %v4387, %v4647
        %v4649 = vpop.f32.mrf.mxu0
        %v4650 = vadd.f32 %v4387, %v4649
        %4651 = vmatmul.bf16.gmra.mxu0 %v4528
        %v4652 = vpop.f32.mrf.mxu0
        %v4653 = vadd.f32 %v4387, %v4652
        %v4654 = vpop.f32.mrf.mxu0
        %v4655 = vadd.f32 %v4387, %v4654
        %4656 = vmatmul.bf16.gmra.mxu0 %v4531
        %v4657 = vpop.f32.mrf.mxu0
        %v4658 = vadd.f32 %v4387, %v4657
        %v4659 = vpop.f32.mrf.mxu0
        %v4660 = vadd.f32 %v4387, %v4659
        %4661 = vmatmul.bf16.gmra.mxu0 %v4534
        %v4662 = vpop.f32.mrf.mxu0
        %v4663 = vadd.f32 %v4387, %v4662
        %v4664 = vpop.f32.mrf.mxu0
        %v4665 = vadd.f32 %v4387, %v4664
        %4666 = vmatmul.bf16.gmra.mxu0 %v4537
        %v4667 = vpop.f32.mrf.mxu0
        %v4668 = vadd.f32 %v4387, %v4667
        %v4669 = vpop.f32.mrf.mxu0
        %v4670 = vadd.f32 %v4387, %v4669
        %4671 = vmatmul.bf16.gmra.mxu0 %v4540
        %v4672 = vpop.f32.mrf.mxu0
        %v4673 = vadd.f32 %v4387, %v4672
        %v4674 = vpop.f32.mrf.mxu0
        %v4675 = vadd.f32 %v4387, %v4674
        %4676 = vmatmul.bf16.gmra.mxu0 %v4543
        %v4677 = vpop.f32.mrf.mxu0
        %v4678 = vadd.f32 %v4387, %v4677
        %v4679 = vpop.f32.mrf.mxu0
        %v4680 = vadd.f32 %v4387, %v4679
        %4681 = vmatmul.bf16.gmra.mxu0 %v4546
        %v4682 = vpop.f32.mrf.mxu0
        %v4683 = vadd.f32 %v4387, %v4682
        %v4684 = vpop.f32.mrf.mxu0
        %v4685 = vadd.f32 %v4387, %v4684
        %4686 = vmatmul.bf16.gmra.mxu0 %v4549
        %v4687 = vpop.f32.mrf.mxu0
        %v4688 = vadd.f32 %v4387, %v4687
        %v4689 = vpop.f32.mrf.mxu0
        %v4690 = vadd.f32 %v4387, %v4689
        %4691 = vmatmul.bf16.gmra.mxu0 %v4552
        %v4692 = vpop.f32.mrf.mxu0
        %v4693 = vadd.f32 %v4387, %v4692
        %v4694 = vpop.f32.mrf.mxu0
        %v4695 = vadd.f32 %v4387, %v4694
        %4696 = vmatmul.bf16.gmra.mxu0 %v4555
        %v4697 = vpop.f32.mrf.mxu0
        %v4698 = vadd.f32 %v4387, %v4697
        %v4699 = vpop.f32.mrf.mxu0
        %v4700 = vadd.f32 %v4387, %v4699
        %4701 = vmatmul.bf16.gmra.mxu0 %v4558
        %v4702 = vpop.f32.mrf.mxu0
        %v4703 = vadd.f32 %v4387, %v4702
        %v4704 = vpop.f32.mrf.mxu0
        %v4705 = vadd.f32 %v4387, %v4704
        %4706 = vmatmul.bf16.gmra.mxu0 %v4561
        %v4707 = vpop.f32.mrf.mxu0
        %v4708 = vadd.f32 %v4387, %v4707
        %v4709 = vpop.f32.mrf.mxu0
        %v4710 = vadd.f32 %v4387, %v4709
        %4711 = vmatmul.bf16.gmra.mxu0 %v4564
        %v4712 = vpop.f32.mrf.mxu0
        %v4713 = vadd.f32 %v4387, %v4712
        %v4714 = vpop.f32.mrf.mxu0
        %v4715 = vadd.f32 %v4387, %v4714
        %4716 = vmatmul.bf16.gmra.mxu0 %v4567
        %v4717 = vpop.f32.mrf.mxu0
        %v4718 = vadd.f32 %v4387, %v4717
        %v4719 = vpop.f32.mrf.mxu0
        %v4720 = vadd.f32 %v4387, %v4719
        %4721 = vmatmul.bf16.gmra.mxu0 %v4570
        %v4722 = vpop.f32.mrf.mxu0
        %v4723 = vadd.f32 %v4387, %v4722
        %v4724 = vpop.f32.mrf.mxu0
        %v4725 = vadd.f32 %v4387, %v4724
        %4726 = vmatmul.bf16.gmra.mxu0 %v4573
        %v4727 = vpop.f32.mrf.mxu0
        %v4728 = vadd.f32 %v4387, %v4727
        %v4729 = vpop.f32.mrf.mxu0
        %v4730 = vadd.f32 %v4387, %v4729
        %4731 = vmatmul.bf16.gmra.mxu0 %v4576
        %v4732 = vpop.f32.mrf.mxu0
        %v4733 = vadd.f32 %v4387, %v4732
        %v4734 = vpop.f32.mrf.mxu0
        %v4735 = vadd.f32 %v4387, %v4734
        %4736 = vmatmul.bf16.gmra.mxu0 %v4579
        %v4737 = vpop.f32.mrf.mxu0
        %v4738 = vadd.f32 %v4387, %v4737
        %v4739 = vpop.f32.mrf.mxu0
        %v4740 = vadd.f32 %v4387, %v4739
        %4741 = vmatmul.bf16.gmra.mxu0 %v4582
        %v4742 = vpop.f32.mrf.mxu0
        %v4743 = vadd.f32 %v4387, %v4742
        %v4744 = vpop.f32.mrf.mxu0
        %v4745 = vadd.f32 %v4387, %v4744
        %4746 = vmatmul.bf16.gmra.mxu0 %v4585
        %v4747 = vpop.f32.mrf.mxu0
        %v4748 = vadd.f32 %v4387, %v4747
        %v4749 = vpop.f32.mrf.mxu0
        %v4750 = vadd.f32 %v4387, %v4749
        %4751 = vmatmul.bf16.gmra.mxu0 %v4588
        %v4752 = vpop.f32.mrf.mxu0
        %v4753 = vadd.f32 %v4387, %v4752
        %v4754 = vpop.f32.mrf.mxu0
        %v4755 = vadd.f32 %v4387, %v4754
        %4756 = vmatmul.bf16.gmra.mxu0 %v4591
        %v4757 = vpop.f32.mrf.mxu0
        %v4758 = vadd.f32 %v4387, %v4757
        %v4759 = vpop.f32.mrf.mxu0
        %v4760 = vadd.f32 %v4387, %v4759
        %4761 = vdwg.mxu0
        %4826 = vrot.lane.b32.xlu0 %v4221, 64
        %v4827 = vpop.permute.xlu0 %4826
        %4828 = vrot.lane.b32.xlu0 %v4222, 64
        %v4829 = vpop.permute.xlu0 %4828
        %4830 = vrot.lane.b32.xlu0 %v4223, 64
        %v4831 = vpop.permute.xlu0 %4830
        %4832 = vrot.lane.b32.xlu0 %v4224, 64
        %v4833 = vpop.permute.xlu0 %4832
        %4834 = vrot.lane.b32.xlu0 %v4225, 64
        %v4835 = vpop.permute.xlu0 %4834
        %4836 = vrot.lane.b32.xlu0 %v4226, 64
        %v4837 = vpop.permute.xlu0 %4836
        %4838 = vrot.lane.b32.xlu0 %v4227, 64
        %v4839 = vpop.permute.xlu0 %4838
        %4840 = vrot.lane.b32.xlu0 %v4228, 64
        %v4841 = vpop.permute.xlu0 %4840
        %4842 = vrot.lane.b32.xlu0 %v4229, 64
        %v4843 = vpop.permute.xlu0 %4842
        %4844 = vrot.lane.b32.xlu0 %v4230, 64
        %v4845 = vpop.permute.xlu0 %4844
        %4846 = vrot.lane.b32.xlu0 %v4231, 64
        %v4847 = vpop.permute.xlu0 %4846
        %4848 = vrot.lane.b32.xlu0 %v4232, 64
        %v4849 = vpop.permute.xlu0 %4848
        %4850 = vrot.lane.b32.xlu0 %v4233, 64
        %v4851 = vpop.permute.xlu0 %4850
        %4852 = vrot.lane.b32.xlu0 %v4234, 64
        %v4853 = vpop.permute.xlu0 %4852
        %4854 = vrot.lane.b32.xlu0 %v4235, 64
        %v4855 = vpop.permute.xlu0 %4854
        %4856 = vrot.lane.b32.xlu0 %v4236, 64
        %v4857 = vpop.permute.xlu0 %4856
        %4858 = vrot.lane.b32.xlu0 %v4237, 64
        %v4859 = vpop.permute.xlu0 %4858
        %4860 = vrot.lane.b32.xlu0 %v4238, 64
        %v4861 = vpop.permute.xlu0 %4860
        %4862 = vrot.lane.b32.xlu0 %v4239, 64
        %v4863 = vpop.permute.xlu0 %4862
        %4864 = vrot.lane.b32.xlu0 %v4240, 64
        %v4865 = vpop.permute.xlu0 %4864
        %4866 = vrot.lane.b32.xlu0 %v4241, 64
        %v4867 = vpop.permute.xlu0 %4866
        %4868 = vrot.lane.b32.xlu0 %v4242, 64
        %v4869 = vpop.permute.xlu0 %4868
        %4870 = vrot.lane.b32.xlu0 %v4243, 64
        %v4871 = vpop.permute.xlu0 %4870
        %4872 = vrot.lane.b32.xlu0 %v4244, 64
        %v4873 = vpop.permute.xlu0 %4872
        %4874 = vrot.lane.b32.xlu0 %v4245, 64
        %v4875 = vpop.permute.xlu0 %4874
        %4876 = vrot.lane.b32.xlu0 %v4246, 64
        %v4877 = vpop.permute.xlu0 %4876
        %4878 = vrot.lane.b32.xlu0 %v4247, 64
        %v4879 = vpop.permute.xlu0 %4878
        %4880 = vrot.lane.b32.xlu0 %v4248, 64
        %v4881 = vpop.permute.xlu0 %4880
        %4882 = vrot.lane.b32.xlu0 %v4249, 64
        %v4883 = vpop.permute.xlu0 %4882
        %4884 = vrot.lane.b32.xlu0 %v4250, 64
        %v4885 = vpop.permute.xlu0 %4884
        %4886 = vrot.lane.b32.xlu0 %v4251, 64
        %v4887 = vpop.permute.xlu0 %4886
        %4888 = vrot.lane.b32.xlu0 %v4252, 64
        %v4889 = vpop.permute.xlu0 %4888
        %4890 = vrot.lane.b32.xlu0 %v4253, 64
        %v4891 = vpop.permute.xlu0 %4890
        %4892 = vrot.lane.b32.xlu0 %v4254, 64
        %v4893 = vpop.permute.xlu0 %4892
        %4894 = vrot.lane.b32.xlu0 %v4255, 64
        %v4895 = vpop.permute.xlu0 %4894
        %4896 = vrot.lane.b32.xlu0 %v4256, 64
        %v4897 = vpop.permute.xlu0 %4896
        %4898 = vrot.lane.b32.xlu0 %v4257, 64
        %v4899 = vpop.permute.xlu0 %4898
        %4900 = vrot.lane.b32.xlu0 %v4258, 64
        %v4901 = vpop.permute.xlu0 %4900
        %4902 = vrot.lane.b32.xlu0 %v4259, 64
        %v4903 = vpop.permute.xlu0 %4902
        %4904 = vrot.lane.b32.xlu0 %v4260, 64
        %v4905 = vpop.permute.xlu0 %4904
        %4906 = vrot.lane.b32.xlu0 %v4261, 64
        %v4907 = vpop.permute.xlu0 %4906
        %4908 = vrot.lane.b32.xlu0 %v4262, 64
        %v4909 = vpop.permute.xlu0 %4908
        %4910 = vrot.lane.b32.xlu0 %v4263, 64
        %v4911 = vpop.permute.xlu0 %4910
        %4912 = vrot.lane.b32.xlu0 %v4264, 64
        %v4913 = vpop.permute.xlu0 %4912
        %4914 = vrot.lane.b32.xlu0 %v4265, 64
        %v4915 = vpop.permute.xlu0 %4914
        %4916 = vrot.lane.b32.xlu0 %v4266, 64
        %v4917 = vpop.permute.xlu0 %4916
        %4918 = vrot.lane.b32.xlu0 %v4267, 64
        %v4919 = vpop.permute.xlu0 %4918
        %4920 = vrot.lane.b32.xlu0 %v4268, 64
        %v4921 = vpop.permute.xlu0 %4920
        %4922 = vrot.lane.b32.xlu0 %v4269, 64
        %v4923 = vpop.permute.xlu0 %4922
        %4924 = vrot.lane.b32.xlu0 %v4270, 64
        %v4925 = vpop.permute.xlu0 %4924
        %4926 = vrot.lane.b32.xlu0 %v4271, 64
        %v4927 = vpop.permute.xlu0 %4926
        %4928 = vrot.lane.b32.xlu0 %v4272, 64
        %v4929 = vpop.permute.xlu0 %4928
        %4930 = vrot.lane.b32.xlu0 %v4273, 64
        %v4931 = vpop.permute.xlu0 %4930
        %4932 = vrot.lane.b32.xlu0 %v4274, 64
        %v4933 = vpop.permute.xlu0 %4932
        %4934 = vrot.lane.b32.xlu0 %v4275, 64
        %v4935 = vpop.permute.xlu0 %4934
        %4936 = vrot.lane.b32.xlu0 %v4276, 64
        %v4937 = vpop.permute.xlu0 %4936
        %4938 = vrot.lane.b32.xlu0 %v4277, 64
        %v4939 = vpop.permute.xlu0 %4938
        %4940 = vrot.lane.b32.xlu0 %v4278, 64
        %v4941 = vpop.permute.xlu0 %4940
        %4942 = vrot.lane.b32.xlu0 %v4279, 64
        %v4943 = vpop.permute.xlu0 %4942
        %4944 = vrot.lane.b32.xlu0 %v4280, 64
        %v4945 = vpop.permute.xlu0 %4944
        %4946 = vrot.lane.b32.xlu0 %v4281, 64
        %v4947 = vpop.permute.xlu0 %4946
        %4948 = vrot.lane.b32.xlu0 %v4282, 64
        %v4949 = vpop.permute.xlu0 %4948
        %4950 = vrot.lane.b32.xlu0 %v4283, 64
        %v4951 = vpop.permute.xlu0 %4950
        %4952 = vrot.lane.b32.xlu0 %v4284, 64
        %v4953 = vpop.permute.xlu0 %4952
        %5018 = vst.msk [vmem:[%s423] sm:$0xff] %vm886, %v4827
        %5019 = vst.msk [vmem:[%s423 + $0x8] sm:$0xff] %vm886, %v4829
        %5020 = vst.msk [vmem:[%s423 + $0x10] sm:$0xff] %vm886, %v4831
        %5021 = vst.msk [vmem:[%s423 + $0x18] sm:$0xff] %vm886, %v4833
        %5022 = vst.msk [vmem:[%s423 + $0x20] sm:$0xff] %vm886, %v4835
        %5023 = vst.msk [vmem:[%s423 + $0x28] sm:$0xff] %vm886, %v4837
        %5024 = vst.msk [vmem:[%s423 + $0x30] sm:$0xff] %vm886, %v4839
        %5025 = vst.msk [vmem:[%s423 + $0x38] sm:$0xff] %vm886, %v4841
        %5026 = vst.msk [vmem:[%s423 + $0x40] sm:$0xff] %vm886, %v4843
        %5027 = vst.msk [vmem:[%s423 + $0x48] sm:$0xff] %vm886, %v4845
        %5028 = vst.msk [vmem:[%s423 + $0x50] sm:$0xff] %vm886, %v4847
        %5029 = vst.msk [vmem:[%s423 + $0x58] sm:$0xff] %vm886, %v4849
        %5030 = vst.msk [vmem:[%s423 + $0x60] sm:$0xff] %vm886, %v4851
        %5031 = vst.msk [vmem:[%s423 + $0x68] sm:$0xff] %vm886, %v4853
        %5032 = vst.msk [vmem:[%s423 + $0x70] sm:$0xff] %vm886, %v4855
        %5033 = vst.msk [vmem:[%s423 + $0x78] sm:$0xff] %vm886, %v4857
        %5034 = vst.msk [vmem:[%s423 + $0x80] sm:$0xff] %vm886, %v4859
        %5035 = vst.msk [vmem:[%s423 + $0x88] sm:$0xff] %vm886, %v4861
        %5036 = vst.msk [vmem:[%s423 + $0x90] sm:$0xff] %vm886, %v4863
        %5037 = vst.msk [vmem:[%s423 + $0x98] sm:$0xff] %vm886, %v4865
        %5038 = vst.msk [vmem:[%s423 + $0xa0] sm:$0xff] %vm886, %v4867
        %5039 = vst.msk [vmem:[%s423 + $0xa8] sm:$0xff] %vm886, %v4869
        %5040 = vst.msk [vmem:[%s423 + $0xb0] sm:$0xff] %vm886, %v4871
        %5041 = vst.msk [vmem:[%s423 + $0xb8] sm:$0xff] %vm886, %v4873
        %5042 = vst.msk [vmem:[%s423 + $0xc0] sm:$0xff] %vm886, %v4875
        %5043 = vst.msk [vmem:[%s423 + $0xc8] sm:$0xff] %vm886, %v4877
        %5044 = vst.msk [vmem:[%s423 + $0xd0] sm:$0xff] %vm886, %v4879
        %5045 = vst.msk [vmem:[%s423 + $0xd8] sm:$0xff] %vm886, %v4881
        %5046 = vst.msk [vmem:[%s423 + $0xe0] sm:$0xff] %vm886, %v4883
        %5047 = vst.msk [vmem:[%s423 + $0xe8] sm:$0xff] %vm886, %v4885
        %5048 = vst.msk [vmem:[%s423 + $0xf0] sm:$0xff] %vm886, %v4887
        %5049 = vst.msk [vmem:[%s423 + $0xf8] sm:$0xff] %vm886, %v4889
        %5050 = vst.msk [vmem:[%s423 + $0x100] sm:$0xff] %vm886, %v4891
        %5051 = vst.msk [vmem:[%s423 + $0x108] sm:$0xff] %vm886, %v4893
        %5052 = vst.msk [vmem:[%s423 + $0x110] sm:$0xff] %vm886, %v4895
        %5053 = vst.msk [vmem:[%s423 + $0x118] sm:$0xff] %vm886, %v4897
        %5054 = vst.msk [vmem:[%s423 + $0x120] sm:$0xff] %vm886, %v4899
        %5055 = vst.msk [vmem:[%s423 + $0x128] sm:$0xff] %vm886, %v4901
        %5056 = vst.msk [vmem:[%s423 + $0x130] sm:$0xff] %vm886, %v4903
        %5057 = vst.msk [vmem:[%s423 + $0x138] sm:$0xff] %vm886, %v4905
        %5058 = vst.msk [vmem:[%s423 + $0x140] sm:$0xff] %vm886, %v4907
        %5059 = vst.msk [vmem:[%s423 + $0x148] sm:$0xff] %vm886, %v4909
        %5060 = vst.msk [vmem:[%s423 + $0x150] sm:$0xff] %vm886, %v4911
        %5061 = vst.msk [vmem:[%s423 + $0x158] sm:$0xff] %vm886, %v4913
        %5062 = vst.msk [vmem:[%s423 + $0x160] sm:$0xff] %vm886, %v4915
        %5063 = vst.msk [vmem:[%s423 + $0x168] sm:$0xff] %vm886, %v4917
        %5064 = vst.msk [vmem:[%s423 + $0x170] sm:$0xff] %vm886, %v4919
        %5065 = vst.msk [vmem:[%s423 + $0x178] sm:$0xff] %vm886, %v4921
        %5066 = vst.msk [vmem:[%s423 + $0x180] sm:$0xff] %vm886, %v4923
        %5067 = vst.msk [vmem:[%s423 + $0x188] sm:$0xff] %vm886, %v4925
        %5068 = vst.msk [vmem:[%s423 + $0x190] sm:$0xff] %vm886, %v4927
        %5069 = vst.msk [vmem:[%s423 + $0x198] sm:$0xff] %vm886, %v4929
        %5070 = vst.msk [vmem:[%s423 + $0x1a0] sm:$0xff] %vm886, %v4931
        %5071 = vst.msk [vmem:[%s423 + $0x1a8] sm:$0xff] %vm886, %v4933
        %5072 = vst.msk [vmem:[%s423 + $0x1b0] sm:$0xff] %vm886, %v4935
        %5073 = vst.msk [vmem:[%s423 + $0x1b8] sm:$0xff] %vm886, %v4937
        %5074 = vst.msk [vmem:[%s423 + $0x1c0] sm:$0xff] %vm886, %v4939
        %5075 = vst.msk [vmem:[%s423 + $0x1c8] sm:$0xff] %vm886, %v4941
        %5076 = vst.msk [vmem:[%s423 + $0x1d0] sm:$0xff] %vm886, %v4943
        %5077 = vst.msk [vmem:[%s423 + $0x1d8] sm:$0xff] %vm886, %v4945
        %5078 = vst.msk [vmem:[%s423 + $0x1e0] sm:$0xff] %vm886, %v4947
        %5079 = vst.msk [vmem:[%s423 + $0x1e8] sm:$0xff] %vm886, %v4949
        %5080 = vst.msk [vmem:[%s423 + $0x1f0] sm:$0xff] %vm886, %v4951
        %5081 = vst.msk [vmem:[%s423 + $0x1f8] sm:$0xff] %vm886, %v4953
        %5146 = vrot.lane.b32.xlu0 %v3837, 96
        %v5147 = vpop.permute.xlu0 %5146
        %5148 = vrot.lane.b32.xlu0 %v3838, 96
        %v5149 = vpop.permute.xlu0 %5148
        %5150 = vrot.lane.b32.xlu0 %v3839, 96
        %v5151 = vpop.permute.xlu0 %5150
        %5152 = vrot.lane.b32.xlu0 %v3840, 96
        %v5153 = vpop.permute.xlu0 %5152
        %5154 = vrot.lane.b32.xlu0 %v3841, 96
        %v5155 = vpop.permute.xlu0 %5154
        %5156 = vrot.lane.b32.xlu0 %v3842, 96
        %v5157 = vpop.permute.xlu0 %5156
        %5158 = vrot.lane.b32.xlu0 %v3843, 96
        %v5159 = vpop.permute.xlu0 %5158
        %5160 = vrot.lane.b32.xlu0 %v3844, 96
        %v5161 = vpop.permute.xlu0 %5160
        %5162 = vrot.lane.b32.xlu0 %v3845, 96
        %v5163 = vpop.permute.xlu0 %5162
        %5164 = vrot.lane.b32.xlu0 %v3846, 96
        %v5165 = vpop.permute.xlu0 %5164
        %5166 = vrot.lane.b32.xlu0 %v3847, 96
        %v5167 = vpop.permute.xlu0 %5166
        %5168 = vrot.lane.b32.xlu0 %v3848, 96
        %v5169 = vpop.permute.xlu0 %5168
        %5170 = vrot.lane.b32.xlu0 %v3849, 96
        %v5171 = vpop.permute.xlu0 %5170
        %5172 = vrot.lane.b32.xlu0 %v3850, 96
        %v5173 = vpop.permute.xlu0 %5172
        %5174 = vrot.lane.b32.xlu0 %v3851, 96
        %v5175 = vpop.permute.xlu0 %5174
        %5176 = vrot.lane.b32.xlu0 %v3852, 96
        %v5177 = vpop.permute.xlu0 %5176
        %5178 = vrot.lane.b32.xlu0 %v3853, 96
        %v5179 = vpop.permute.xlu0 %5178
        %5180 = vrot.lane.b32.xlu0 %v3854, 96
        %v5181 = vpop.permute.xlu0 %5180
        %5182 = vrot.lane.b32.xlu0 %v3855, 96
        %v5183 = vpop.permute.xlu0 %5182
        %5184 = vrot.lane.b32.xlu0 %v3856, 96
        %v5185 = vpop.permute.xlu0 %5184
        %5186 = vrot.lane.b32.xlu0 %v3857, 96
        %v5187 = vpop.permute.xlu0 %5186
        %5188 = vrot.lane.b32.xlu0 %v3858, 96
        %v5189 = vpop.permute.xlu0 %5188
        %5190 = vrot.lane.b32.xlu0 %v3859, 96
        %v5191 = vpop.permute.xlu0 %5190
        %5192 = vrot.lane.b32.xlu0 %v3860, 96
        %v5193 = vpop.permute.xlu0 %5192
        %5194 = vrot.lane.b32.xlu0 %v3861, 96
        %v5195 = vpop.permute.xlu0 %5194
        %5196 = vrot.lane.b32.xlu0 %v3862, 96
        %v5197 = vpop.permute.xlu0 %5196
        %5198 = vrot.lane.b32.xlu0 %v3863, 96
        %v5199 = vpop.permute.xlu0 %5198
        %5200 = vrot.lane.b32.xlu0 %v3864, 96
        %v5201 = vpop.permute.xlu0 %5200
        %5202 = vrot.lane.b32.xlu0 %v3865, 96
        %v5203 = vpop.permute.xlu0 %5202
        %5204 = vrot.lane.b32.xlu0 %v3866, 96
        %v5205 = vpop.permute.xlu0 %5204
        %5206 = vrot.lane.b32.xlu0 %v3867, 96
        %v5207 = vpop.permute.xlu0 %5206
        %5208 = vrot.lane.b32.xlu0 %v3868, 96
        %v5209 = vpop.permute.xlu0 %5208
        %5210 = vrot.lane.b32.xlu0 %v3869, 96
        %v5211 = vpop.permute.xlu0 %5210
        %5212 = vrot.lane.b32.xlu0 %v3870, 96
        %v5213 = vpop.permute.xlu0 %5212
        %5214 = vrot.lane.b32.xlu0 %v3871, 96
        %v5215 = vpop.permute.xlu0 %5214
        %5216 = vrot.lane.b32.xlu0 %v3872, 96
        %v5217 = vpop.permute.xlu0 %5216
        %5218 = vrot.lane.b32.xlu0 %v3873, 96
        %v5219 = vpop.permute.xlu0 %5218
        %5220 = vrot.lane.b32.xlu0 %v3874, 96
        %v5221 = vpop.permute.xlu0 %5220
        %5222 = vrot.lane.b32.xlu0 %v3875, 96
        %v5223 = vpop.permute.xlu0 %5222
        %5224 = vrot.lane.b32.xlu0 %v3876, 96
        %v5225 = vpop.permute.xlu0 %5224
        %5226 = vrot.lane.b32.xlu0 %v3877, 96
        %v5227 = vpop.permute.xlu0 %5226
        %5228 = vrot.lane.b32.xlu0 %v3878, 96
        %v5229 = vpop.permute.xlu0 %5228
        %5230 = vrot.lane.b32.xlu0 %v3879, 96
        %v5231 = vpop.permute.xlu0 %5230
        %5232 = vrot.lane.b32.xlu0 %v3880, 96
        %v5233 = vpop.permute.xlu0 %5232
        %5234 = vrot.lane.b32.xlu0 %v3881, 96
        %v5235 = vpop.permute.xlu0 %5234
        %5236 = vrot.lane.b32.xlu0 %v3882, 96
        %v5237 = vpop.permute.xlu0 %5236
        %5238 = vrot.lane.b32.xlu0 %v3883, 96
        %v5239 = vpop.permute.xlu0 %5238
        %5240 = vrot.lane.b32.xlu0 %v3884, 96
        %v5241 = vpop.permute.xlu0 %5240
        %5242 = vrot.lane.b32.xlu0 %v3885, 96
        %v5243 = vpop.permute.xlu0 %5242
        %5244 = vrot.lane.b32.xlu0 %v3886, 96
        %v5245 = vpop.permute.xlu0 %5244
        %5246 = vrot.lane.b32.xlu0 %v3887, 96
        %v5247 = vpop.permute.xlu0 %5246
        %5248 = vrot.lane.b32.xlu0 %v3888, 96
        %v5249 = vpop.permute.xlu0 %5248
        %5250 = vrot.lane.b32.xlu0 %v3889, 96
        %v5251 = vpop.permute.xlu0 %5250
        %5252 = vrot.lane.b32.xlu0 %v3890, 96
        %v5253 = vpop.permute.xlu0 %5252
        %5254 = vrot.lane.b32.xlu0 %v3891, 96
        %v5255 = vpop.permute.xlu0 %5254
        %5256 = vrot.lane.b32.xlu0 %v3892, 96
        %v5257 = vpop.permute.xlu0 %5256
        %5258 = vrot.lane.b32.xlu0 %v3893, 96
        %v5259 = vpop.permute.xlu0 %5258
        %5260 = vrot.lane.b32.xlu0 %v3894, 96
        %v5261 = vpop.permute.xlu0 %5260
        %5262 = vrot.lane.b32.xlu0 %v3895, 96
        %v5263 = vpop.permute.xlu0 %5262
        %5264 = vrot.lane.b32.xlu0 %v3896, 96
        %v5265 = vpop.permute.xlu0 %5264
        %5266 = vrot.lane.b32.xlu0 %v3897, 96
        %v5267 = vpop.permute.xlu0 %5266
        %5268 = vrot.lane.b32.xlu0 %v3898, 96
        %v5269 = vpop.permute.xlu0 %5268
        %5270 = vrot.lane.b32.xlu0 %v3899, 96
        %v5271 = vpop.permute.xlu0 %5270
        %5272 = vrot.lane.b32.xlu0 %v3900, 96
        %v5273 = vpop.permute.xlu0 %5272
        %5338 = vst.msk [vmem:[%s429] sm:$0xff] %vm886, %v5147
        %5339 = vst.msk [vmem:[%s429 + $0x8] sm:$0xff] %vm886, %v5149
        %5340 = vst.msk [vmem:[%s429 + $0x10] sm:$0xff] %vm886, %v5151
        %5341 = vst.msk [vmem:[%s429 + $0x18] sm:$0xff] %vm886, %v5153
        %5342 = vst.msk [vmem:[%s429 + $0x20] sm:$0xff] %vm886, %v5155
        %5343 = vst.msk [vmem:[%s429 + $0x28] sm:$0xff] %vm886, %v5157
        %5344 = vst.msk [vmem:[%s429 + $0x30] sm:$0xff] %vm886, %v5159
        %5345 = vst.msk [vmem:[%s429 + $0x38] sm:$0xff] %vm886, %v5161
        %5346 = vst.msk [vmem:[%s429 + $0x40] sm:$0xff] %vm886, %v5163
        %5347 = vst.msk [vmem:[%s429 + $0x48] sm:$0xff] %vm886, %v5165
        %5348 = vst.msk [vmem:[%s429 + $0x50] sm:$0xff] %vm886, %v5167
        %5349 = vst.msk [vmem:[%s429 + $0x58] sm:$0xff] %vm886, %v5169
        %5350 = vst.msk [vmem:[%s429 + $0x60] sm:$0xff] %vm886, %v5171
        %5351 = vst.msk [vmem:[%s429 + $0x68] sm:$0xff] %vm886, %v5173
        %5352 = vst.msk [vmem:[%s429 + $0x70] sm:$0xff] %vm886, %v5175
        %5353 = vst.msk [vmem:[%s429 + $0x78] sm:$0xff] %vm886, %v5177
        %5354 = vst.msk [vmem:[%s429 + $0x80] sm:$0xff] %vm886, %v5179
        %5355 = vst.msk [vmem:[%s429 + $0x88] sm:$0xff] %vm886, %v5181
        %5356 = vst.msk [vmem:[%s429 + $0x90] sm:$0xff] %vm886, %v5183
        %5357 = vst.msk [vmem:[%s429 + $0x98] sm:$0xff] %vm886, %v5185
        %5358 = vst.msk [vmem:[%s429 + $0xa0] sm:$0xff] %vm886, %v5187
        %5359 = vst.msk [vmem:[%s429 + $0xa8] sm:$0xff] %vm886, %v5189
        %5360 = vst.msk [vmem:[%s429 + $0xb0] sm:$0xff] %vm886, %v5191
        %5361 = vst.msk [vmem:[%s429 + $0xb8] sm:$0xff] %vm886, %v5193
        %5362 = vst.msk [vmem:[%s429 + $0xc0] sm:$0xff] %vm886, %v5195
        %5363 = vst.msk [vmem:[%s429 + $0xc8] sm:$0xff] %vm886, %v5197
        %5364 = vst.msk [vmem:[%s429 + $0xd0] sm:$0xff] %vm886, %v5199
        %5365 = vst.msk [vmem:[%s429 + $0xd8] sm:$0xff] %vm886, %v5201
        %5366 = vst.msk [vmem:[%s429 + $0xe0] sm:$0xff] %vm886, %v5203
        %5367 = vst.msk [vmem:[%s429 + $0xe8] sm:$0xff] %vm886, %v5205
        %5368 = vst.msk [vmem:[%s429 + $0xf0] sm:$0xff] %vm886, %v5207
        %5369 = vst.msk [vmem:[%s429 + $0xf8] sm:$0xff] %vm886, %v5209
        %5370 = vst.msk [vmem:[%s429 + $0x100] sm:$0xff] %vm886, %v5211
        %5371 = vst.msk [vmem:[%s429 + $0x108] sm:$0xff] %vm886, %v5213
        %5372 = vst.msk [vmem:[%s429 + $0x110] sm:$0xff] %vm886, %v5215
        %5373 = vst.msk [vmem:[%s429 + $0x118] sm:$0xff] %vm886, %v5217
        %5374 = vst.msk [vmem:[%s429 + $0x120] sm:$0xff] %vm886, %v5219
        %5375 = vst.msk [vmem:[%s429 + $0x128] sm:$0xff] %vm886, %v5221
        %5376 = vst.msk [vmem:[%s429 + $0x130] sm:$0xff] %vm886, %v5223
        %5377 = vst.msk [vmem:[%s429 + $0x138] sm:$0xff] %vm886, %v5225
        %5378 = vst.msk [vmem:[%s429 + $0x140] sm:$0xff] %vm886, %v5227
        %5379 = vst.msk [vmem:[%s429 + $0x148] sm:$0xff] %vm886, %v5229
        %5380 = vst.msk [vmem:[%s429 + $0x150] sm:$0xff] %vm886, %v5231
        %5381 = vst.msk [vmem:[%s429 + $0x158] sm:$0xff] %vm886, %v5233
        %5382 = vst.msk [vmem:[%s429 + $0x160] sm:$0xff] %vm886, %v5235
        %5383 = vst.msk [vmem:[%s429 + $0x168] sm:$0xff] %vm886, %v5237
        %5384 = vst.msk [vmem:[%s429 + $0x170] sm:$0xff] %vm886, %v5239
        %5385 = vst.msk [vmem:[%s429 + $0x178] sm:$0xff] %vm886, %v5241
        %5386 = vst.msk [vmem:[%s429 + $0x180] sm:$0xff] %vm886, %v5243
        %5387 = vst.msk [vmem:[%s429 + $0x188] sm:$0xff] %vm886, %v5245
        %5388 = vst.msk [vmem:[%s429 + $0x190] sm:$0xff] %vm886, %v5247
        %5389 = vst.msk [vmem:[%s429 + $0x198] sm:$0xff] %vm886, %v5249
        %5390 = vst.msk [vmem:[%s429 + $0x1a0] sm:$0xff] %vm886, %v5251
        %5391 = vst.msk [vmem:[%s429 + $0x1a8] sm:$0xff] %vm886, %v5253
        %5392 = vst.msk [vmem:[%s429 + $0x1b0] sm:$0xff] %vm886, %v5255
        %5393 = vst.msk [vmem:[%s429 + $0x1b8] sm:$0xff] %vm886, %v5257
        %5394 = vst.msk [vmem:[%s429 + $0x1c0] sm:$0xff] %vm886, %v5259
        %5395 = vst.msk [vmem:[%s429 + $0x1c8] sm:$0xff] %vm886, %v5261
        %5396 = vst.msk [vmem:[%s429 + $0x1d0] sm:$0xff] %vm886, %v5263
        %5397 = vst.msk [vmem:[%s429 + $0x1d8] sm:$0xff] %vm886, %v5265
        %5398 = vst.msk [vmem:[%s429 + $0x1e0] sm:$0xff] %vm886, %v5267
        %5399 = vst.msk [vmem:[%s429 + $0x1e8] sm:$0xff] %vm886, %v5269
        %5400 = vst.msk [vmem:[%s429 + $0x1f0] sm:$0xff] %vm886, %v5271
        %5401 = vst.msk [vmem:[%s429 + $0x1f8] sm:$0xff] %vm886, %v5273
        %vm5402 = vcmask 15360
        %5403 = vst.msk [vmem:[%s435] sm:$0xff] %vm5402, %v4603
        %5404 = vst.msk [vmem:[%s435 + $0x8] sm:$0xff] %vm5402, %v4605
        %5405 = vst.msk [vmem:[%s435 + $0x10] sm:$0xff] %vm5402, %v4608
        %5406 = vst.msk [vmem:[%s435 + $0x18] sm:$0xff] %vm5402, %v4610
        %5407 = vst.msk [vmem:[%s435 + $0x20] sm:$0xff] %vm5402, %v4613
        %5408 = vst.msk [vmem:[%s435 + $0x28] sm:$0xff] %vm5402, %v4615
        %5409 = vst.msk [vmem:[%s435 + $0x30] sm:$0xff] %vm5402, %v4618
        %5410 = vst.msk [vmem:[%s435 + $0x38] sm:$0xff] %vm5402, %v4620
        %5411 = vst.msk [vmem:[%s435 + $0x40] sm:$0xff] %vm5402, %v4623
        %5412 = vst.msk [vmem:[%s435 + $0x48] sm:$0xff] %vm5402, %v4625
        %5413 = vst.msk [vmem:[%s435 + $0x50] sm:$0xff] %vm5402, %v4628
        %5414 = vst.msk [vmem:[%s435 + $0x58] sm:$0xff] %vm5402, %v4630
        %5415 = vst.msk [vmem:[%s435 + $0x60] sm:$0xff] %vm5402, %v4633
        %5416 = vst.msk [vmem:[%s435 + $0x68] sm:$0xff] %vm5402, %v4635
        %5417 = vst.msk [vmem:[%s435 + $0x70] sm:$0xff] %vm5402, %v4638
        %5418 = vst.msk [vmem:[%s435 + $0x78] sm:$0xff] %vm5402, %v4640
        %5419 = vst.msk [vmem:[%s435 + $0x80] sm:$0xff] %vm5402, %v4643
        %5420 = vst.msk [vmem:[%s435 + $0x88] sm:$0xff] %vm5402, %v4645
        %5421 = vst.msk [vmem:[%s435 + $0x90] sm:$0xff] %vm5402, %v4648
        %5422 = vst.msk [vmem:[%s435 + $0x98] sm:$0xff] %vm5402, %v4650
        %5423 = vst.msk [vmem:[%s435 + $0xa0] sm:$0xff] %vm5402, %v4653
        %5424 = vst.msk [vmem:[%s435 + $0xa8] sm:$0xff] %vm5402, %v4655
        %5425 = vst.msk [vmem:[%s435 + $0xb0] sm:$0xff] %vm5402, %v4658
        %5426 = vst.msk [vmem:[%s435 + $0xb8] sm:$0xff] %vm5402, %v4660
        %5427 = vst.msk [vmem:[%s435 + $0xc0] sm:$0xff] %vm5402, %v4663
        %5428 = vst.msk [vmem:[%s435 + $0xc8] sm:$0xff] %vm5402, %v4665
        %5429 = vst.msk [vmem:[%s435 + $0xd0] sm:$0xff] %vm5402, %v4668
        %5430 = vst.msk [vmem:[%s435 + $0xd8] sm:$0xff] %vm5402, %v4670
        %5431 = vst.msk [vmem:[%s435 + $0xe0] sm:$0xff] %vm5402, %v4673
        %5432 = vst.msk [vmem:[%s435 + $0xe8] sm:$0xff] %vm5402, %v4675
        %5433 = vst.msk [vmem:[%s435 + $0xf0] sm:$0xff] %vm5402, %v4678
        %5434 = vst.msk [vmem:[%s435 + $0xf8] sm:$0xff] %vm5402, %v4680
        %5435 = vst.msk [vmem:[%s435 + $0x100] sm:$0xff] %vm5402, %v4683
        %5436 = vst.msk [vmem:[%s435 + $0x108] sm:$0xff] %vm5402, %v4685
        %5437 = vst.msk [vmem:[%s435 + $0x110] sm:$0xff] %vm5402, %v4688
        %5438 = vst.msk [vmem:[%s435 + $0x118] sm:$0xff] %vm5402, %v4690
        %5439 = vst.msk [vmem:[%s435 + $0x120] sm:$0xff] %vm5402, %v4693
        %5440 = vst.msk [vmem:[%s435 + $0x128] sm:$0xff] %vm5402, %v4695
        %5441 = vst.msk [vmem:[%s435 + $0x130] sm:$0xff] %vm5402, %v4698
        %5442 = vst.msk [vmem:[%s435 + $0x138] sm:$0xff] %vm5402, %v4700
        %5443 = vst.msk [vmem:[%s435 + $0x140] sm:$0xff] %vm5402, %v4703
        %5444 = vst.msk [vmem:[%s435 + $0x148] sm:$0xff] %vm5402, %v4705
        %5445 = vst.msk [vmem:[%s435 + $0x150] sm:$0xff] %vm5402, %v4708
        %5446 = vst.msk [vmem:[%s435 + $0x158] sm:$0xff] %vm5402, %v4710
        %5447 = vst.msk [vmem:[%s435 + $0x160] sm:$0xff] %vm5402, %v4713
        %5448 = vst.msk [vmem:[%s435 + $0x168] sm:$0xff] %vm5402, %v4715
        %5449 = vst.msk [vmem:[%s435 + $0x170] sm:$0xff] %vm5402, %v4718
        %5450 = vst.msk [vmem:[%s435 + $0x178] sm:$0xff] %vm5402, %v4720
        %5451 = vst.msk [vmem:[%s435 + $0x180] sm:$0xff] %vm5402, %v4723
        %5452 = vst.msk [vmem:[%s435 + $0x188] sm:$0xff] %vm5402, %v4725
        %5453 = vst.msk [vmem:[%s435 + $0x190] sm:$0xff] %vm5402, %v4728
        %5454 = vst.msk [vmem:[%s435 + $0x198] sm:$0xff] %vm5402, %v4730
        %5455 = vst.msk [vmem:[%s435 + $0x1a0] sm:$0xff] %vm5402, %v4733
        %5456 = vst.msk [vmem:[%s435 + $0x1a8] sm:$0xff] %vm5402, %v4735
        %5457 = vst.msk [vmem:[%s435 + $0x1b0] sm:$0xff] %vm5402, %v4738
        %5458 = vst.msk [vmem:[%s435 + $0x1b8] sm:$0xff] %vm5402, %v4740
        %5459 = vst.msk [vmem:[%s435 + $0x1c0] sm:$0xff] %vm5402, %v4743
        %5460 = vst.msk [vmem:[%s435 + $0x1c8] sm:$0xff] %vm5402, %v4745
        %5461 = vst.msk [vmem:[%s435 + $0x1d0] sm:$0xff] %vm5402, %v4748
        %5462 = vst.msk [vmem:[%s435 + $0x1d8] sm:$0xff] %vm5402, %v4750
        %5463 = vst.msk [vmem:[%s435 + $0x1e0] sm:$0xff] %vm5402, %v4753
        %5464 = vst.msk [vmem:[%s435 + $0x1e8] sm:$0xff] %vm5402, %v4755
        %5465 = vst.msk [vmem:[%s435 + $0x1f0] sm:$0xff] %vm5402, %v4758
        %5466 = vst.msk [vmem:[%s435 + $0x1f8] sm:$0xff] %vm5402, %v4760
        %s5467 = sand.u32 %s213, 1
        %s5468 = sand.u32 %s213, 1
        %s5469 = smul.addr %s5468, 512
        %s5470 = scalar_lea.vmem [#allocation2], %s5469
        %s5471 = sand.u32 %s239, 1
        %s5472 = sand.u32 %s239, 1
        %s5473 = smul.addr %s5472, 512
        %s5474 = scalar_lea.vmem [#allocation3], %s5473
        %s5475 = sand.u32 %s265, 1
        %s5476 = sand.u32 %s265, 1
        %s5477 = smul.addr %s5476, 512
        %s5478 = scalar_lea.vmem [#allocation4], %s5477
        // Predicated region
        $region53: #{tpu_custom_call.1} parent=51 // pred_check
          %p5479 = pneg %p223
        $region54: #{tpu_custom_call.1} parent=51 // pred_check_branch
          %5481 = sbr.rel (%p5479) target = $region56
        $region55: #{tpu_custom_call.1} parent=51 // pred_region
          %s5482 = smul.u32 64, %s22
          %s5483 = ssub.s32 125, %s5482
          %p5484 = scmp.lt.s32.totalorder %s5483, 64
          %s5485 = scalar_select %p5484, %s5483, 64
          %s5486 = smul.u32 8, %s5485
          %p5487 = scmp.ne.s32.totalorder 0, %s5486
          %s5488 = smul.addr %s5482, 8
          %s5489 = scalar_lea.vmem %s8, %s5488
          // Predicated region
          $region57: #{tpu_custom_call.1} parent=55 // pred_check
            %p5490 = pneg %p5487
          $region58: #{tpu_custom_call.1} parent=55 // pred_check_branch
            %5492 = sbr.rel (%p5490) target = $region60
          $region59: #{tpu_custom_call.1} parent=55 // pred_region
            // Predicated region
            $region61: #{tpu_custom_call.1} parent=59 // pred_check
              _
            $region62: #{tpu_custom_call.1} parent=59 // pred_check_branch
              %5494 = sbr.rel (0) target = $region64
            $region63: #{tpu_custom_call.1} parent=59 // pred_region
              // Predicated region
              $region83: #{tpu_custom_call.1} parent=63 // pred_check
                _
              $region84: #{tpu_custom_call.1} parent=63 // pred_check_branch
                %5606 = sbr.rel (0) target = $region86
              $region85: #{tpu_custom_call.1} parent=63 // pred_region
                %s5607 = sshrl.u32 %s5485, 5
                // While loop
                $region87: #{tpu_custom_call.1} parent=85 // loop_pre_header
                  _
                $region88: #{tpu_custom_call.1} parent=85 // loop_header
                  %s5609 = sphi 0, %s5611
                  %p5610 = scmp.ge.s32.totalorder %s5609, %s5607
                  %s5614 = sphi 0, %s5683
                  %s5615 = sphi %s5470, %s5686
                  %s5616 = sphi %s5489, %s5687
                $region89: #{tpu_custom_call.1} parent=85 // loop_header_branch
                  %5613 = sbr.rel (%p5610) target = $region93
                $region90: #{tpu_custom_call.1} parent=85 // loop_body
                  %v5617 = vld [vmem:[%s5615] sm:$0xff]
                  %5618 = vst [vmem:[%s5616] sm:$0xff] %v5617
                  %v5619 = vld [vmem:[%s5615 + $0x8] sm:$0xff]
                  %5620 = vst [vmem:[%s5616 + $0x8] sm:$0xff] %v5619
                  %v5621 = vld [vmem:[%s5615 + $0x10] sm:$0xff]
                  %5622 = vst [vmem:[%s5616 + $0x10] sm:$0xff] %v5621
                  %v5623 = vld [vmem:[%s5615 + $0x18] sm:$0xff]
                  %5624 = vst [vmem:[%s5616 + $0x18] sm:$0xff] %v5623
                  %v5625 = vld [vmem:[%s5615 + $0x20] sm:$0xff]
                  %5626 = vst [vmem:[%s5616 + $0x20] sm:$0xff] %v5625
                  %v5627 = vld [vmem:[%s5615 + $0x28] sm:$0xff]
                  %5628 = vst [vmem:[%s5616 + $0x28] sm:$0xff] %v5627
                  %v5629 = vld [vmem:[%s5615 + $0x30] sm:$0xff]
                  %5630 = vst [vmem:[%s5616 + $0x30] sm:$0xff] %v5629
                  %v5631 = vld [vmem:[%s5615 + $0x38] sm:$0xff]
                  %5632 = vst [vmem:[%s5616 + $0x38] sm:$0xff] %v5631
                  %v5633 = vld [vmem:[%s5615 + $0x40] sm:$0xff]
                  %5634 = vst [vmem:[%s5616 + $0x40] sm:$0xff] %v5633
                  %v5635 = vld [vmem:[%s5615 + $0x48] sm:$0xff]
                  %5636 = vst [vmem:[%s5616 + $0x48] sm:$0xff] %v5635
                  %v5637 = vld [vmem:[%s5615 + $0x50] sm:$0xff]
                  %5638 = vst [vmem:[%s5616 + $0x50] sm:$0xff] %v5637
                  %v5639 = vld [vmem:[%s5615 + $0x58] sm:$0xff]
                  %5640 = vst [vmem:[%s5616 + $0x58] sm:$0xff] %v5639
                  %v5641 = vld [vmem:[%s5615 + $0x60] sm:$0xff]
                  %5642 = vst [vmem:[%s5616 + $0x60] sm:$0xff] %v5641
                  %v5643 = vld [vmem:[%s5615 + $0x68] sm:$0xff]
                  %5644 = vst [vmem:[%s5616 + $0x68] sm:$0xff] %v5643
                  %v5645 = vld [vmem:[%s5615 + $0x70] sm:$0xff]
                  %5646 = vst [vmem:[%s5616 + $0x70] sm:$0xff] %v5645
                  %v5647 = vld [vmem:[%s5615 + $0x78] sm:$0xff]
                  %5648 = vst [vmem:[%s5616 + $0x78] sm:$0xff] %v5647
                  %v5649 = vld [vmem:[%s5615 + $0x80] sm:$0xff]
                  %5650 = vst [vmem:[%s5616 + $0x80] sm:$0xff] %v5649
                  %v5651 = vld [vmem:[%s5615 + $0x88] sm:$0xff]
                  %5652 = vst [vmem:[%s5616 + $0x88] sm:$0xff] %v5651
                  %v5653 = vld [vmem:[%s5615 + $0x90] sm:$0xff]
                  %5654 = vst [vmem:[%s5616 + $0x90] sm:$0xff] %v5653
                  %v5655 = vld [vmem:[%s5615 + $0x98] sm:$0xff]
                  %5656 = vst [vmem:[%s5616 + $0x98] sm:$0xff] %v5655
                  %v5657 = vld [vmem:[%s5615 + $0xa0] sm:$0xff]
                  %5658 = vst [vmem:[%s5616 + $0xa0] sm:$0xff] %v5657
                  %v5659 = vld [vmem:[%s5615 + $0xa8] sm:$0xff]
                  %5660 = vst [vmem:[%s5616 + $0xa8] sm:$0xff] %v5659
                  %v5661 = vld [vmem:[%s5615 + $0xb0] sm:$0xff]
                  %5662 = vst [vmem:[%s5616 + $0xb0] sm:$0xff] %v5661
                  %v5663 = vld [vmem:[%s5615 + $0xb8] sm:$0xff]
                  %5664 = vst [vmem:[%s5616 + $0xb8] sm:$0xff] %v5663
                  %v5665 = vld [vmem:[%s5615 + $0xc0] sm:$0xff]
                  %5666 = vst [vmem:[%s5616 + $0xc0] sm:$0xff] %v5665
                  %v5667 = vld [vmem:[%s5615 + $0xc8] sm:$0xff]
                  %5668 = vst [vmem:[%s5616 + $0xc8] sm:$0xff] %v5667
                  %v5669 = vld [vmem:[%s5615 + $0xd0] sm:$0xff]
                  %5670 = vst [vmem:[%s5616 + $0xd0] sm:$0xff] %v5669
                  %v5671 = vld [vmem:[%s5615 + $0xd8] sm:$0xff]
                  %5672 = vst [vmem:[%s5616 + $0xd8] sm:$0xff] %v5671
                  %v5673 = vld [vmem:[%s5615 + $0xe0] sm:$0xff]
                  %5674 = vst [vmem:[%s5616 + $0xe0] sm:$0xff] %v5673
                  %v5675 = vld [vmem:[%s5615 + $0xe8] sm:$0xff]
                  %5676 = vst [vmem:[%s5616 + $0xe8] sm:$0xff] %v5675
                  %v5677 = vld [vmem:[%s5615 + $0xf0] sm:$0xff]
                  %5678 = vst [vmem:[%s5616 + $0xf0] sm:$0xff] %v5677
                  %v5679 = vld [vmem:[%s5615 + $0xf8] sm:$0xff]
                  %5680 = vst [vmem:[%s5616 + $0xf8] sm:$0xff] %v5679
                  %s5681 = sadd.s32 1, %s5614
                  %p5682 = scmp.ge.s32.totalorder %s5681, %s5607
                  %s5683 = scalar_select %p5682, 0, %s5681
                  %s5684 = smul.u32 %s5683, 256
                  %s5685 = smul.u32 %s5683, 256
                  %s5686 = scalar_lea.vmem %s5470, %s5684 [#allocation2]
                  %s5687 = scalar_lea.vmem %s5489, %s5685
                $region91: #{tpu_custom_call.1} parent=85 // loop_footer
                  %s5611 = sadd.s32 %s5609, 1
                $region92: #{tpu_custom_call.1} parent=85 // loop_footer_branch
                  %5608 = sbr.rel target = $region88
                $region93: #{tpu_custom_call.1} parent=85 // loop_exit
                  _
                %s5688 = sshrl.u32 %s5485, 5
                %s5689 = sand.u32 %s5485, 31
                %s5690 = smul.u32 %s5688, 32
                %s5691 = smul.u32 8, %s5690
                %s5692 = scalar_lea.vmem %s5470, %s5691 [#allocation2]
                %s5693 = smul.u32 8, %s5690
                %s5694 = scalar_lea.vmem %s5489, %s5693
                // While loop
                $region94: #{tpu_custom_call.1} parent=85 // loop_pre_header
                  _
                $region95: #{tpu_custom_call.1} parent=85 // loop_header
                  %s5696 = sphi 0, %s5698
                  %p5697 = scmp.ge.s32.totalorder %s5696, %s5689
                  %s5701 = sphi 0, %s5708
                  %s5702 = sphi %s5692, %s5711
                  %s5703 = sphi %s5694, %s5712
                $region96: #{tpu_custom_call.1} parent=85 // loop_header_branch
                  %5700 = sbr.rel (%p5697) target = $region100
                $region97: #{tpu_custom_call.1} parent=85 // loop_body
                  %v5704 = vld [vmem:[%s5702] sm:$0xff]
                  %5705 = vst [vmem:[%s5703] sm:$0xff] %v5704
                  %s5706 = sadd.s32 1, %s5701
                  %p5707 = scmp.ge.s32.totalorder %s5706, %s5689
                  %s5708 = scalar_select %p5707, 0, %s5706
                  %s5709 = smul.u32 %s5708, 8
                  %s5710 = smul.u32 %s5708, 8
                  %s5711 = scalar_lea.vmem %s5692, %s5709 [#allocation2]
                  %s5712 = scalar_lea.vmem %s5694, %s5710
                $region98: #{tpu_custom_call.1} parent=85 // loop_footer
                  %s5698 = sadd.s32 %s5696, 1
                $region99: #{tpu_custom_call.1} parent=85 // loop_footer_branch
                  %5695 = sbr.rel target = $region95
                $region100: #{tpu_custom_call.1} parent=85 // loop_exit
                  _
              $region86: #{tpu_custom_call.1} parent=63 // pred_fallthru
                _
              // Predicated region
              $region101: #{tpu_custom_call.1} parent=63 // pred_check
                _
              $region102: #{tpu_custom_call.1} parent=63 // pred_check_branch
                %5714 = sbr.rel target = $region104
              $region103: #{tpu_custom_call.1} parent=63 // pred_region
                _
              $region104: #{tpu_custom_call.1} parent=63 // pred_fallthru
                _
            $region64: #{tpu_custom_call.1} parent=59 // pred_fallthru
              _
            // Predicated region
            $region65: #{tpu_custom_call.1} parent=59 // pred_check
              _
            $region66: #{tpu_custom_call.1} parent=59 // pred_check_branch
              %5496 = sbr.rel target = $region68
            $region67: #{tpu_custom_call.1} parent=59 // pred_region
              %s5498 = ssub.s32 256, 1
              %s5499 = sshrl.u32 %s5485, 5
              // While loop
              $region69: #{tpu_custom_call.1} parent=67 // loop_pre_header
                _
              $region70: #{tpu_custom_call.1} parent=67 // loop_header
                %s5501 = sphi 0, %s5503
                %p5502 = scmp.ge.s32.totalorder %s5501, %s5499
                %s5506 = sphi 0, %s5575
                %s5507 = sphi %s5470, %s5578
                %s5508 = sphi %s5489, %s5579
              $region71: #{tpu_custom_call.1} parent=67 // loop_header_branch
                %5505 = sbr.rel (%p5502) target = $region75
              $region72: #{tpu_custom_call.1} parent=67 // loop_body
                %v5509 = vld [vmem:[%s5507] sm:%s5498]
                %5510 = vst [vmem:[%s5508] sm:%s5498] %v5509
                %v5511 = vld [vmem:[%s5507 + $0x8] sm:%s5498]
                %5512 = vst [vmem:[%s5508 + $0x8] sm:%s5498] %v5511
                %v5513 = vld [vmem:[%s5507 + $0x10] sm:%s5498]
                %5514 = vst [vmem:[%s5508 + $0x10] sm:%s5498] %v5513
                %v5515 = vld [vmem:[%s5507 + $0x18] sm:%s5498]
                %5516 = vst [vmem:[%s5508 + $0x18] sm:%s5498] %v5515
                %v5517 = vld [vmem:[%s5507 + $0x20] sm:%s5498]
                %5518 = vst [vmem:[%s5508 + $0x20] sm:%s5498] %v5517
                %v5519 = vld [vmem:[%s5507 + $0x28] sm:%s5498]
                %5520 = vst [vmem:[%s5508 + $0x28] sm:%s5498] %v5519
                %v5521 = vld [vmem:[%s5507 + $0x30] sm:%s5498]
                %5522 = vst [vmem:[%s5508 + $0x30] sm:%s5498] %v5521
                %v5523 = vld [vmem:[%s5507 + $0x38] sm:%s5498]
                %5524 = vst [vmem:[%s5508 + $0x38] sm:%s5498] %v5523
                %v5525 = vld [vmem:[%s5507 + $0x40] sm:%s5498]
                %5526 = vst [vmem:[%s5508 + $0x40] sm:%s5498] %v5525
                %v5527 = vld [vmem:[%s5507 + $0x48] sm:%s5498]
                %5528 = vst [vmem:[%s5508 + $0x48] sm:%s5498] %v5527
                %v5529 = vld [vmem:[%s5507 + $0x50] sm:%s5498]
                %5530 = vst [vmem:[%s5508 + $0x50] sm:%s5498] %v5529
                %v5531 = vld [vmem:[%s5507 + $0x58] sm:%s5498]
                %5532 = vst [vmem:[%s5508 + $0x58] sm:%s5498] %v5531
                %v5533 = vld [vmem:[%s5507 + $0x60] sm:%s5498]
                %5534 = vst [vmem:[%s5508 + $0x60] sm:%s5498] %v5533
                %v5535 = vld [vmem:[%s5507 + $0x68] sm:%s5498]
                %5536 = vst [vmem:[%s5508 + $0x68] sm:%s5498] %v5535
                %v5537 = vld [vmem:[%s5507 + $0x70] sm:%s5498]
                %5538 = vst [vmem:[%s5508 + $0x70] sm:%s5498] %v5537
                %v5539 = vld [vmem:[%s5507 + $0x78] sm:%s5498]
                %5540 = vst [vmem:[%s5508 + $0x78] sm:%s5498] %v5539
                %v5541 = vld [vmem:[%s5507 + $0x80] sm:%s5498]
                %5542 = vst [vmem:[%s5508 + $0x80] sm:%s5498] %v5541
                %v5543 = vld [vmem:[%s5507 + $0x88] sm:%s5498]
                %5544 = vst [vmem:[%s5508 + $0x88] sm:%s5498] %v5543
                %v5545 = vld [vmem:[%s5507 + $0x90] sm:%s5498]
                %5546 = vst [vmem:[%s5508 + $0x90] sm:%s5498] %v5545
                %v5547 = vld [vmem:[%s5507 + $0x98] sm:%s5498]
                %5548 = vst [vmem:[%s5508 + $0x98] sm:%s5498] %v5547
                %v5549 = vld [vmem:[%s5507 + $0xa0] sm:%s5498]
                %5550 = vst [vmem:[%s5508 + $0xa0] sm:%s5498] %v5549
                %v5551 = vld [vmem:[%s5507 + $0xa8] sm:%s5498]
                %5552 = vst [vmem:[%s5508 + $0xa8] sm:%s5498] %v5551
                %v5553 = vld [vmem:[%s5507 + $0xb0] sm:%s5498]
                %5554 = vst [vmem:[%s5508 + $0xb0] sm:%s5498] %v5553
                %v5555 = vld [vmem:[%s5507 + $0xb8] sm:%s5498]
                %5556 = vst [vmem:[%s5508 + $0xb8] sm:%s5498] %v5555
                %v5557 = vld [vmem:[%s5507 + $0xc0] sm:%s5498]
                %5558 = vst [vmem:[%s5508 + $0xc0] sm:%s5498] %v5557
                %v5559 = vld [vmem:[%s5507 + $0xc8] sm:%s5498]
                %5560 = vst [vmem:[%s5508 + $0xc8] sm:%s5498] %v5559
                %v5561 = vld [vmem:[%s5507 + $0xd0] sm:%s5498]
                %5562 = vst [vmem:[%s5508 + $0xd0] sm:%s5498] %v5561
                %v5563 = vld [vmem:[%s5507 + $0xd8] sm:%s5498]
                %5564 = vst [vmem:[%s5508 + $0xd8] sm:%s5498] %v5563
                %v5565 = vld [vmem:[%s5507 + $0xe0] sm:%s5498]
                %5566 = vst [vmem:[%s5508 + $0xe0] sm:%s5498] %v5565
                %v5567 = vld [vmem:[%s5507 + $0xe8] sm:%s5498]
                %5568 = vst [vmem:[%s5508 + $0xe8] sm:%s5498] %v5567
                %v5569 = vld [vmem:[%s5507 + $0xf0] sm:%s5498]
                %5570 = vst [vmem:[%s5508 + $0xf0] sm:%s5498] %v5569
                %v5571 = vld [vmem:[%s5507 + $0xf8] sm:%s5498]
                %5572 = vst [vmem:[%s5508 + $0xf8] sm:%s5498] %v5571
                %s5573 = sadd.s32 1, %s5506
                %p5574 = scmp.ge.s32.totalorder %s5573, %s5499
                %s5575 = scalar_select %p5574, 0, %s5573
                %s5576 = smul.u32 %s5575, 256
                %s5577 = smul.u32 %s5575, 256
                %s5578 = scalar_lea.vmem %s5470, %s5576 [#allocation2]
                %s5579 = scalar_lea.vmem %s5489, %s5577
              $region73: #{tpu_custom_call.1} parent=67 // loop_footer
                %s5503 = sadd.s32 %s5501, 1
              $region74: #{tpu_custom_call.1} parent=67 // loop_footer_branch
                %5500 = sbr.rel target = $region70
              $region75: #{tpu_custom_call.1} parent=67 // loop_exit
                _
              %s5580 = sshrl.u32 %s5485, 5
              %s5581 = sand.u32 %s5485, 31
              %s5582 = smul.u32 %s5580, 32
              %s5583 = smul.u32 8, %s5582
              %s5584 = scalar_lea.vmem %s5470, %s5583 [#allocation2]
              %s5585 = smul.u32 8, %s5582
              %s5586 = scalar_lea.vmem %s5489, %s5585
              // While loop
              $region76: #{tpu_custom_call.1} parent=67 // loop_pre_header
                _
              $region77: #{tpu_custom_call.1} parent=67 // loop_header
                %s5588 = sphi 0, %s5590
                %p5589 = scmp.ge.s32.totalorder %s5588, %s5581
                %s5593 = sphi 0, %s5600
                %s5594 = sphi %s5584, %s5603
                %s5595 = sphi %s5586, %s5604
              $region78: #{tpu_custom_call.1} parent=67 // loop_header_branch
                %5592 = sbr.rel (%p5589) target = $region82
              $region79: #{tpu_custom_call.1} parent=67 // loop_body
                %v5596 = vld [vmem:[%s5594] sm:%s5498]
                %5597 = vst [vmem:[%s5595] sm:%s5498] %v5596
                %s5598 = sadd.s32 1, %s5593
                %p5599 = scmp.ge.s32.totalorder %s5598, %s5581
                %s5600 = scalar_select %p5599, 0, %s5598
                %s5601 = smul.u32 %s5600, 8
                %s5602 = smul.u32 %s5600, 8
                %s5603 = scalar_lea.vmem %s5584, %s5601 [#allocation2]
                %s5604 = scalar_lea.vmem %s5586, %s5602
              $region80: #{tpu_custom_call.1} parent=67 // loop_footer
                %s5590 = sadd.s32 %s5588, 1
              $region81: #{tpu_custom_call.1} parent=67 // loop_footer_branch
                %5587 = sbr.rel target = $region77
              $region82: #{tpu_custom_call.1} parent=67 // loop_exit
                _
            $region68: #{tpu_custom_call.1} parent=59 // pred_fallthru
              _
          $region60: #{tpu_custom_call.1} parent=55 // pred_fallthru
            _
          %5715 = vnop
        $region56: #{tpu_custom_call.1} parent=51 // pred_fallthru
          _
        // Predicated region
        $region105: #{tpu_custom_call.1} parent=51 // pred_check
          %p5716 = pneg %p249
        $region106: #{tpu_custom_call.1} parent=51 // pred_check_branch
          %5718 = sbr.rel (%p5716) target = $region108
        $region107: #{tpu_custom_call.1} parent=51 // pred_region
          %s5719 = smul.u32 64, %s22
          %s5720 = ssub.s32 125, %s5719
          %p5721 = scmp.lt.s32.totalorder %s5720, 64
          %s5722 = scalar_select %p5721, %s5720, 64
          %s5723 = smul.u32 8, %s5722
          %p5724 = scmp.ne.s32.totalorder 0, %s5723
          %s5725 = smul.addr %s5719, 8
          %s5726 = scalar_lea.vmem %s9, %s5725
          // Predicated region
          $region109: #{tpu_custom_call.1} parent=107 // pred_check
            %p5727 = pneg %p5724
          $region110: #{tpu_custom_call.1} parent=107 // pred_check_branch
            %5729 = sbr.rel (%p5727) target = $region112
          $region111: #{tpu_custom_call.1} parent=107 // pred_region
            // Predicated region
            $region113: #{tpu_custom_call.1} parent=111 // pred_check
              _
            $region114: #{tpu_custom_call.1} parent=111 // pred_check_branch
              %5731 = sbr.rel (0) target = $region116
            $region115: #{tpu_custom_call.1} parent=111 // pred_region
              // Predicated region
              $region135: #{tpu_custom_call.1} parent=115 // pred_check
                _
              $region136: #{tpu_custom_call.1} parent=115 // pred_check_branch
                %5843 = sbr.rel (0) target = $region138
              $region137: #{tpu_custom_call.1} parent=115 // pred_region
                %s5844 = sshrl.u32 %s5722, 5
                // While loop
                $region139: #{tpu_custom_call.1} parent=137 // loop_pre_header
                  _
                $region140: #{tpu_custom_call.1} parent=137 // loop_header
                  %s5846 = sphi 0, %s5848
                  %p5847 = scmp.ge.s32.totalorder %s5846, %s5844
                  %s5851 = sphi 0, %s5920
                  %s5852 = sphi %s5474, %s5923
                  %s5853 = sphi %s5726, %s5924
                $region141: #{tpu_custom_call.1} parent=137 // loop_header_branch
                  %5850 = sbr.rel (%p5847) target = $region145
                $region142: #{tpu_custom_call.1} parent=137 // loop_body
                  %v5854 = vld [vmem:[%s5852] sm:$0xff]
                  %5855 = vst [vmem:[%s5853] sm:$0xff] %v5854
                  %v5856 = vld [vmem:[%s5852 + $0x8] sm:$0xff]
                  %5857 = vst [vmem:[%s5853 + $0x8] sm:$0xff] %v5856
                  %v5858 = vld [vmem:[%s5852 + $0x10] sm:$0xff]
                  %5859 = vst [vmem:[%s5853 + $0x10] sm:$0xff] %v5858
                  %v5860 = vld [vmem:[%s5852 + $0x18] sm:$0xff]
                  %5861 = vst [vmem:[%s5853 + $0x18] sm:$0xff] %v5860
                  %v5862 = vld [vmem:[%s5852 + $0x20] sm:$0xff]
                  %5863 = vst [vmem:[%s5853 + $0x20] sm:$0xff] %v5862
                  %v5864 = vld [vmem:[%s5852 + $0x28] sm:$0xff]
                  %5865 = vst [vmem:[%s5853 + $0x28] sm:$0xff] %v5864
                  %v5866 = vld [vmem:[%s5852 + $0x30] sm:$0xff]
                  %5867 = vst [vmem:[%s5853 + $0x30] sm:$0xff] %v5866
                  %v5868 = vld [vmem:[%s5852 + $0x38] sm:$0xff]
                  %5869 = vst [vmem:[%s5853 + $0x38] sm:$0xff] %v5868
                  %v5870 = vld [vmem:[%s5852 + $0x40] sm:$0xff]
                  %5871 = vst [vmem:[%s5853 + $0x40] sm:$0xff] %v5870
                  %v5872 = vld [vmem:[%s5852 + $0x48] sm:$0xff]
                  %5873 = vst [vmem:[%s5853 + $0x48] sm:$0xff] %v5872
                  %v5874 = vld [vmem:[%s5852 + $0x50] sm:$0xff]
                  %5875 = vst [vmem:[%s5853 + $0x50] sm:$0xff] %v5874
                  %v5876 = vld [vmem:[%s5852 + $0x58] sm:$0xff]
                  %5877 = vst [vmem:[%s5853 + $0x58] sm:$0xff] %v5876
                  %v5878 = vld [vmem:[%s5852 + $0x60] sm:$0xff]
                  %5879 = vst [vmem:[%s5853 + $0x60] sm:$0xff] %v5878
                  %v5880 = vld [vmem:[%s5852 + $0x68] sm:$0xff]
                  %5881 = vst [vmem:[%s5853 + $0x68] sm:$0xff] %v5880
                  %v5882 = vld [vmem:[%s5852 + $0x70] sm:$0xff]
                  %5883 = vst [vmem:[%s5853 + $0x70] sm:$0xff] %v5882
                  %v5884 = vld [vmem:[%s5852 + $0x78] sm:$0xff]
                  %5885 = vst [vmem:[%s5853 + $0x78] sm:$0xff] %v5884
                  %v5886 = vld [vmem:[%s5852 + $0x80] sm:$0xff]
                  %5887 = vst [vmem:[%s5853 + $0x80] sm:$0xff] %v5886
                  %v5888 = vld [vmem:[%s5852 + $0x88] sm:$0xff]
                  %5889 = vst [vmem:[%s5853 + $0x88] sm:$0xff] %v5888
                  %v5890 = vld [vmem:[%s5852 + $0x90] sm:$0xff]
                  %5891 = vst [vmem:[%s5853 + $0x90] sm:$0xff] %v5890
                  %v5892 = vld [vmem:[%s5852 + $0x98] sm:$0xff]
                  %5893 = vst [vmem:[%s5853 + $0x98] sm:$0xff] %v5892
                  %v5894 = vld [vmem:[%s5852 + $0xa0] sm:$0xff]
                  %5895 = vst [vmem:[%s5853 + $0xa0] sm:$0xff] %v5894
                  %v5896 = vld [vmem:[%s5852 + $0xa8] sm:$0xff]
                  %5897 = vst [vmem:[%s5853 + $0xa8] sm:$0xff] %v5896
                  %v5898 = vld [vmem:[%s5852 + $0xb0] sm:$0xff]
                  %5899 = vst [vmem:[%s5853 + $0xb0] sm:$0xff] %v5898
                  %v5900 = vld [vmem:[%s5852 + $0xb8] sm:$0xff]
                  %5901 = vst [vmem:[%s5853 + $0xb8] sm:$0xff] %v5900
                  %v5902 = vld [vmem:[%s5852 + $0xc0] sm:$0xff]
                  %5903 = vst [vmem:[%s5853 + $0xc0] sm:$0xff] %v5902
                  %v5904 = vld [vmem:[%s5852 + $0xc8] sm:$0xff]
                  %5905 = vst [vmem:[%s5853 + $0xc8] sm:$0xff] %v5904
                  %v5906 = vld [vmem:[%s5852 + $0xd0] sm:$0xff]
                  %5907 = vst [vmem:[%s5853 + $0xd0] sm:$0xff] %v5906
                  %v5908 = vld [vmem:[%s5852 + $0xd8] sm:$0xff]
                  %5909 = vst [vmem:[%s5853 + $0xd8] sm:$0xff] %v5908
                  %v5910 = vld [vmem:[%s5852 + $0xe0] sm:$0xff]
                  %5911 = vst [vmem:[%s5853 + $0xe0] sm:$0xff] %v5910
                  %v5912 = vld [vmem:[%s5852 + $0xe8] sm:$0xff]
                  %5913 = vst [vmem:[%s5853 + $0xe8] sm:$0xff] %v5912
                  %v5914 = vld [vmem:[%s5852 + $0xf0] sm:$0xff]
                  %5915 = vst [vmem:[%s5853 + $0xf0] sm:$0xff] %v5914
                  %v5916 = vld [vmem:[%s5852 + $0xf8] sm:$0xff]
                  %5917 = vst [vmem:[%s5853 + $0xf8] sm:$0xff] %v5916
                  %s5918 = sadd.s32 1, %s5851
                  %p5919 = scmp.ge.s32.totalorder %s5918, %s5844
                  %s5920 = scalar_select %p5919, 0, %s5918
                  %s5921 = smul.u32 %s5920, 256
                  %s5922 = smul.u32 %s5920, 256
                  %s5923 = scalar_lea.vmem %s5474, %s5921 [#allocation3]
                  %s5924 = scalar_lea.vmem %s5726, %s5922
                $region143: #{tpu_custom_call.1} parent=137 // loop_footer
                  %s5848 = sadd.s32 %s5846, 1
                $region144: #{tpu_custom_call.1} parent=137 // loop_footer_branch
                  %5845 = sbr.rel target = $region140
                $region145: #{tpu_custom_call.1} parent=137 // loop_exit
                  _
                %s5925 = sshrl.u32 %s5722, 5
                %s5926 = sand.u32 %s5722, 31
                %s5927 = smul.u32 %s5925, 32
                %s5928 = smul.u32 8, %s5927
                %s5929 = scalar_lea.vmem %s5474, %s5928 [#allocation3]
                %s5930 = smul.u32 8, %s5927
                %s5931 = scalar_lea.vmem %s5726, %s5930
                // While loop
                $region146: #{tpu_custom_call.1} parent=137 // loop_pre_header
                  _
                $region147: #{tpu_custom_call.1} parent=137 // loop_header
                  %s5933 = sphi 0, %s5935
                  %p5934 = scmp.ge.s32.totalorder %s5933, %s5926
                  %s5938 = sphi 0, %s5945
                  %s5939 = sphi %s5929, %s5948
                  %s5940 = sphi %s5931, %s5949
                $region148: #{tpu_custom_call.1} parent=137 // loop_header_branch
                  %5937 = sbr.rel (%p5934) target = $region152
                $region149: #{tpu_custom_call.1} parent=137 // loop_body
                  %v5941 = vld [vmem:[%s5939] sm:$0xff]
                  %5942 = vst [vmem:[%s5940] sm:$0xff] %v5941
                  %s5943 = sadd.s32 1, %s5938
                  %p5944 = scmp.ge.s32.totalorder %s5943, %s5926
                  %s5945 = scalar_select %p5944, 0, %s5943
                  %s5946 = smul.u32 %s5945, 8
                  %s5947 = smul.u32 %s5945, 8
                  %s5948 = scalar_lea.vmem %s5929, %s5946 [#allocation3]
                  %s5949 = scalar_lea.vmem %s5931, %s5947
                $region150: #{tpu_custom_call.1} parent=137 // loop_footer
                  %s5935 = sadd.s32 %s5933, 1
                $region151: #{tpu_custom_call.1} parent=137 // loop_footer_branch
                  %5932 = sbr.rel target = $region147
                $region152: #{tpu_custom_call.1} parent=137 // loop_exit
                  _
              $region138: #{tpu_custom_call.1} parent=115 // pred_fallthru
                _
              // Predicated region
              $region153: #{tpu_custom_call.1} parent=115 // pred_check
                _
              $region154: #{tpu_custom_call.1} parent=115 // pred_check_branch
                %5951 = sbr.rel target = $region156
              $region155: #{tpu_custom_call.1} parent=115 // pred_region
                _
              $region156: #{tpu_custom_call.1} parent=115 // pred_fallthru
                _
            $region116: #{tpu_custom_call.1} parent=111 // pred_fallthru
              _
            // Predicated region
            $region117: #{tpu_custom_call.1} parent=111 // pred_check
              _
            $region118: #{tpu_custom_call.1} parent=111 // pred_check_branch
              %5733 = sbr.rel target = $region120
            $region119: #{tpu_custom_call.1} parent=111 // pred_region
              %s5735 = ssub.s32 256, 1
              %s5736 = sshrl.u32 %s5722, 5
              // While loop
              $region121: #{tpu_custom_call.1} parent=119 // loop_pre_header
                _
              $region122: #{tpu_custom_call.1} parent=119 // loop_header
                %s5738 = sphi 0, %s5740
                %p5739 = scmp.ge.s32.totalorder %s5738, %s5736
                %s5743 = sphi 0, %s5812
                %s5744 = sphi %s5474, %s5815
                %s5745 = sphi %s5726, %s5816
              $region123: #{tpu_custom_call.1} parent=119 // loop_header_branch
                %5742 = sbr.rel (%p5739) target = $region127
              $region124: #{tpu_custom_call.1} parent=119 // loop_body
                %v5746 = vld [vmem:[%s5744] sm:%s5735]
                %5747 = vst [vmem:[%s5745] sm:%s5735] %v5746
                %v5748 = vld [vmem:[%s5744 + $0x8] sm:%s5735]
                %5749 = vst [vmem:[%s5745 + $0x8] sm:%s5735] %v5748
                %v5750 = vld [vmem:[%s5744 + $0x10] sm:%s5735]
                %5751 = vst [vmem:[%s5745 + $0x10] sm:%s5735] %v5750
                %v5752 = vld [vmem:[%s5744 + $0x18] sm:%s5735]
                %5753 = vst [vmem:[%s5745 + $0x18] sm:%s5735] %v5752
                %v5754 = vld [vmem:[%s5744 + $0x20] sm:%s5735]
                %5755 = vst [vmem:[%s5745 + $0x20] sm:%s5735] %v5754
                %v5756 = vld [vmem:[%s5744 + $0x28] sm:%s5735]
                %5757 = vst [vmem:[%s5745 + $0x28] sm:%s5735] %v5756
                %v5758 = vld [vmem:[%s5744 + $0x30] sm:%s5735]
                %5759 = vst [vmem:[%s5745 + $0x30] sm:%s5735] %v5758
                %v5760 = vld [vmem:[%s5744 + $0x38] sm:%s5735]
                %5761 = vst [vmem:[%s5745 + $0x38] sm:%s5735] %v5760
                %v5762 = vld [vmem:[%s5744 + $0x40] sm:%s5735]
                %5763 = vst [vmem:[%s5745 + $0x40] sm:%s5735] %v5762
                %v5764 = vld [vmem:[%s5744 + $0x48] sm:%s5735]
                %5765 = vst [vmem:[%s5745 + $0x48] sm:%s5735] %v5764
                %v5766 = vld [vmem:[%s5744 + $0x50] sm:%s5735]
                %5767 = vst [vmem:[%s5745 + $0x50] sm:%s5735] %v5766
                %v5768 = vld [vmem:[%s5744 + $0x58] sm:%s5735]
                %5769 = vst [vmem:[%s5745 + $0x58] sm:%s5735] %v5768
                %v5770 = vld [vmem:[%s5744 + $0x60] sm:%s5735]
                %5771 = vst [vmem:[%s5745 + $0x60] sm:%s5735] %v5770
                %v5772 = vld [vmem:[%s5744 + $0x68] sm:%s5735]
                %5773 = vst [vmem:[%s5745 + $0x68] sm:%s5735] %v5772
                %v5774 = vld [vmem:[%s5744 + $0x70] sm:%s5735]
                %5775 = vst [vmem:[%s5745 + $0x70] sm:%s5735] %v5774
                %v5776 = vld [vmem:[%s5744 + $0x78] sm:%s5735]
                %5777 = vst [vmem:[%s5745 + $0x78] sm:%s5735] %v5776
                %v5778 = vld [vmem:[%s5744 + $0x80] sm:%s5735]
                %5779 = vst [vmem:[%s5745 + $0x80] sm:%s5735] %v5778
                %v5780 = vld [vmem:[%s5744 + $0x88] sm:%s5735]
                %5781 = vst [vmem:[%s5745 + $0x88] sm:%s5735] %v5780
                %v5782 = vld [vmem:[%s5744 + $0x90] sm:%s5735]
                %5783 = vst [vmem:[%s5745 + $0x90] sm:%s5735] %v5782
                %v5784 = vld [vmem:[%s5744 + $0x98] sm:%s5735]
                %5785 = vst [vmem:[%s5745 + $0x98] sm:%s5735] %v5784
                %v5786 = vld [vmem:[%s5744 + $0xa0] sm:%s5735]
                %5787 = vst [vmem:[%s5745 + $0xa0] sm:%s5735] %v5786
                %v5788 = vld [vmem:[%s5744 + $0xa8] sm:%s5735]
                %5789 = vst [vmem:[%s5745 + $0xa8] sm:%s5735] %v5788
                %v5790 = vld [vmem:[%s5744 + $0xb0] sm:%s5735]
                %5791 = vst [vmem:[%s5745 + $0xb0] sm:%s5735] %v5790
                %v5792 = vld [vmem:[%s5744 + $0xb8] sm:%s5735]
                %5793 = vst [vmem:[%s5745 + $0xb8] sm:%s5735] %v5792
                %v5794 = vld [vmem:[%s5744 + $0xc0] sm:%s5735]
                %5795 = vst [vmem:[%s5745 + $0xc0] sm:%s5735] %v5794
                %v5796 = vld [vmem:[%s5744 + $0xc8] sm:%s5735]
                %5797 = vst [vmem:[%s5745 + $0xc8] sm:%s5735] %v5796
                %v5798 = vld [vmem:[%s5744 + $0xd0] sm:%s5735]
                %5799 = vst [vmem:[%s5745 + $0xd0] sm:%s5735] %v5798
                %v5800 = vld [vmem:[%s5744 + $0xd8] sm:%s5735]
                %5801 = vst [vmem:[%s5745 + $0xd8] sm:%s5735] %v5800
                %v5802 = vld [vmem:[%s5744 + $0xe0] sm:%s5735]
                %5803 = vst [vmem:[%s5745 + $0xe0] sm:%s5735] %v5802
                %v5804 = vld [vmem:[%s5744 + $0xe8] sm:%s5735]
                %5805 = vst [vmem:[%s5745 + $0xe8] sm:%s5735] %v5804
                %v5806 = vld [vmem:[%s5744 + $0xf0] sm:%s5735]
                %5807 = vst [vmem:[%s5745 + $0xf0] sm:%s5735] %v5806
                %v5808 = vld [vmem:[%s5744 + $0xf8] sm:%s5735]
                %5809 = vst [vmem:[%s5745 + $0xf8] sm:%s5735] %v5808
                %s5810 = sadd.s32 1, %s5743
                %p5811 = scmp.ge.s32.totalorder %s5810, %s5736
                %s5812 = scalar_select %p5811, 0, %s5810
                %s5813 = smul.u32 %s5812, 256
                %s5814 = smul.u32 %s5812, 256
                %s5815 = scalar_lea.vmem %s5474, %s5813 [#allocation3]
                %s5816 = scalar_lea.vmem %s5726, %s5814
              $region125: #{tpu_custom_call.1} parent=119 // loop_footer
                %s5740 = sadd.s32 %s5738, 1
              $region126: #{tpu_custom_call.1} parent=119 // loop_footer_branch
                %5737 = sbr.rel target = $region122
              $region127: #{tpu_custom_call.1} parent=119 // loop_exit
                _
              %s5817 = sshrl.u32 %s5722, 5
              %s5818 = sand.u32 %s5722, 31
              %s5819 = smul.u32 %s5817, 32
              %s5820 = smul.u32 8, %s5819
              %s5821 = scalar_lea.vmem %s5474, %s5820 [#allocation3]
              %s5822 = smul.u32 8, %s5819
              %s5823 = scalar_lea.vmem %s5726, %s5822
              // While loop
              $region128: #{tpu_custom_call.1} parent=119 // loop_pre_header
                _
              $region129: #{tpu_custom_call.1} parent=119 // loop_header
                %s5825 = sphi 0, %s5827
                %p5826 = scmp.ge.s32.totalorder %s5825, %s5818
                %s5830 = sphi 0, %s5837
                %s5831 = sphi %s5821, %s5840
                %s5832 = sphi %s5823, %s5841
              $region130: #{tpu_custom_call.1} parent=119 // loop_header_branch
                %5829 = sbr.rel (%p5826) target = $region134
              $region131: #{tpu_custom_call.1} parent=119 // loop_body
                %v5833 = vld [vmem:[%s5831] sm:%s5735]
                %5834 = vst [vmem:[%s5832] sm:%s5735] %v5833
                %s5835 = sadd.s32 1, %s5830
                %p5836 = scmp.ge.s32.totalorder %s5835, %s5818
                %s5837 = scalar_select %p5836, 0, %s5835
                %s5838 = smul.u32 %s5837, 8
                %s5839 = smul.u32 %s5837, 8
                %s5840 = scalar_lea.vmem %s5821, %s5838 [#allocation3]
                %s5841 = scalar_lea.vmem %s5823, %s5839
              $region132: #{tpu_custom_call.1} parent=119 // loop_footer
                %s5827 = sadd.s32 %s5825, 1
              $region133: #{tpu_custom_call.1} parent=119 // loop_footer_branch
                %5824 = sbr.rel target = $region129
              $region134: #{tpu_custom_call.1} parent=119 // loop_exit
                _
            $region120: #{tpu_custom_call.1} parent=111 // pred_fallthru
              _
          $region112: #{tpu_custom_call.1} parent=107 // pred_fallthru
            _
          %5952 = vnop
        $region108: #{tpu_custom_call.1} parent=51 // pred_fallthru
          _
        // Predicated region
        $region157: #{tpu_custom_call.1} parent=51 // pred_check
          %p5953 = pneg %p275
        $region158: #{tpu_custom_call.1} parent=51 // pred_check_branch
          %5955 = sbr.rel (%p5953) target = $region160
        $region159: #{tpu_custom_call.1} parent=51 // pred_region
          %s5956 = smul.u32 64, %s22
          %s5957 = ssub.s32 125, %s5956
          %p5958 = scmp.lt.s32.totalorder %s5957, 64
          %s5959 = scalar_select %p5958, %s5957, 64
          %s5960 = smul.u32 8, %s5959
          %p5961 = scmp.ne.s32.totalorder 0, %s5960
          %s5962 = smul.addr %s5956, 8
          %s5963 = scalar_lea.vmem %s10, %s5962
          // Predicated region
          $region161: #{tpu_custom_call.1} parent=159 // pred_check
            %p5964 = pneg %p5961
          $region162: #{tpu_custom_call.1} parent=159 // pred_check_branch
            %5966 = sbr.rel (%p5964) target = $region164
          $region163: #{tpu_custom_call.1} parent=159 // pred_region
            // Predicated region
            $region165: #{tpu_custom_call.1} parent=163 // pred_check
              _
            $region166: #{tpu_custom_call.1} parent=163 // pred_check_branch
              %5968 = sbr.rel (0) target = $region168
            $region167: #{tpu_custom_call.1} parent=163 // pred_region
              // Predicated region
              $region187: #{tpu_custom_call.1} parent=167 // pred_check
                _
              $region188: #{tpu_custom_call.1} parent=167 // pred_check_branch
                %6080 = sbr.rel (0) target = $region190
              $region189: #{tpu_custom_call.1} parent=167 // pred_region
                %s6081 = sshrl.u32 %s5959, 5
                // While loop
                $region191: #{tpu_custom_call.1} parent=189 // loop_pre_header
                  _
                $region192: #{tpu_custom_call.1} parent=189 // loop_header
                  %s6083 = sphi 0, %s6085
                  %p6084 = scmp.ge.s32.totalorder %s6083, %s6081
                  %s6088 = sphi 0, %s6157
                  %s6089 = sphi %s5478, %s6160
                  %s6090 = sphi %s5963, %s6161
                $region193: #{tpu_custom_call.1} parent=189 // loop_header_branch
                  %6087 = sbr.rel (%p6084) target = $region197
                $region194: #{tpu_custom_call.1} parent=189 // loop_body
                  %v6091 = vld [vmem:[%s6089] sm:$0xff]
                  %6092 = vst [vmem:[%s6090] sm:$0xff] %v6091
                  %v6093 = vld [vmem:[%s6089 + $0x8] sm:$0xff]
                  %6094 = vst [vmem:[%s6090 + $0x8] sm:$0xff] %v6093
                  %v6095 = vld [vmem:[%s6089 + $0x10] sm:$0xff]
                  %6096 = vst [vmem:[%s6090 + $0x10] sm:$0xff] %v6095
                  %v6097 = vld [vmem:[%s6089 + $0x18] sm:$0xff]
                  %6098 = vst [vmem:[%s6090 + $0x18] sm:$0xff] %v6097
                  %v6099 = vld [vmem:[%s6089 + $0x20] sm:$0xff]
                  %6100 = vst [vmem:[%s6090 + $0x20] sm:$0xff] %v6099
                  %v6101 = vld [vmem:[%s6089 + $0x28] sm:$0xff]
                  %6102 = vst [vmem:[%s6090 + $0x28] sm:$0xff] %v6101
                  %v6103 = vld [vmem:[%s6089 + $0x30] sm:$0xff]
                  %6104 = vst [vmem:[%s6090 + $0x30] sm:$0xff] %v6103
                  %v6105 = vld [vmem:[%s6089 + $0x38] sm:$0xff]
                  %6106 = vst [vmem:[%s6090 + $0x38] sm:$0xff] %v6105
                  %v6107 = vld [vmem:[%s6089 + $0x40] sm:$0xff]
                  %6108 = vst [vmem:[%s6090 + $0x40] sm:$0xff] %v6107
                  %v6109 = vld [vmem:[%s6089 + $0x48] sm:$0xff]
                  %6110 = vst [vmem:[%s6090 + $0x48] sm:$0xff] %v6109
                  %v6111 = vld [vmem:[%s6089 + $0x50] sm:$0xff]
                  %6112 = vst [vmem:[%s6090 + $0x50] sm:$0xff] %v6111
                  %v6113 = vld [vmem:[%s6089 + $0x58] sm:$0xff]
                  %6114 = vst [vmem:[%s6090 + $0x58] sm:$0xff] %v6113
                  %v6115 = vld [vmem:[%s6089 + $0x60] sm:$0xff]
                  %6116 = vst [vmem:[%s6090 + $0x60] sm:$0xff] %v6115
                  %v6117 = vld [vmem:[%s6089 + $0x68] sm:$0xff]
                  %6118 = vst [vmem:[%s6090 + $0x68] sm:$0xff] %v6117
                  %v6119 = vld [vmem:[%s6089 + $0x70] sm:$0xff]
                  %6120 = vst [vmem:[%s6090 + $0x70] sm:$0xff] %v6119
                  %v6121 = vld [vmem:[%s6089 + $0x78] sm:$0xff]
                  %6122 = vst [vmem:[%s6090 + $0x78] sm:$0xff] %v6121
                  %v6123 = vld [vmem:[%s6089 + $0x80] sm:$0xff]
                  %6124 = vst [vmem:[%s6090 + $0x80] sm:$0xff] %v6123
                  %v6125 = vld [vmem:[%s6089 + $0x88] sm:$0xff]
                  %6126 = vst [vmem:[%s6090 + $0x88] sm:$0xff] %v6125
                  %v6127 = vld [vmem:[%s6089 + $0x90] sm:$0xff]
                  %6128 = vst [vmem:[%s6090 + $0x90] sm:$0xff] %v6127
                  %v6129 = vld [vmem:[%s6089 + $0x98] sm:$0xff]
                  %6130 = vst [vmem:[%s6090 + $0x98] sm:$0xff] %v6129
                  %v6131 = vld [vmem:[%s6089 + $0xa0] sm:$0xff]
                  %6132 = vst [vmem:[%s6090 + $0xa0] sm:$0xff] %v6131
                  %v6133 = vld [vmem:[%s6089 + $0xa8] sm:$0xff]
                  %6134 = vst [vmem:[%s6090 + $0xa8] sm:$0xff] %v6133
                  %v6135 = vld [vmem:[%s6089 + $0xb0] sm:$0xff]
                  %6136 = vst [vmem:[%s6090 + $0xb0] sm:$0xff] %v6135
                  %v6137 = vld [vmem:[%s6089 + $0xb8] sm:$0xff]
                  %6138 = vst [vmem:[%s6090 + $0xb8] sm:$0xff] %v6137
                  %v6139 = vld [vmem:[%s6089 + $0xc0] sm:$0xff]
                  %6140 = vst [vmem:[%s6090 + $0xc0] sm:$0xff] %v6139
                  %v6141 = vld [vmem:[%s6089 + $0xc8] sm:$0xff]
                  %6142 = vst [vmem:[%s6090 + $0xc8] sm:$0xff] %v6141
                  %v6143 = vld [vmem:[%s6089 + $0xd0] sm:$0xff]
                  %6144 = vst [vmem:[%s6090 + $0xd0] sm:$0xff] %v6143
                  %v6145 = vld [vmem:[%s6089 + $0xd8] sm:$0xff]
                  %6146 = vst [vmem:[%s6090 + $0xd8] sm:$0xff] %v6145
                  %v6147 = vld [vmem:[%s6089 + $0xe0] sm:$0xff]
                  %6148 = vst [vmem:[%s6090 + $0xe0] sm:$0xff] %v6147
                  %v6149 = vld [vmem:[%s6089 + $0xe8] sm:$0xff]
                  %6150 = vst [vmem:[%s6090 + $0xe8] sm:$0xff] %v6149
                  %v6151 = vld [vmem:[%s6089 + $0xf0] sm:$0xff]
                  %6152 = vst [vmem:[%s6090 + $0xf0] sm:$0xff] %v6151
                  %v6153 = vld [vmem:[%s6089 + $0xf8] sm:$0xff]
                  %6154 = vst [vmem:[%s6090 + $0xf8] sm:$0xff] %v6153
                  %s6155 = sadd.s32 1, %s6088
                  %p6156 = scmp.ge.s32.totalorder %s6155, %s6081
                  %s6157 = scalar_select %p6156, 0, %s6155
                  %s6158 = smul.u32 %s6157, 256
                  %s6159 = smul.u32 %s6157, 256
                  %s6160 = scalar_lea.vmem %s5478, %s6158 [#allocation4]
                  %s6161 = scalar_lea.vmem %s5963, %s6159
                $region195: #{tpu_custom_call.1} parent=189 // loop_footer
                  %s6085 = sadd.s32 %s6083, 1
                $region196: #{tpu_custom_call.1} parent=189 // loop_footer_branch
                  %6082 = sbr.rel target = $region192
                $region197: #{tpu_custom_call.1} parent=189 // loop_exit
                  _
                %s6162 = sshrl.u32 %s5959, 5
                %s6163 = sand.u32 %s5959, 31
                %s6164 = smul.u32 %s6162, 32
                %s6165 = smul.u32 8, %s6164
                %s6166 = scalar_lea.vmem %s5478, %s6165 [#allocation4]
                %s6167 = smul.u32 8, %s6164
                %s6168 = scalar_lea.vmem %s5963, %s6167
                // While loop
                $region198: #{tpu_custom_call.1} parent=189 // loop_pre_header
                  _
                $region199: #{tpu_custom_call.1} parent=189 // loop_header
                  %s6170 = sphi 0, %s6172
                  %p6171 = scmp.ge.s32.totalorder %s6170, %s6163
                  %s6175 = sphi 0, %s6182
                  %s6176 = sphi %s6166, %s6185
                  %s6177 = sphi %s6168, %s6186
                $region200: #{tpu_custom_call.1} parent=189 // loop_header_branch
                  %6174 = sbr.rel (%p6171) target = $region204
                $region201: #{tpu_custom_call.1} parent=189 // loop_body
                  %v6178 = vld [vmem:[%s6176] sm:$0xff]
                  %6179 = vst [vmem:[%s6177] sm:$0xff] %v6178
                  %s6180 = sadd.s32 1, %s6175
                  %p6181 = scmp.ge.s32.totalorder %s6180, %s6163
                  %s6182 = scalar_select %p6181, 0, %s6180
                  %s6183 = smul.u32 %s6182, 8
                  %s6184 = smul.u32 %s6182, 8
                  %s6185 = scalar_lea.vmem %s6166, %s6183 [#allocation4]
                  %s6186 = scalar_lea.vmem %s6168, %s6184
                $region202: #{tpu_custom_call.1} parent=189 // loop_footer
                  %s6172 = sadd.s32 %s6170, 1
                $region203: #{tpu_custom_call.1} parent=189 // loop_footer_branch
                  %6169 = sbr.rel target = $region199
                $region204: #{tpu_custom_call.1} parent=189 // loop_exit
                  _
              $region190: #{tpu_custom_call.1} parent=167 // pred_fallthru
                _
              // Predicated region
              $region205: #{tpu_custom_call.1} parent=167 // pred_check
                _
              $region206: #{tpu_custom_call.1} parent=167 // pred_check_branch
                %6188 = sbr.rel target = $region208
              $region207: #{tpu_custom_call.1} parent=167 // pred_region
                _
              $region208: #{tpu_custom_call.1} parent=167 // pred_fallthru
                _
            $region168: #{tpu_custom_call.1} parent=163 // pred_fallthru
              _
            // Predicated region
            $region169: #{tpu_custom_call.1} parent=163 // pred_check
              _
            $region170: #{tpu_custom_call.1} parent=163 // pred_check_branch
              %5970 = sbr.rel target = $region172
            $region171: #{tpu_custom_call.1} parent=163 // pred_region
              %s5972 = ssub.s32 256, 1
              %s5973 = sshrl.u32 %s5959, 5
              // While loop
              $region173: #{tpu_custom_call.1} parent=171 // loop_pre_header
                _
              $region174: #{tpu_custom_call.1} parent=171 // loop_header
                %s5975 = sphi 0, %s5977
                %p5976 = scmp.ge.s32.totalorder %s5975, %s5973
                %s5980 = sphi 0, %s6049
                %s5981 = sphi %s5478, %s6052
                %s5982 = sphi %s5963, %s6053
              $region175: #{tpu_custom_call.1} parent=171 // loop_header_branch
                %5979 = sbr.rel (%p5976) target = $region179
              $region176: #{tpu_custom_call.1} parent=171 // loop_body
                %v5983 = vld [vmem:[%s5981] sm:%s5972]
                %5984 = vst [vmem:[%s5982] sm:%s5972] %v5983
                %v5985 = vld [vmem:[%s5981 + $0x8] sm:%s5972]
                %5986 = vst [vmem:[%s5982 + $0x8] sm:%s5972] %v5985
                %v5987 = vld [vmem:[%s5981 + $0x10] sm:%s5972]
                %5988 = vst [vmem:[%s5982 + $0x10] sm:%s5972] %v5987
                %v5989 = vld [vmem:[%s5981 + $0x18] sm:%s5972]
                %5990 = vst [vmem:[%s5982 + $0x18] sm:%s5972] %v5989
                %v5991 = vld [vmem:[%s5981 + $0x20] sm:%s5972]
                %5992 = vst [vmem:[%s5982 + $0x20] sm:%s5972] %v5991
                %v5993 = vld [vmem:[%s5981 + $0x28] sm:%s5972]
                %5994 = vst [vmem:[%s5982 + $0x28] sm:%s5972] %v5993
                %v5995 = vld [vmem:[%s5981 + $0x30] sm:%s5972]
                %5996 = vst [vmem:[%s5982 + $0x30] sm:%s5972] %v5995
                %v5997 = vld [vmem:[%s5981 + $0x38] sm:%s5972]
                %5998 = vst [vmem:[%s5982 + $0x38] sm:%s5972] %v5997
                %v5999 = vld [vmem:[%s5981 + $0x40] sm:%s5972]
                %6000 = vst [vmem:[%s5982 + $0x40] sm:%s5972] %v5999
                %v6001 = vld [vmem:[%s5981 + $0x48] sm:%s5972]
                %6002 = vst [vmem:[%s5982 + $0x48] sm:%s5972] %v6001
                %v6003 = vld [vmem:[%s5981 + $0x50] sm:%s5972]
                %6004 = vst [vmem:[%s5982 + $0x50] sm:%s5972] %v6003
                %v6005 = vld [vmem:[%s5981 + $0x58] sm:%s5972]
                %6006 = vst [vmem:[%s5982 + $0x58] sm:%s5972] %v6005
                %v6007 = vld [vmem:[%s5981 + $0x60] sm:%s5972]
                %6008 = vst [vmem:[%s5982 + $0x60] sm:%s5972] %v6007
                %v6009 = vld [vmem:[%s5981 + $0x68] sm:%s5972]
                %6010 = vst [vmem:[%s5982 + $0x68] sm:%s5972] %v6009
                %v6011 = vld [vmem:[%s5981 + $0x70] sm:%s5972]
                %6012 = vst [vmem:[%s5982 + $0x70] sm:%s5972] %v6011
                %v6013 = vld [vmem:[%s5981 + $0x78] sm:%s5972]
                %6014 = vst [vmem:[%s5982 + $0x78] sm:%s5972] %v6013
                %v6015 = vld [vmem:[%s5981 + $0x80] sm:%s5972]
                %6016 = vst [vmem:[%s5982 + $0x80] sm:%s5972] %v6015
                %v6017 = vld [vmem:[%s5981 + $0x88] sm:%s5972]
                %6018 = vst [vmem:[%s5982 + $0x88] sm:%s5972] %v6017
                %v6019 = vld [vmem:[%s5981 + $0x90] sm:%s5972]
                %6020 = vst [vmem:[%s5982 + $0x90] sm:%s5972] %v6019
                %v6021 = vld [vmem:[%s5981 + $0x98] sm:%s5972]
                %6022 = vst [vmem:[%s5982 + $0x98] sm:%s5972] %v6021
                %v6023 = vld [vmem:[%s5981 + $0xa0] sm:%s5972]
                %6024 = vst [vmem:[%s5982 + $0xa0] sm:%s5972] %v6023
                %v6025 = vld [vmem:[%s5981 + $0xa8] sm:%s5972]
                %6026 = vst [vmem:[%s5982 + $0xa8] sm:%s5972] %v6025
                %v6027 = vld [vmem:[%s5981 + $0xb0] sm:%s5972]
                %6028 = vst [vmem:[%s5982 + $0xb0] sm:%s5972] %v6027
                %v6029 = vld [vmem:[%s5981 + $0xb8] sm:%s5972]
                %6030 = vst [vmem:[%s5982 + $0xb8] sm:%s5972] %v6029
                %v6031 = vld [vmem:[%s5981 + $0xc0] sm:%s5972]
                %6032 = vst [vmem:[%s5982 + $0xc0] sm:%s5972] %v6031
                %v6033 = vld [vmem:[%s5981 + $0xc8] sm:%s5972]
                %6034 = vst [vmem:[%s5982 + $0xc8] sm:%s5972] %v6033
                %v6035 = vld [vmem:[%s5981 + $0xd0] sm:%s5972]
                %6036 = vst [vmem:[%s5982 + $0xd0] sm:%s5972] %v6035
                %v6037 = vld [vmem:[%s5981 + $0xd8] sm:%s5972]
                %6038 = vst [vmem:[%s5982 + $0xd8] sm:%s5972] %v6037
                %v6039 = vld [vmem:[%s5981 + $0xe0] sm:%s5972]
                %6040 = vst [vmem:[%s5982 + $0xe0] sm:%s5972] %v6039
                %v6041 = vld [vmem:[%s5981 + $0xe8] sm:%s5972]
                %6042 = vst [vmem:[%s5982 + $0xe8] sm:%s5972] %v6041
                %v6043 = vld [vmem:[%s5981 + $0xf0] sm:%s5972]
                %6044 = vst [vmem:[%s5982 + $0xf0] sm:%s5972] %v6043
                %v6045 = vld [vmem:[%s5981 + $0xf8] sm:%s5972]
                %6046 = vst [vmem:[%s5982 + $0xf8] sm:%s5972] %v6045
                %s6047 = sadd.s32 1, %s5980
                %p6048 = scmp.ge.s32.totalorder %s6047, %s5973
                %s6049 = scalar_select %p6048, 0, %s6047
                %s6050 = smul.u32 %s6049, 256
                %s6051 = smul.u32 %s6049, 256
                %s6052 = scalar_lea.vmem %s5478, %s6050 [#allocation4]
                %s6053 = scalar_lea.vmem %s5963, %s6051
              $region177: #{tpu_custom_call.1} parent=171 // loop_footer
                %s5977 = sadd.s32 %s5975, 1
              $region178: #{tpu_custom_call.1} parent=171 // loop_footer_branch
                %5974 = sbr.rel target = $region174
              $region179: #{tpu_custom_call.1} parent=171 // loop_exit
                _
              %s6054 = sshrl.u32 %s5959, 5
              %s6055 = sand.u32 %s5959, 31
              %s6056 = smul.u32 %s6054, 32
              %s6057 = smul.u32 8, %s6056
              %s6058 = scalar_lea.vmem %s5478, %s6057 [#allocation4]
              %s6059 = smul.u32 8, %s6056
              %s6060 = scalar_lea.vmem %s5963, %s6059
              // While loop
              $region180: #{tpu_custom_call.1} parent=171 // loop_pre_header
                _
              $region181: #{tpu_custom_call.1} parent=171 // loop_header
                %s6062 = sphi 0, %s6064
                %p6063 = scmp.ge.s32.totalorder %s6062, %s6055
                %s6067 = sphi 0, %s6074
                %s6068 = sphi %s6058, %s6077
                %s6069 = sphi %s6060, %s6078
              $region182: #{tpu_custom_call.1} parent=171 // loop_header_branch
                %6066 = sbr.rel (%p6063) target = $region186
              $region183: #{tpu_custom_call.1} parent=171 // loop_body
                %v6070 = vld [vmem:[%s6068] sm:%s5972]
                %6071 = vst [vmem:[%s6069] sm:%s5972] %v6070
                %s6072 = sadd.s32 1, %s6067
                %p6073 = scmp.ge.s32.totalorder %s6072, %s6055
                %s6074 = scalar_select %p6073, 0, %s6072
                %s6075 = smul.u32 %s6074, 8
                %s6076 = smul.u32 %s6074, 8
                %s6077 = scalar_lea.vmem %s6058, %s6075 [#allocation4]
                %s6078 = scalar_lea.vmem %s6060, %s6076
              $region184: #{tpu_custom_call.1} parent=171 // loop_footer
                %s6064 = sadd.s32 %s6062, 1
              $region185: #{tpu_custom_call.1} parent=171 // loop_footer_branch
                %6061 = sbr.rel target = $region181
              $region186: #{tpu_custom_call.1} parent=171 // loop_exit
                _
            $region172: #{tpu_custom_call.1} parent=163 // pred_fallthru
              _
          $region164: #{tpu_custom_call.1} parent=159 // pred_fallthru
            _
          %6189 = vnop
        $region160: #{tpu_custom_call.1} parent=51 // pred_fallthru
          _
      $region52: #{tpu_custom_call.1} parent=5 // pred_fallthru
        _
      %p6190 = scmp.le.s32.totalorder 2, %s17
      // Predicated region
      $region209: #{tpu_custom_call.1} parent=5 // pred_check
        %p6191 = pneg %p6190
      $region210: #{tpu_custom_call.1} parent=5 // pred_check_branch
        %6193 = sbr.rel (%p6191) target = $region212
      $region211: #{tpu_custom_call.1} parent=5 // pred_region
        %s6194 = ssub.s32 %s17, 2
        // Predicated region
        $region213: #{tpu_custom_call.1} parent=211 // pred_check
          %p6195 = pneg %p229
        $region214: #{tpu_custom_call.1} parent=211 // pred_check_branch
          %6197 = sbr.rel (%p6195) target = $region216
        $region215: #{tpu_custom_call.1} parent=211 // pred_region
          %s6198 = sand.u32 %s214, 1
          %s6199 = sand.u32 %s214, 1
          %s6200 = smul.addr %s6199, 512
          %s6201 = scalar_lea.vmem [#allocation2], %s6200
        $region216: #{tpu_custom_call.1} parent=211 // pred_fallthru
          _
        // Predicated region
        $region217: #{tpu_custom_call.1} parent=211 // pred_check
          %p6202 = pneg %p255
        $region218: #{tpu_custom_call.1} parent=211 // pred_check_branch
          %6204 = sbr.rel (%p6202) target = $region220
        $region219: #{tpu_custom_call.1} parent=211 // pred_region
          %s6205 = sand.u32 %s240, 1
          %s6206 = sand.u32 %s240, 1
          %s6207 = smul.addr %s6206, 512
          %s6208 = scalar_lea.vmem [#allocation3], %s6207
        $region220: #{tpu_custom_call.1} parent=211 // pred_fallthru
          _
        // Predicated region
        $region221: #{tpu_custom_call.1} parent=211 // pred_check
          %p6209 = pneg %p281
        $region222: #{tpu_custom_call.1} parent=211 // pred_check_branch
          %6211 = sbr.rel (%p6209) target = $region224
        $region223: #{tpu_custom_call.1} parent=211 // pred_region
          %s6212 = sand.u32 %s266, 1
          %s6213 = sand.u32 %s266, 1
          %s6214 = smul.addr %s6213, 512
          %s6215 = scalar_lea.vmem [#allocation4], %s6214
        $region224: #{tpu_custom_call.1} parent=211 // pred_fallthru
          _
      $region212: #{tpu_custom_call.1} parent=5 // pred_fallthru
        _
    $region6: #{tpu_custom_call.1} parent=1 // loop_footer
      %s21 = sadd.s32 1, %s17
    $region7: #{tpu_custom_call.1} parent=1 // loop_footer_branch
      %16 = sbr.rel target = $region3
    $region8: #{tpu_custom_call.1} parent=1 // loop_exit
      _

</llo_original>
